<compile_context>
chip_gen: v7x
topology: tpu7x:2x2x1
jax: 0.10.0
libtpu: 0.0.40
codegen_flags: <defaults>
</compile_context>

<pallas_src>
import math
from functools import partial

import jax
import jax.numpy as jnp
from jax import lax
from jax.experimental import pallas as pl
from jax.experimental.pallas import tpu as pltpu

# ----------------------------- config ---------------------------------------
HIDDEN = 32
NUM_HEADS = 2
HEAD_DIM = HIDDEN // NUM_HEADS
INTERMEDIATE = 64
NUM_LAYERS = 2
LN_EPS = 1e-7
BATCH = 2
SEQ = 8

_INV_SQRT2 = 1.0 / math.sqrt(2.0)

# NOTE(perf): matmul operands are kept in f32 to preserve the PyTorch f32
# semantics; at these shapes MXU throughput is irrelevant.  For real DeBERTa
# sizes on v6e/v7x, cast the dot operands to bf16 (keep
# preferred_element_type=f32) for ~2x MXU throughput.


# ----------------------------- in-kernel math --------------------------------
def _erf(x):
    # Abramowitz & Stegun 7.1.26 rational approximation (max abs err ~1.5e-7):
    # matches torch.erf to float32 precision using only VPU ops + one EUP exp,
    # so the exact-erf GELU of DeBERTa's ACT2FN['gelu'] is reproduced without
    # relying on an erf lowering in Mosaic.
    p = 0.3275911
    a1, a2, a3, a4, a5 = (0.254829592, -0.284496736, 1.421413741,
                          -1.453152027, 1.061405429)
    sign = jnp.where(x < 0.0, jnp.float32(-1.0), jnp.float32(1.0))
    ax = jnp.where(x < 0.0, -x, x)
    t = 1.0 / (1.0 + p * ax)
    poly = ((((a5 * t + a4) * t + a3) * t + a2) * t + a1) * t
    return sign * (1.0 - poly * jnp.exp(-ax * ax))


def _gelu_exact(x):
    # DeBERTa gelu: x * 0.5 * (1 + erf(x / sqrt(2)))
    return x * 0.5 * (1.0 + _erf(x * _INV_SQRT2))


def _layernorm(y, g, b, eps):
    mu = jnp.mean(y, axis=-1, keepdims=True)
    d = y - mu
    var = jnp.mean(d * d, axis=-1, keepdims=True)
    return d * lax.rsqrt(var + eps) * g + b


# ----------------------------- fused encoder kernel --------------------------
def fused_encoder_kernel(x_ref, m_ref, wqkv_ref, bqkv_ref, wo_ref, bo_ref,
                         ln1g_ref, ln1b_ref, wi_ref, bi_ref, wo2_ref, bo2_ref,
                         ln2g_ref, ln2b_ref, hs_ref, *opt_refs,
                         scale, eps, return_att):
    # Per grid step: one batch element; all layers processed VMEM-resident.
    x = x_ref[...]                 # [S, H]
    keep = m_ref[...] > 0.0        # [S, S]  (1 = keep, 0 = masked), fixed per batch

    for l in range(NUM_LAYERS):    # static unrolled loop (NUM_LAYERS = 2)
        # --- DisentangledSelfAttention (standard MHA path; relative_attention off)
        # Fused Q|K|V projection: single [S, H] x [H, 3H] MXU pass.
        qkv = jnp.dot(x, wqkv_ref[l],
                      preferred_element_type=jnp.float32) + bqkv_ref[l]

        wo = wo_ref[l]             # [H, H]
        attn = bo_ref[l]           # [1, H] -> broadcasts against [S, H]
        for h in range(NUM_HEADS):  # static unrolled loop (NUM_HEADS = 2)
            q_h = qkv[:, h * HEAD_DIM:(h + 1) * HEAD_DIM]
            k_h = qkv[:, HIDDEN + h * HEAD_DIM: HIDDEN + (h + 1) * HEAD_DIM]
            v_h = qkv[:, 2 * HIDDEN + h * HEAD_DIM: 2 * HIDDEN + (h + 1) * HEAD_DIM]

            # scores = q @ k^T / sqrt(head_dim)  (scale_factor = 1, no rel-pos)
            s = lax.dot_general(q_h, k_h, (((1,), (1,)), ((), ())),
                                preferred_element_type=jnp.float32) * scale
            # XSoftmax: fill masked with -inf (large negative), softmax, then
            # zero the masked positions.
            s = jnp.where(keep, s, jnp.float32(-1e30))
            s = s - jnp.max(s, axis=-1, keepdims=True)
            e = jnp.exp(s)
            p = e * pl.reciprocal(jnp.sum(e, axis=-1, keepdims=True), approx=True)
            p = jnp.where(keep, p, 0.0)
            if return_att:
                opt_refs[0][l, h, :, :] = p

            ctx_h = jnp.dot(p, v_h, preferred_element_type=jnp.float32)    # [S, D]
            # Output dense decomposed per head: ctx @ wo == sum_h ctx_h @ wo_rows_h
            attn = attn + jnp.dot(ctx_h, wo[h * HEAD_DIM:(h + 1) * HEAD_DIM, :],
                                  preferred_element_type=jnp.float32)

        # --- BertSelfOutput: dense (done above) + dropout(id) + residual + LN
        attn = _layernorm(attn + x, ln1g_ref[l], ln1b_ref[l], eps)

        # --- BertIntermediate: dense + exact-erf gelu
        inter = _gelu_exact(
            jnp.dot(attn, wi_ref[l], preferred_element_type=jnp.float32) + bi_ref[l])

        # --- BertOutput: dense + dropout(id) + residual + LN
        out = jnp.dot(inter, wo2_ref[l],
                      preferred_element_type=jnp.float32) + bo2_ref[l]
        out = _layernorm(out + attn, ln2g_ref[l], ln2b_ref[l], eps)

        hs_ref[l] = out            # per-layer output (all encoded layers)
        x = out                    # next_kv stays in VMEM / vregs


def make_fused_encoder_call(B, S, return_att):
    scale = 1.0 / math.sqrt(HEAD_DIM)  # scale_factor = 1 + len(pos_att_type) = 1

    def per_batch(shape):
        # Per-batch block: batch dim squeezed out of the kernel ref.
        nz = len(shape)
        return pl.BlockSpec((None,) + tuple(shape),
                            lambda b, nz=nz: (b,) + (0,) * nz)

    def resident(shape):
        # Whole array, constant block index -> stays resident across grid steps.
        nz = len(shape)
        return pl.BlockSpec(tuple(shape), lambda b, nz=nz: (0,) * nz)

    in_specs = [
        per_batch((S, HIDDEN)),                              # x
        per_batch((S, S)),                                   # extended attention mask
        resident((NUM_LAYERS, HIDDEN, 3 * HIDDEN)),          # wqkv (stacked layers)
        resident((NUM_LAYERS, 1, 3 * HIDDEN)),               # bqkv
        resident((NUM_LAYERS, HIDDEN, HIDDEN)),              # wo
        resident((NUM_LAYERS, 1, HIDDEN)),                   # bo
        resident((NUM_LAYERS, 1, HIDDEN)),                   # ln1_g
        resident((NUM_LAYERS, 1, HIDDEN)),                   # ln1_b
        resident((NUM_LAYERS, HIDDEN, INTERMEDIATE)),        # wi
        resident((NUM_LAYERS, 1, INTERMEDIATE)),             # bi
        resident((NUM_LAYERS, INTERMEDIATE, HIDDEN)),        # wo2
        resident((NUM_LAYERS, 1, HIDDEN)),                   # bo2
        resident((NUM_LAYERS, 1, HIDDEN)),                   # ln2_g
        resident((NUM_LAYERS, 1, HIDDEN)),                   # ln2_b
    ]

    hs_shape = jax.ShapeDtypeStruct((NUM_LAYERS, B, S, HIDDEN), jnp.float32)
    hs_spec = pl.BlockSpec((NUM_LAYERS, None, S, HIDDEN),
                           lambda b: (0, b, 0, 0))

    if return_att:
        att_shape = jax.ShapeDtypeStruct((NUM_LAYERS, B, NUM_HEADS, S, S),
                                         jnp.float32)
        att_spec = pl.BlockSpec((NUM_LAYERS, None, NUM_HEADS, S, S),
                                lambda b: (0, b, 0, 0, 0))
        out_shape = (hs_shape, att_shape)
        out_specs = (hs_spec, att_spec)
    else:
        # attention probs are neither allocated nor written when not requested
        out_shape = hs_shape
        out_specs = hs_spec

    return pl.pallas_call(
        partial(fused_encoder_kernel, scale=scale, eps=LN_EPS,
                return_att=return_att),
        grid=(B,),
        out_shape=out_shape,
        in_specs=in_specs,
        out_specs=out_specs,
        compiler_params=pltpu.CompilerParams(
            dimension_semantics=("parallel",)),   # v7x: shard batch over 2 TCs
    )


# ----------------------------- model glue -----------------------------------
def get_attention_mask(attention_mask):
    """BertEncoder.get_attention_mask"""
    if attention_mask.ndim <= 2:
        ext = attention_mask[:, None, None, :]                       # [B,1,1,S]
        att = ext * jnp.expand_dims(jnp.squeeze(ext, -2), -1)        # [B,1,S,S]
        return att.astype(jnp.uint8)
    elif attention_mask.ndim == 3:
        return attention_mask[:, None]
    return attention_mask


def bert_encoder(hidden_states, attention_mask, params,
                 output_all_encoded_layers=True, return_att=False):
    """BertEncoder.forward (all layers in one fused pallas_call)."""
    B, S, H = hidden_states.shape

    # Extended mask computed once (hoisted out of the per-layer path) and
    # passed at [B,S,S] width; per-head broadcast happens inside the kernel.
    ext_mask = get_attention_mask(attention_mask)          # [B,1,S,S] uint8
    mask_f = ext_mask[:, 0].astype(jnp.float32)            # [B,S,S]

    # Stack per-layer params along a leading layer axis so every layer's
    # weights live in VMEM for the whole kernel.
    def stack(name, tail_shape):
        return jnp.stack([p[name].reshape(tail_shape) for p in params], axis=0)

    wqkv = stack("wqkv", (HIDDEN, 3 * HIDDEN))
    bqkv = stack("bqkv", (1, 3 * HIDDEN))
    wo = stack("wo", (HIDDEN, HIDDEN))
    bo = stack("bo", (1, HIDDEN))
    ln1g = stack("ln1_g", (1, HIDDEN))
    ln1b = stack("ln1_b", (1, HIDDEN))
    wi = stack("wi", (HIDDEN, INTERMEDIATE))
    bi = stack("bi", (1, INTERMEDIATE))
    wo2 = stack("wo2", (INTERMEDIATE, HIDDEN))
    bo2 = stack("bo2", (1, HIDDEN))
    ln2g = stack("ln2_g", (1, HIDDEN))
    ln2b = stack("ln2_b", (1, HIDDEN))

    fused = make_fused_encoder_call(B, S, return_att)
    outs = fused(hidden_states, mask_f, wqkv, bqkv, wo, bo, ln1g, ln1b,
                 wi, bi, wo2, bo2, ln2g, ln2b)
    if return_att:
        hs_stack, att_stack = outs
    else:
        hs_stack, att_stack = outs, None

    all_encoder_layers = []
    att_matrices = []
    if output_all_encoded_layers:
        for l in range(NUM_LAYERS):
            all_encoder_layers.append(hs_stack[l])
            if return_att:
                att_matrices.append(att_stack[l])
    else:
        all_encoder_layers.append(hs_stack[NUM_LAYERS - 1])
        if return_att:
            att_matrices.append(att_stack[NUM_LAYERS - 1])
    return {"hidden_states": all_encoder_layers, "attention_matrices": att_matrices}


# ----------------------------- params ---------------------------------------
def init_layer_params(key):
    ks = jax.random.split(key, 6)

    def lin(k, fan_in, fan_out):
        return jax.random.normal(k, (fan_in, fan_out), jnp.float32) * 0.02

    wq = lin(ks[0], HIDDEN, HIDDEN)
    wk = lin(ks[1], HIDDEN, HIDDEN)   # DeBERTa key projection has no bias (bk == 0)
    wv = lin(ks[2], HIDDEN, HIDDEN)
    return dict(
        wqkv=jnp.concatenate([wq, wk, wv], axis=1),           # [H, 3H] fused QKV
        bqkv=jnp.zeros((3 * HIDDEN,), jnp.float32),
        wo=lin(ks[3], HIDDEN, HIDDEN), bo=jnp.zeros((HIDDEN,), jnp.float32),
        ln1_g=jnp.ones((HIDDEN,), jnp.float32), ln1_b=jnp.zeros((HIDDEN,), jnp.float32),
        wi=lin(ks[4], HIDDEN, INTERMEDIATE), bi=jnp.zeros((INTERMEDIATE,), jnp.float32),
        wo2=lin(ks[5], INTERMEDIATE, HIDDEN), bo2=jnp.zeros((HIDDEN,), jnp.float32),
        ln2_g=jnp.ones((HIDDEN,), jnp.float32), ln2_b=jnp.zeros((HIDDEN,), jnp.float32),
    )


# ----------------------------- main ------------------------------------------
if __name__ == "__main__":
    key = jax.random.PRNGKey(0)
    k_x, k_p = jax.random.split(key)

    hidden_states = jax.random.normal(k_x, (BATCH, SEQ, HIDDEN), jnp.float32)
    # second sequence has its last two tokens masked out
    attention_mask = jnp.array(
        [[1] * SEQ, [1] * (SEQ - 2) + [0, 0]], dtype=jnp.int32
    )

    layer_keys = jax.random.split(k_p, NUM_LAYERS)
    params = [init_layer_params(lk) for lk in layer_keys]

    # Default path: all encoded layers, no attention matrices.
    out = bert_encoder(hidden_states, attention_mask, params,
                       output_all_encoded_layers=True, return_att=False)
    for h in out["hidden_states"]:
        jax.block_until_ready(h)
    assert len(out["hidden_states"]) == NUM_LAYERS
    assert out["hidden_states"][-1].shape == (BATCH, SEQ, HIDDEN)

    # return_att path: last layer only, with attention matrices.
    out_att = bert_encoder(hidden_states, attention_mask, params,
                           output_all_encoded_layers=False, return_att=True)
    jax.block_until_ready(out_att["hidden_states"][-1])
    jax.block_until_ready(out_att["attention_matrices"][-1])
    assert out_att["hidden_states"][-1].shape == (BATCH, SEQ, HIDDEN)
    assert out_att["attention_matrices"][-1].shape == (BATCH, NUM_HEADS, SEQ, SEQ)

    print("KERNEL_OK")
</pallas_src>

<mosaic_0001>
module attributes {stable_mosaic.version = 11 : i64} {
  func.func @fused_encoder_kernel(%arg0: i32, %arg1: memref<1x8x32xf32, #tpu.memory_space<vmem>>, %arg2: memref<1x8x8xf32, #tpu.memory_space<vmem>>, %arg3: memref<2x32x96xf32, #tpu.memory_space<vmem>>, %arg4: memref<2x1x96xf32, #tpu.memory_space<vmem>>, %arg5: memref<2x32x32xf32, #tpu.memory_space<vmem>>, %arg6: memref<2x1x32xf32, #tpu.memory_space<vmem>>, %arg7: memref<2x1x32xf32, #tpu.memory_space<vmem>>, %arg8: memref<2x1x32xf32, #tpu.memory_space<vmem>>, %arg9: memref<2x32x64xf32, #tpu.memory_space<vmem>>, %arg10: memref<2x1x64xf32, #tpu.memory_space<vmem>>, %arg11: memref<2x64x32xf32, #tpu.memory_space<vmem>>, %arg12: memref<2x1x32xf32, #tpu.memory_space<vmem>>, %arg13: memref<2x1x32xf32, #tpu.memory_space<vmem>>, %arg14: memref<2x1x32xf32, #tpu.memory_space<vmem>>, %arg15: memref<2x1x8x32xf32, #tpu.memory_space<vmem>>) attributes {dimension_semantics = [#tpu.dimension_semantics<parallel>], iteration_bounds = array<i64: 2>, scalar_prefetch = 0 : i64, scratch_operands = 0 : i64, tpu.core_type = #tpu.core_type<tc>, window_params = [{transform_indices = @transform_0, window_bounds = array<i64: 1, 8, 32>}, {transform_indices = @transform_1, window_bounds = array<i64: 1, 8, 8>}, {pipeline_mode = #tpu.pipeline_mode<synchronous>, transform_indices = @transform_2, window_bounds = array<i64: 2, 32, 96>}, {pipeline_mode = #tpu.pipeline_mode<synchronous>, transform_indices = @transform_3, window_bounds = array<i64: 2, 1, 96>}, {pipeline_mode = #tpu.pipeline_mode<synchronous>, transform_indices = @transform_4, window_bounds = array<i64: 2, 32, 32>}, {pipeline_mode = #tpu.pipeline_mode<synchronous>, transform_indices = @transform_5, window_bounds = array<i64: 2, 1, 32>}, {pipeline_mode = #tpu.pipeline_mode<synchronous>, transform_indices = @transform_6, window_bounds = array<i64: 2, 1, 32>}, {pipeline_mode = #tpu.pipeline_mode<synchronous>, transform_indices = @transform_7, window_bounds = array<i64: 2, 1, 32>}, {pipeline_mode = #tpu.pipeline_mode<synchronous>, transform_indices = @transform_8, window_bounds = array<i64: 2, 32, 64>}, {pipeline_mode = #tpu.pipeline_mode<synchronous>, transform_indices = @transform_9, window_bounds = array<i64: 2, 1, 64>}, {pipeline_mode = #tpu.pipeline_mode<synchronous>, transform_indices = @transform_10, window_bounds = array<i64: 2, 64, 32>}, {pipeline_mode = #tpu.pipeline_mode<synchronous>, transform_indices = @transform_11, window_bounds = array<i64: 2, 1, 32>}, {pipeline_mode = #tpu.pipeline_mode<synchronous>, transform_indices = @transform_12, window_bounds = array<i64: 2, 1, 32>}, {pipeline_mode = #tpu.pipeline_mode<synchronous>, transform_indices = @transform_13, window_bounds = array<i64: 2, 1, 32>}, {transform_indices = @transform_14, window_bounds = array<i64: 2, 1, 8, 32>}]} {
    %c0 = arith.constant 0 : index
    %c0_0 = arith.constant 0 : index
    %c0_1 = arith.constant 0 : index
    %0 = vector.load %arg1[%c0, %c0_0, %c0_1] : memref<1x8x32xf32, #tpu.memory_space<vmem>>, vector<1x8x32xf32>
    %1 = vector.shape_cast %0 : vector<1x8x32xf32> to vector<8x32xf32>
    %c0_2 = arith.constant 0 : index
    %c0_3 = arith.constant 0 : index
    %c0_4 = arith.constant 0 : index
    %2 = vector.load %arg2[%c0_2, %c0_3, %c0_4] : memref<1x8x8xf32, #tpu.memory_space<vmem>>, vector<1x8x8xf32>
    %3 = vector.shape_cast %2 : vector<1x8x8xf32> to vector<8x8xf32>
    %cst = arith.constant 0.000000e+00 : f32
    %4 = vector.broadcast %cst : f32 to vector<8x8xf32>
    %5 = arith.cmpf ogt, %3, %4 : vector<8x8xf32>
    %c0_5 = arith.constant 0 : index
    %c0_6 = arith.constant 0 : index
    %c0_7 = arith.constant 0 : index
    %6 = vector.load %arg3[%c0_5, %c0_6, %c0_7] : memref<2x32x96xf32, #tpu.memory_space<vmem>>, vector<1x32x96xf32>
    %7 = vector.shape_cast %6 : vector<1x32x96xf32> to vector<32x96xf32>
    %cst_8 = arith.constant dense<0.000000e+00> : vector<8x96xf32>
    %8 = tpu.matmul %1, %7, %cst_8 {dimension_numbers = #tpu.dot_dimension_numbers<[1], [0], [0], [1], [0, 0, 1, 1], [], []>} : vector<8x32xf32>, vector<32x96xf32>, vector<8x96xf32> -> vector<8x96xf32>
    %c0_9 = arith.constant 0 : index
    %c0_10 = arith.constant 0 : index
    %c0_11 = arith.constant 0 : index
    %9 = vector.load %arg4[%c0_9, %c0_10, %c0_11] : memref<2x1x96xf32, #tpu.memory_space<vmem>>, vector<1x1x96xf32>
    %10 = vector.shape_cast %9 : vector<1x1x96xf32> to vector<1x96xf32>
    %11 = vector.broadcast %10 : vector<1x96xf32> to vector<8x96xf32>
    %12 = arith.addf %8, %11 : vector<8x96xf32>
    %c0_12 = arith.constant 0 : index
    %c0_13 = arith.constant 0 : index
    %c0_14 = arith.constant 0 : index
    %13 = vector.load %arg5[%c0_12, %c0_13, %c0_14] : memref<2x32x32xf32, #tpu.memory_space<vmem>>, vector<1x32x32xf32>
    %14 = vector.shape_cast %13 : vector<1x32x32xf32> to vector<32x32xf32>
    %c0_15 = arith.constant 0 : index
    %c0_16 = arith.constant 0 : index
    %c0_17 = arith.constant 0 : index
    %15 = vector.load %arg6[%c0_15, %c0_16, %c0_17] : memref<2x1x32xf32, #tpu.memory_space<vmem>>, vector<1x1x32xf32>
    %16 = vector.shape_cast %15 : vector<1x1x32xf32> to vector<1x32xf32>
    %17 = vector.extract_strided_slice %12 {offsets = [0, 0], sizes = [8, 16], strides = [1, 1]} : vector<8x96xf32> to vector<8x16xf32>
    %18 = vector.extract_strided_slice %12 {offsets = [0, 32], sizes = [8, 16], strides = [1, 1]} : vector<8x96xf32> to vector<8x16xf32>
    %19 = vector.extract_strided_slice %12 {offsets = [0, 64], sizes = [8, 16], strides = [1, 1]} : vector<8x96xf32> to vector<8x16xf32>
    %cst_18 = arith.constant dense<0.000000e+00> : vector<8x8xf32>
    %20 = tpu.matmul %17, %18, %cst_18 {dimension_numbers = #tpu.dot_dimension_numbers<[1], [1], [0], [0], [0, 0, 1, 0], [], []>} : vector<8x16xf32>, vector<8x16xf32>, vector<8x8xf32> -> vector<8x8xf32>
    %cst_19 = arith.constant 2.500000e-01 : f32
    %21 = vector.broadcast %cst_19 : f32 to vector<8x8xf32>
    %22 = arith.mulf %20, %21 : vector<8x8xf32>
    %cst_20 = arith.constant -1.000000e+30 : f32
    %23 = vector.broadcast %cst_20 : f32 to vector<8x8xf32>
    %24 = arith.select %5, %22, %23 : vector<8x8xi1>, vector<8x8xf32>
    %cst_21 = arith.constant dense<0xFF800000> : vector<8xf32>
    %25 = vector.multi_reduction <maximumf>, %24, %cst_21 [1] : vector<8x8xf32> to vector<8xf32>
    %26 = vector.shape_cast %25 : vector<8xf32> to vector<8x1xf32>
    %27 = vector.broadcast %26 : vector<8x1xf32> to vector<8x8xf32>
    %28 = arith.subf %24, %27 : vector<8x8xf32>
    %29 = math.exp %28 : vector<8x8xf32>
    %cst_22 = arith.constant dense<0.000000e+00> : vector<8xf32>
    %30 = vector.multi_reduction <add>, %29, %cst_22 [1] : vector<8x8xf32> to vector<8xf32>
    %31 = vector.shape_cast %30 : vector<8xf32> to vector<8x1xf32>
    %32 = tpu.reciprocal %31 {approx = true} : vector<8x1xf32> -> vector<8x1xf32>
    %33 = vector.broadcast %32 : vector<8x1xf32> to vector<8x8xf32>
    %34 = arith.mulf %29, %33 : vector<8x8xf32>
    %cst_23 = arith.constant 0.000000e+00 : f32
    %35 = vector.broadcast %cst_23 : f32 to vector<8x8xf32>
    %36 = arith.select %5, %34, %35 : vector<8x8xi1>, vector<8x8xf32>
    %cst_24 = arith.constant dense<0.000000e+00> : vector<8x16xf32>
    %37 = tpu.matmul %36, %19, %cst_24 {dimension_numbers = #tpu.dot_dimension_numbers<[1], [0], [0], [1], [0, 0, 1, 1], [], []>} : vector<8x8xf32>, vector<8x16xf32>, vector<8x16xf32> -> vector<8x16xf32>
    %38 = vector.extract_strided_slice %14 {offsets = [0, 0], sizes = [16, 32], strides = [1, 1]} : vector<32x32xf32> to vector<16x32xf32>
    %cst_25 = arith.constant dense<0.000000e+00> : vector<8x32xf32>
    %39 = tpu.matmul %37, %38, %cst_25 {dimension_numbers = #tpu.dot_dimension_numbers<[1], [0], [0], [1], [0, 0, 1, 1], [], []>} : vector<8x16xf32>, vector<16x32xf32>, vector<8x32xf32> -> vector<8x32xf32>
    %40 = vector.broadcast %16 : vector<1x32xf32> to vector<8x32xf32>
    %41 = arith.addf %40, %39 : vector<8x32xf32>
    %42 = vector.extract_strided_slice %12 {offsets = [0, 16], sizes = [8, 16], strides = [1, 1]} : vector<8x96xf32> to vector<8x16xf32>
    %43 = vector.extract_strided_slice %12 {offsets = [0, 48], sizes = [8, 16], strides = [1, 1]} : vector<8x96xf32> to vector<8x16xf32>
    %44 = vector.extract_strided_slice %12 {offsets = [0, 80], sizes = [8, 16], strides = [1, 1]} : vector<8x96xf32> to vector<8x16xf32>
    %cst_26 = arith.constant dense<0.000000e+00> : vector<8x8xf32>
    %45 = tpu.matmul %42, %43, %cst_26 {dimension_numbers = #tpu.dot_dimension_numbers<[1], [1], [0], [0], [0, 0, 1, 0], [], []>} : vector<8x16xf32>, vector<8x16xf32>, vector<8x8xf32> -> vector<8x8xf32>
    %cst_27 = arith.constant 2.500000e-01 : f32
    %46 = vector.broadcast %cst_27 : f32 to vector<8x8xf32>
    %47 = arith.mulf %45, %46 : vector<8x8xf32>
    %cst_28 = arith.constant -1.000000e+30 : f32
    %48 = vector.broadcast %cst_28 : f32 to vector<8x8xf32>
    %49 = arith.select %5, %47, %48 : vector<8x8xi1>, vector<8x8xf32>
    %cst_29 = arith.constant dense<0xFF800000> : vector<8xf32>
    %50 = vector.multi_reduction <maximumf>, %49, %cst_29 [1] : vector<8x8xf32> to vector<8xf32>
    %51 = vector.shape_cast %50 : vector<8xf32> to vector<8x1xf32>
    %52 = vector.broadcast %51 : vector<8x1xf32> to vector<8x8xf32>
    %53 = arith.subf %49, %52 : vector<8x8xf32>
    %54 = math.exp %53 : vector<8x8xf32>
    %cst_30 = arith.constant dense<0.000000e+00> : vector<8xf32>
    %55 = vector.multi_reduction <add>, %54, %cst_30 [1] : vector<8x8xf32> to vector<8xf32>
    %56 = vector.shape_cast %55 : vector<8xf32> to vector<8x1xf32>
    %57 = tpu.reciprocal %56 {approx = true} : vector<8x1xf32> -> vector<8x1xf32>
    %58 = vector.broadcast %57 : vector<8x1xf32> to vector<8x8xf32>
    %59 = arith.mulf %54, %58 : vector<8x8xf32>
    %cst_31 = arith.constant 0.000000e+00 : f32
    %60 = vector.broadcast %cst_31 : f32 to vector<8x8xf32>
    %61 = arith.select %5, %59, %60 : vector<8x8xi1>, vector<8x8xf32>
    %cst_32 = arith.constant dense<0.000000e+00> : vector<8x16xf32>
    %62 = tpu.matmul %61, %44, %cst_32 {dimension_numbers = #tpu.dot_dimension_numbers<[1], [0], [0], [1], [0, 0, 1, 1], [], []>} : vector<8x8xf32>, vector<8x16xf32>, vector<8x16xf32> -> vector<8x16xf32>
    %63 = vector.extract_strided_slice %14 {offsets = [16, 0], sizes = [16, 32], strides = [1, 1]} : vector<32x32xf32> to vector<16x32xf32>
    %cst_33 = arith.constant dense<0.000000e+00> : vector<8x32xf32>
    %64 = tpu.matmul %62, %63, %cst_33 {dimension_numbers = #tpu.dot_dimension_numbers<[1], [0], [0], [1], [0, 0, 1, 1], [], []>} : vector<8x16xf32>, vector<16x32xf32>, vector<8x32xf32> -> vector<8x32xf32>
    %65 = arith.addf %41, %64 : vector<8x32xf32>
    %66 = arith.addf %65, %1 : vector<8x32xf32>
    %c0_34 = arith.constant 0 : index
    %c0_35 = arith.constant 0 : index
    %c0_36 = arith.constant 0 : index
    %67 = vector.load %arg7[%c0_34, %c0_35, %c0_36] : memref<2x1x32xf32, #tpu.memory_space<vmem>>, vector<1x1x32xf32>
    %68 = vector.shape_cast %67 : vector<1x1x32xf32> to vector<1x32xf32>
    %c0_37 = arith.constant 0 : index
    %c0_38 = arith.constant 0 : index
    %c0_39 = arith.constant 0 : index
    %69 = vector.load %arg8[%c0_37, %c0_38, %c0_39] : memref<2x1x32xf32, #tpu.memory_space<vmem>>, vector<1x1x32xf32>
    %70 = vector.shape_cast %69 : vector<1x1x32xf32> to vector<1x32xf32>
    %cst_40 = arith.constant dense<0.000000e+00> : vector<8xf32>
    %71 = vector.multi_reduction <add>, %66, %cst_40 [1] : vector<8x32xf32> to vector<8xf32>
    %72 = vector.shape_cast %71 : vector<8xf32> to vector<8x1xf32>
    %cst_41 = arith.constant 3.200000e+01 : f32
    %73 = vector.broadcast %cst_41 : f32 to vector<8x1xf32>
    %74 = arith.divf %72, %73 : vector<8x1xf32>
    %75 = vector.broadcast %74 : vector<8x1xf32> to vector<8x32xf32>
    %76 = arith.subf %66, %75 : vector<8x32xf32>
    %77 = arith.mulf %76, %76 : vector<8x32xf32>
    %cst_42 = arith.constant dense<0.000000e+00> : vector<8xf32>
    %78 = vector.multi_reduction <add>, %77, %cst_42 [1] : vector<8x32xf32> to vector<8xf32>
    %79 = vector.shape_cast %78 : vector<8xf32> to vector<8x1xf32>
    %cst_43 = arith.constant 3.200000e+01 : f32
    %80 = vector.broadcast %cst_43 : f32 to vector<8x1xf32>
    %81 = arith.divf %79, %80 : vector<8x1xf32>
    %cst_44 = arith.constant 1.000000e-07 : f32
    %82 = vector.broadcast %cst_44 : f32 to vector<8x1xf32>
    %83 = arith.addf %81, %82 : vector<8x1xf32>
    %84 = math.rsqrt %83 : vector<8x1xf32>
    %85 = vector.broadcast %84 : vector<8x1xf32> to vector<8x32xf32>
    %86 = arith.mulf %76, %85 : vector<8x32xf32>
    %87 = vector.broadcast %68 : vector<1x32xf32> to vector<8x32xf32>
    %88 = arith.mulf %86, %87 : vector<8x32xf32>
    %89 = vector.broadcast %70 : vector<1x32xf32> to vector<8x32xf32>
    %90 = arith.addf %88, %89 : vector<8x32xf32>
    %c0_45 = arith.constant 0 : index
    %c0_46 = arith.constant 0 : index
    %c0_47 = arith.constant 0 : index
    %91 = vector.load %arg9[%c0_45, %c0_46, %c0_47] : memref<2x32x64xf32, #tpu.memory_space<vmem>>, vector<1x32x64xf32>
    %92 = vector.shape_cast %91 : vector<1x32x64xf32> to vector<32x64xf32>
    %cst_48 = arith.constant dense<0.000000e+00> : vector<8x64xf32>
    %93 = tpu.matmul %90, %92, %cst_48 {dimension_numbers = #tpu.dot_dimension_numbers<[1], [0], [0], [1], [0, 0, 1, 1], [], []>} : vector<8x32xf32>, vector<32x64xf32>, vector<8x64xf32> -> vector<8x64xf32>
    %c0_49 = arith.constant 0 : index
    %c0_50 = arith.constant 0 : index
    %c0_51 = arith.constant 0 : index
    %94 = vector.load %arg10[%c0_49, %c0_50, %c0_51] : memref<2x1x64xf32, #tpu.memory_space<vmem>>, vector<1x1x64xf32>
    %95 = vector.shape_cast %94 : vector<1x1x64xf32> to vector<1x64xf32>
    %96 = vector.broadcast %95 : vector<1x64xf32> to vector<8x64xf32>
    %97 = arith.addf %93, %96 : vector<8x64xf32>
    %cst_52 = arith.constant 5.000000e-01 : f32
    %98 = vector.broadcast %cst_52 : f32 to vector<8x64xf32>
    %99 = arith.mulf %97, %98 : vector<8x64xf32>
    %cst_53 = arith.constant 0.707106769 : f32
    %100 = vector.broadcast %cst_53 : f32 to vector<8x64xf32>
    %101 = arith.mulf %97, %100 : vector<8x64xf32>
    %cst_54 = arith.constant 0.000000e+00 : f32
    %102 = vector.broadcast %cst_54 : f32 to vector<8x64xf32>
    %103 = arith.cmpf olt, %101, %102 : vector<8x64xf32>
    %cst_55 = arith.constant -1.000000e+00 : f32
    %cst_56 = arith.constant 1.000000e+00 : f32
    %104 = vector.broadcast %cst_55 : f32 to vector<8x64xf32>
    %105 = vector.broadcast %cst_56 : f32 to vector<8x64xf32>
    %106 = arith.select %103, %104, %105 : vector<8x64xi1>, vector<8x64xf32>
    %cst_57 = arith.constant 0.000000e+00 : f32
    %107 = vector.broadcast %cst_57 : f32 to vector<8x64xf32>
    %108 = arith.cmpf olt, %101, %107 : vector<8x64xf32>
    %cst_58 = arith.constant 0.000000e+00 : f32
    %109 = vector.broadcast %cst_58 : f32 to vector<8x64xf32>
    %110 = arith.subf %109, %101 : vector<8x64xf32>
    %111 = arith.select %108, %110, %101 : vector<8x64xi1>, vector<8x64xf32>
    %cst_59 = arith.constant 0.327591091 : f32
    %112 = vector.broadcast %cst_59 : f32 to vector<8x64xf32>
    %113 = arith.mulf %112, %111 : vector<8x64xf32>
    %cst_60 = arith.constant 1.000000e+00 : f32
    %114 = vector.broadcast %cst_60 : f32 to vector<8x64xf32>
    %115 = arith.addf %114, %113 : vector<8x64xf32>
    %cst_61 = arith.constant 1.000000e+00 : f32
    %116 = vector.broadcast %cst_61 : f32 to vector<8x64xf32>
    %117 = arith.divf %116, %115 : vector<8x64xf32>
    %cst_62 = arith.constant 1.06140542 : f32
    %118 = vector.broadcast %cst_62 : f32 to vector<8x64xf32>
    %119 = arith.mulf %118, %117 : vector<8x64xf32>
    %cst_63 = arith.constant -1.45315206 : f32
    %120 = vector.broadcast %cst_63 : f32 to vector<8x64xf32>
    %121 = arith.addf %119, %120 : vector<8x64xf32>
    %122 = arith.mulf %121, %117 : vector<8x64xf32>
    %cst_64 = arith.constant 1.42141378 : f32
    %123 = vector.broadcast %cst_64 : f32 to vector<8x64xf32>
    %124 = arith.addf %122, %123 : vector<8x64xf32>
    %125 = arith.mulf %124, %117 : vector<8x64xf32>
    %cst_65 = arith.constant -0.284496725 : f32
    %126 = vector.broadcast %cst_65 : f32 to vector<8x64xf32>
    %127 = arith.addf %125, %126 : vector<8x64xf32>
    %128 = arith.mulf %127, %117 : vector<8x64xf32>
    %cst_66 = arith.constant 0.254829586 : f32
    %129 = vector.broadcast %cst_66 : f32 to vector<8x64xf32>
    %130 = arith.addf %128, %129 : vector<8x64xf32>
    %131 = arith.mulf %130, %117 : vector<8x64xf32>
    %cst_67 = arith.constant 0.000000e+00 : f32
    %132 = vector.broadcast %cst_67 : f32 to vector<8x64xf32>
    %133 = arith.subf %132, %111 : vector<8x64xf32>
    %134 = arith.mulf %133, %111 : vector<8x64xf32>
    %135 = math.exp %134 : vector<8x64xf32>
    %136 = arith.mulf %131, %135 : vector<8x64xf32>
    %cst_68 = arith.constant 1.000000e+00 : f32
    %137 = vector.broadcast %cst_68 : f32 to vector<8x64xf32>
    %138 = arith.subf %137, %136 : vector<8x64xf32>
    %139 = arith.mulf %106, %138 : vector<8x64xf32>
    %cst_69 = arith.constant 1.000000e+00 : f32
    %140 = vector.broadcast %cst_69 : f32 to vector<8x64xf32>
    %141 = arith.addf %140, %139 : vector<8x64xf32>
    %142 = arith.mulf %99, %141 : vector<8x64xf32>
    %c0_70 = arith.constant 0 : index
    %c0_71 = arith.constant 0 : index
    %c0_72 = arith.constant 0 : index
    %143 = vector.load %arg11[%c0_70, %c0_71, %c0_72] : memref<2x64x32xf32, #tpu.memory_space<vmem>>, vector<1x64x32xf32>
    %144 = vector.shape_cast %143 : vector<1x64x32xf32> to vector<64x32xf32>
    %cst_73 = arith.constant dense<0.000000e+00> : vector<8x32xf32>
    %145 = tpu.matmul %142, %144, %cst_73 {dimension_numbers = #tpu.dot_dimension_numbers<[1], [0], [0], [1], [0, 0, 1, 1], [], []>} : vector<8x64xf32>, vector<64x32xf32>, vector<8x32xf32> -> vector<8x32xf32>
    %c0_74 = arith.constant 0 : index
    %c0_75 = arith.constant 0 : index
    %c0_76 = arith.constant 0 : index
    %146 = vector.load %arg12[%c0_74, %c0_75, %c0_76] : memref<2x1x32xf32, #tpu.memory_space<vmem>>, vector<1x1x32xf32>
    %147 = vector.shape_cast %146 : vector<1x1x32xf32> to vector<1x32xf32>
    %148 = vector.broadcast %147 : vector<1x32xf32> to vector<8x32xf32>
    %149 = arith.addf %145, %148 : vector<8x32xf32>
    %150 = arith.addf %149, %90 : vector<8x32xf32>
    %c0_77 = arith.constant 0 : index
    %c0_78 = arith.constant 0 : index
    %c0_79 = arith.constant 0 : index
    %151 = vector.load %arg13[%c0_77, %c0_78, %c0_79] : memref<2x1x32xf32, #tpu.memory_space<vmem>>, vector<1x1x32xf32>
    %152 = vector.shape_cast %151 : vector<1x1x32xf32> to vector<1x32xf32>
    %c0_80 = arith.constant 0 : index
    %c0_81 = arith.constant 0 : index
    %c0_82 = arith.constant 0 : index
    %153 = vector.load %arg14[%c0_80, %c0_81, %c0_82] : memref<2x1x32xf32, #tpu.memory_space<vmem>>, vector<1x1x32xf32>
    %154 = vector.shape_cast %153 : vector<1x1x32xf32> to vector<1x32xf32>
    %cst_83 = arith.constant dense<0.000000e+00> : vector<8xf32>
    %155 = vector.multi_reduction <add>, %150, %cst_83 [1] : vector<8x32xf32> to vector<8xf32>
    %156 = vector.shape_cast %155 : vector<8xf32> to vector<8x1xf32>
    %cst_84 = arith.constant 3.200000e+01 : f32
    %157 = vector.broadcast %cst_84 : f32 to vector<8x1xf32>
    %158 = arith.divf %156, %157 : vector<8x1xf32>
    %159 = vector.broadcast %158 : vector<8x1xf32> to vector<8x32xf32>
    %160 = arith.subf %150, %159 : vector<8x32xf32>
    %161 = arith.mulf %160, %160 : vector<8x32xf32>
    %cst_85 = arith.constant dense<0.000000e+00> : vector<8xf32>
    %162 = vector.multi_reduction <add>, %161, %cst_85 [1] : vector<8x32xf32> to vector<8xf32>
    %163 = vector.shape_cast %162 : vector<8xf32> to vector<8x1xf32>
    %cst_86 = arith.constant 3.200000e+01 : f32
    %164 = vector.broadcast %cst_86 : f32 to vector<8x1xf32>
    %165 = arith.divf %163, %164 : vector<8x1xf32>
    %cst_87 = arith.constant 1.000000e-07 : f32
    %166 = vector.broadcast %cst_87 : f32 to vector<8x1xf32>
    %167 = arith.addf %165, %166 : vector<8x1xf32>
    %168 = math.rsqrt %167 : vector<8x1xf32>
    %169 = vector.broadcast %168 : vector<8x1xf32> to vector<8x32xf32>
    %170 = arith.mulf %160, %169 : vector<8x32xf32>
    %171 = vector.broadcast %152 : vector<1x32xf32> to vector<8x32xf32>
    %172 = arith.mulf %170, %171 : vector<8x32xf32>
    %173 = vector.broadcast %154 : vector<1x32xf32> to vector<8x32xf32>
    %174 = arith.addf %172, %173 : vector<8x32xf32>
    %c0_88 = arith.constant 0 : index
    %c0_89 = arith.constant 0 : index
    %c0_90 = arith.constant 0 : index
    %c0_91 = arith.constant 0 : index
    %175 = vector.load %arg15[%c0_88, %c0_89, %c0_90, %c0_91] : memref<2x1x8x32xf32, #tpu.memory_space<vmem>>, vector<1x1x8x32xf32>
    %176 = vector.shape_cast %175 : vector<1x1x8x32xf32> to vector<8x32xf32>
    %177 = vector.shape_cast %174 : vector<8x32xf32> to vector<1x1x8x32xf32>
    tpu.vector_store %arg15[%c0_88, %c0_89, %c0_90, %c0_91], %177 {strides = array<i32>} : memref<2x1x8x32xf32, #tpu.memory_space<vmem>>, vector<1x1x8x32xf32>,
    %c1 = arith.constant 1 : index
    %c0_92 = arith.constant 0 : index
    %c0_93 = arith.constant 0 : index
    %178 = vector.load %arg3[%c1, %c0_92, %c0_93] : memref<2x32x96xf32, #tpu.memory_space<vmem>>, vector<1x32x96xf32>
    %179 = vector.shape_cast %178 : vector<1x32x96xf32> to vector<32x96xf32>
    %cst_94 = arith.constant dense<0.000000e+00> : vector<8x96xf32>
    %180 = tpu.matmul %174, %179, %cst_94 {dimension_numbers = #tpu.dot_dimension_numbers<[1], [0], [0], [1], [0, 0, 1, 1], [], []>} : vector<8x32xf32>, vector<32x96xf32>, vector<8x96xf32> -> vector<8x96xf32>
    %c1_95 = arith.constant 1 : index
    %c0_96 = arith.constant 0 : index
    %c0_97 = arith.constant 0 : index
    %181 = vector.load %arg4[%c1_95, %c0_96, %c0_97] : memref<2x1x96xf32, #tpu.memory_space<vmem>>, vector<1x1x96xf32>
    %182 = vector.shape_cast %181 : vector<1x1x96xf32> to vector<1x96xf32>
    %183 = vector.broadcast %182 : vector<1x96xf32> to vector<8x96xf32>
    %184 = arith.addf %180, %183 : vector<8x96xf32>
    %c1_98 = arith.constant 1 : index
    %c0_99 = arith.constant 0 : index
    %c0_100 = arith.constant 0 : index
    %185 = vector.load %arg5[%c1_98, %c0_99, %c0_100] : memref<2x32x32xf32, #tpu.memory_space<vmem>>, vector<1x32x32xf32>
    %186 = vector.shape_cast %185 : vector<1x32x32xf32> to vector<32x32xf32>
    %c1_101 = arith.constant 1 : index
    %c0_102 = arith.constant 0 : index
    %c0_103 = arith.constant 0 : index
    %187 = vector.load %arg6[%c1_101, %c0_102, %c0_103] : memref<2x1x32xf32, #tpu.memory_space<vmem>>, vector<1x1x32xf32>
    %188 = vector.shape_cast %187 : vector<1x1x32xf32> to vector<1x32xf32>
    %189 = vector.extract_strided_slice %184 {offsets = [0, 0], sizes = [8, 16], strides = [1, 1]} : vector<8x96xf32> to vector<8x16xf32>
    %190 = vector.extract_strided_slice %184 {offsets = [0, 32], sizes = [8, 16], strides = [1, 1]} : vector<8x96xf32> to vector<8x16xf32>
    %191 = vector.extract_strided_slice %184 {offsets = [0, 64], sizes = [8, 16], strides = [1, 1]} : vector<8x96xf32> to vector<8x16xf32>
    %cst_104 = arith.constant dense<0.000000e+00> : vector<8x8xf32>
    %192 = tpu.matmul %189, %190, %cst_104 {dimension_numbers = #tpu.dot_dimension_numbers<[1], [1], [0], [0], [0, 0, 1, 0], [], []>} : vector<8x16xf32>, vector<8x16xf32>, vector<8x8xf32> -> vector<8x8xf32>
    %cst_105 = arith.constant 2.500000e-01 : f32
    %193 = vector.broadcast %cst_105 : f32 to vector<8x8xf32>
    %194 = arith.mulf %192, %193 : vector<8x8xf32>
    %cst_106 = arith.constant -1.000000e+30 : f32
    %195 = vector.broadcast %cst_106 : f32 to vector<8x8xf32>
    %196 = arith.select %5, %194, %195 : vector<8x8xi1>, vector<8x8xf32>
    %cst_107 = arith.constant dense<0xFF800000> : vector<8xf32>
    %197 = vector.multi_reduction <maximumf>, %196, %cst_107 [1] : vector<8x8xf32> to vector<8xf32>
    %198 = vector.shape_cast %197 : vector<8xf32> to vector<8x1xf32>
    %199 = vector.broadcast %198 : vector<8x1xf32> to vector<8x8xf32>
    %200 = arith.subf %196, %199 : vector<8x8xf32>
    %201 = math.exp %200 : vector<8x8xf32>
    %cst_108 = arith.constant dense<0.000000e+00> : vector<8xf32>
    %202 = vector.multi_reduction <add>, %201, %cst_108 [1] : vector<8x8xf32> to vector<8xf32>
    %203 = vector.shape_cast %202 : vector<8xf32> to vector<8x1xf32>
    %204 = tpu.reciprocal %203 {approx = true} : vector<8x1xf32> -> vector<8x1xf32>
    %205 = vector.broadcast %204 : vector<8x1xf32> to vector<8x8xf32>
    %206 = arith.mulf %201, %205 : vector<8x8xf32>
    %cst_109 = arith.constant 0.000000e+00 : f32
    %207 = vector.broadcast %cst_109 : f32 to vector<8x8xf32>
    %208 = arith.select %5, %206, %207 : vector<8x8xi1>, vector<8x8xf32>
    %cst_110 = arith.constant dense<0.000000e+00> : vector<8x16xf32>
    %209 = tpu.matmul %208, %191, %cst_110 {dimension_numbers = #tpu.dot_dimension_numbers<[1], [0], [0], [1], [0, 0, 1, 1], [], []>} : vector<8x8xf32>, vector<8x16xf32>, vector<8x16xf32> -> vector<8x16xf32>
    %210 = vector.extract_strided_slice %186 {offsets = [0, 0], sizes = [16, 32], strides = [1, 1]} : vector<32x32xf32> to vector<16x32xf32>
    %cst_111 = arith.constant dense<0.000000e+00> : vector<8x32xf32>
    %211 = tpu.matmul %209, %210, %cst_111 {dimension_numbers = #tpu.dot_dimension_numbers<[1], [0], [0], [1], [0, 0, 1, 1], [], []>} : vector<8x16xf32>, vector<16x32xf32>, vector<8x32xf32> -> vector<8x32xf32>
    %212 = vector.broadcast %188 : vector<1x32xf32> to vector<8x32xf32>
    %213 = arith.addf %212, %211 : vector<8x32xf32>
    %214 = vector.extract_strided_slice %184 {offsets = [0, 16], sizes = [8, 16], strides = [1, 1]} : vector<8x96xf32> to vector<8x16xf32>
    %215 = vector.extract_strided_slice %184 {offsets = [0, 48], sizes = [8, 16], strides = [1, 1]} : vector<8x96xf32> to vector<8x16xf32>
    %216 = vector.extract_strided_slice %184 {offsets = [0, 80], sizes = [8, 16], strides = [1, 1]} : vector<8x96xf32> to vector<8x16xf32>
    %cst_112 = arith.constant dense<0.000000e+00> : vector<8x8xf32>
    %217 = tpu.matmul %214, %215, %cst_112 {dimension_numbers = #tpu.dot_dimension_numbers<[1], [1], [0], [0], [0, 0, 1, 0], [], []>} : vector<8x16xf32>, vector<8x16xf32>, vector<8x8xf32> -> vector<8x8xf32>
    %cst_113 = arith.constant 2.500000e-01 : f32
    %218 = vector.broadcast %cst_113 : f32 to vector<8x8xf32>
    %219 = arith.mulf %217, %218 : vector<8x8xf32>
    %cst_114 = arith.constant -1.000000e+30 : f32
    %220 = vector.broadcast %cst_114 : f32 to vector<8x8xf32>
    %221 = arith.select %5, %219, %220 : vector<8x8xi1>, vector<8x8xf32>
    %cst_115 = arith.constant dense<0xFF800000> : vector<8xf32>
    %222 = vector.multi_reduction <maximumf>, %221, %cst_115 [1] : vector<8x8xf32> to vector<8xf32>
    %223 = vector.shape_cast %222 : vector<8xf32> to vector<8x1xf32>
    %224 = vector.broadcast %223 : vector<8x1xf32> to vector<8x8xf32>
    %225 = arith.subf %221, %224 : vector<8x8xf32>
    %226 = math.exp %225 : vector<8x8xf32>
    %cst_116 = arith.constant dense<0.000000e+00> : vector<8xf32>
    %227 = vector.multi_reduction <add>, %226, %cst_116 [1] : vector<8x8xf32> to vector<8xf32>
    %228 = vector.shape_cast %227 : vector<8xf32> to vector<8x1xf32>
    %229 = tpu.reciprocal %228 {approx = true} : vector<8x1xf32> -> vector<8x1xf32>
    %230 = vector.broadcast %229 : vector<8x1xf32> to vector<8x8xf32>
    %231 = arith.mulf %226, %230 : vector<8x8xf32>
    %cst_117 = arith.constant 0.000000e+00 : f32
    %232 = vector.broadcast %cst_117 : f32 to vector<8x8xf32>
    %233 = arith.select %5, %231, %232 : vector<8x8xi1>, vector<8x8xf32>
    %cst_118 = arith.constant dense<0.000000e+00> : vector<8x16xf32>
    %234 = tpu.matmul %233, %216, %cst_118 {dimension_numbers = #tpu.dot_dimension_numbers<[1], [0], [0], [1], [0, 0, 1, 1], [], []>} : vector<8x8xf32>, vector<8x16xf32>, vector<8x16xf32> -> vector<8x16xf32>
    %235 = vector.extract_strided_slice %186 {offsets = [16, 0], sizes = [16, 32], strides = [1, 1]} : vector<32x32xf32> to vector<16x32xf32>
    %cst_119 = arith.constant dense<0.000000e+00> : vector<8x32xf32>
    %236 = tpu.matmul %234, %235, %cst_119 {dimension_numbers = #tpu.dot_dimension_numbers<[1], [0], [0], [1], [0, 0, 1, 1], [], []>} : vector<8x16xf32>, vector<16x32xf32>, vector<8x32xf32> -> vector<8x32xf32>
    %237 = arith.addf %213, %236 : vector<8x32xf32>
    %238 = arith.addf %237, %174 : vector<8x32xf32>
    %c1_120 = arith.constant 1 : index
    %c0_121 = arith.constant 0 : index
    %c0_122 = arith.constant 0 : index
    %239 = vector.load %arg7[%c1_120, %c0_121, %c0_122] : memref<2x1x32xf32, #tpu.memory_space<vmem>>, vector<1x1x32xf32>
    %240 = vector.shape_cast %239 : vector<1x1x32xf32> to vector<1x32xf32>
    %c1_123 = arith.constant 1 : index
    %c0_124 = arith.constant 0 : index
    %c0_125 = arith.constant 0 : index
    %241 = vector.load %arg8[%c1_123, %c0_124, %c0_125] : memref<2x1x32xf32, #tpu.memory_space<vmem>>, vector<1x1x32xf32>
    %242 = vector.shape_cast %241 : vector<1x1x32xf32> to vector<1x32xf32>
    %cst_126 = arith.constant dense<0.000000e+00> : vector<8xf32>
    %243 = vector.multi_reduction <add>, %238, %cst_126 [1] : vector<8x32xf32> to vector<8xf32>
    %244 = vector.shape_cast %243 : vector<8xf32> to vector<8x1xf32>
    %cst_127 = arith.constant 3.200000e+01 : f32
    %245 = vector.broadcast %cst_127 : f32 to vector<8x1xf32>
    %246 = arith.divf %244, %245 : vector<8x1xf32>
    %247 = vector.broadcast %246 : vector<8x1xf32> to vector<8x32xf32>
    %248 = arith.subf %238, %247 : vector<8x32xf32>
    %249 = arith.mulf %248, %248 : vector<8x32xf32>
    %cst_128 = arith.constant dense<0.000000e+00> : vector<8xf32>
    %250 = vector.multi_reduction <add>, %249, %cst_128 [1] : vector<8x32xf32> to vector<8xf32>
    %251 = vector.shape_cast %250 : vector<8xf32> to vector<8x1xf32>
    %cst_129 = arith.constant 3.200000e+01 : f32
    %252 = vector.broadcast %cst_129 : f32 to vector<8x1xf32>
    %253 = arith.divf %251, %252 : vector<8x1xf32>
    %cst_130 = arith.constant 1.000000e-07 : f32
    %254 = vector.broadcast %cst_130 : f32 to vector<8x1xf32>
    %255 = arith.addf %253, %254 : vector<8x1xf32>
    %256 = math.rsqrt %255 : vector<8x1xf32>
    %257 = vector.broadcast %256 : vector<8x1xf32> to vector<8x32xf32>
    %258 = arith.mulf %248, %257 : vector<8x32xf32>
    %259 = vector.broadcast %240 : vector<1x32xf32> to vector<8x32xf32>
    %260 = arith.mulf %258, %259 : vector<8x32xf32>
    %261 = vector.broadcast %242 : vector<1x32xf32> to vector<8x32xf32>
    %262 = arith.addf %260, %261 : vector<8x32xf32>
    %c1_131 = arith.constant 1 : index
    %c0_132 = arith.constant 0 : index
    %c0_133 = arith.constant 0 : index
    %263 = vector.load %arg9[%c1_131, %c0_132, %c0_133] : memref<2x32x64xf32, #tpu.memory_space<vmem>>, vector<1x32x64xf32>
    %264 = vector.shape_cast %263 : vector<1x32x64xf32> to vector<32x64xf32>
    %cst_134 = arith.constant dense<0.000000e+00> : vector<8x64xf32>
    %265 = tpu.matmul %262, %264, %cst_134 {dimension_numbers = #tpu.dot_dimension_numbers<[1], [0], [0], [1], [0, 0, 1, 1], [], []>} : vector<8x32xf32>, vector<32x64xf32>, vector<8x64xf32> -> vector<8x64xf32>
    %c1_135 = arith.constant 1 : index
    %c0_136 = arith.constant 0 : index
    %c0_137 = arith.constant 0 : index
    %266 = vector.load %arg10[%c1_135, %c0_136, %c0_137] : memref<2x1x64xf32, #tpu.memory_space<vmem>>, vector<1x1x64xf32>
    %267 = vector.shape_cast %266 : vector<1x1x64xf32> to vector<1x64xf32>
    %268 = vector.broadcast %267 : vector<1x64xf32> to vector<8x64xf32>
    %269 = arith.addf %265, %268 : vector<8x64xf32>
    %cst_138 = arith.constant 5.000000e-01 : f32
    %270 = vector.broadcast %cst_138 : f32 to vector<8x64xf32>
    %271 = arith.mulf %269, %270 : vector<8x64xf32>
    %cst_139 = arith.constant 0.707106769 : f32
    %272 = vector.broadcast %cst_139 : f32 to vector<8x64xf32>
    %273 = arith.mulf %269, %272 : vector<8x64xf32>
    %cst_140 = arith.constant 0.000000e+00 : f32
    %274 = vector.broadcast %cst_140 : f32 to vector<8x64xf32>
    %275 = arith.cmpf olt, %273, %274 : vector<8x64xf32>
    %cst_141 = arith.constant -1.000000e+00 : f32
    %cst_142 = arith.constant 1.000000e+00 : f32
    %276 = vector.broadcast %cst_141 : f32 to vector<8x64xf32>
    %277 = vector.broadcast %cst_142 : f32 to vector<8x64xf32>
    %278 = arith.select %275, %276, %277 : vector<8x64xi1>, vector<8x64xf32>
    %cst_143 = arith.constant 0.000000e+00 : f32
    %279 = vector.broadcast %cst_143 : f32 to vector<8x64xf32>
    %280 = arith.cmpf olt, %273, %279 : vector<8x64xf32>
    %cst_144 = arith.constant 0.000000e+00 : f32
    %281 = vector.broadcast %cst_144 : f32 to vector<8x64xf32>
    %282 = arith.subf %281, %273 : vector<8x64xf32>
    %283 = arith.select %280, %282, %273 : vector<8x64xi1>, vector<8x64xf32>
    %cst_145 = arith.constant 0.327591091 : f32
    %284 = vector.broadcast %cst_145 : f32 to vector<8x64xf32>
    %285 = arith.mulf %284, %283 : vector<8x64xf32>
    %cst_146 = arith.constant 1.000000e+00 : f32
    %286 = vector.broadcast %cst_146 : f32 to vector<8x64xf32>
    %287 = arith.addf %286, %285 : vector<8x64xf32>
    %cst_147 = arith.constant 1.000000e+00 : f32
    %288 = vector.broadcast %cst_147 : f32 to vector<8x64xf32>
    %289 = arith.divf %288, %287 : vector<8x64xf32>
    %cst_148 = arith.constant 1.06140542 : f32
    %290 = vector.broadcast %cst_148 : f32 to vector<8x64xf32>
    %291 = arith.mulf %290, %289 : vector<8x64xf32>
    %cst_149 = arith.constant -1.45315206 : f32
    %292 = vector.broadcast %cst_149 : f32 to vector<8x64xf32>
    %293 = arith.addf %291, %292 : vector<8x64xf32>
    %294 = arith.mulf %293, %289 : vector<8x64xf32>
    %cst_150 = arith.constant 1.42141378 : f32
    %295 = vector.broadcast %cst_150 : f32 to vector<8x64xf32>
    %296 = arith.addf %294, %295 : vector<8x64xf32>
    %297 = arith.mulf %296, %289 : vector<8x64xf32>
    %cst_151 = arith.constant -0.284496725 : f32
    %298 = vector.broadcast %cst_151 : f32 to vector<8x64xf32>
    %299 = arith.addf %297, %298 : vector<8x64xf32>
    %300 = arith.mulf %299, %289 : vector<8x64xf32>
    %cst_152 = arith.constant 0.254829586 : f32
    %301 = vector.broadcast %cst_152 : f32 to vector<8x64xf32>
    %302 = arith.addf %300, %301 : vector<8x64xf32>
    %303 = arith.mulf %302, %289 : vector<8x64xf32>
    %cst_153 = arith.constant 0.000000e+00 : f32
    %304 = vector.broadcast %cst_153 : f32 to vector<8x64xf32>
    %305 = arith.subf %304, %283 : vector<8x64xf32>
    %306 = arith.mulf %305, %283 : vector<8x64xf32>
    %307 = math.exp %306 : vector<8x64xf32>
    %308 = arith.mulf %303, %307 : vector<8x64xf32>
    %cst_154 = arith.constant 1.000000e+00 : f32
    %309 = vector.broadcast %cst_154 : f32 to vector<8x64xf32>
    %310 = arith.subf %309, %308 : vector<8x64xf32>
    %311 = arith.mulf %278, %310 : vector<8x64xf32>
    %cst_155 = arith.constant 1.000000e+00 : f32
    %312 = vector.broadcast %cst_155 : f32 to vector<8x64xf32>
    %313 = arith.addf %312, %311 : vector<8x64xf32>
    %314 = arith.mulf %271, %313 : vector<8x64xf32>
    %c1_156 = arith.constant 1 : index
    %c0_157 = arith.constant 0 : index
    %c0_158 = arith.constant 0 : index
    %315 = vector.load %arg11[%c1_156, %c0_157, %c0_158] : memref<2x64x32xf32, #tpu.memory_space<vmem>>, vector<1x64x32xf32>
    %316 = vector.shape_cast %315 : vector<1x64x32xf32> to vector<64x32xf32>
    %cst_159 = arith.constant dense<0.000000e+00> : vector<8x32xf32>
    %317 = tpu.matmul %314, %316, %cst_159 {dimension_numbers = #tpu.dot_dimension_numbers<[1], [0], [0], [1], [0, 0, 1, 1], [], []>} : vector<8x64xf32>, vector<64x32xf32>, vector<8x32xf32> -> vector<8x32xf32>
    %c1_160 = arith.constant 1 : index
    %c0_161 = arith.constant 0 : index
    %c0_162 = arith.constant 0 : index
    %318 = vector.load %arg12[%c1_160, %c0_161, %c0_162] : memref<2x1x32xf32, #tpu.memory_space<vmem>>, vector<1x1x32xf32>
    %319 = vector.shape_cast %318 : vector<1x1x32xf32> to vector<1x32xf32>
    %320 = vector.broadcast %319 : vector<1x32xf32> to vector<8x32xf32>
    %321 = arith.addf %317, %320 : vector<8x32xf32>
    %322 = arith.addf %321, %262 : vector<8x32xf32>
    %c1_163 = arith.constant 1 : index
    %c0_164 = arith.constant 0 : index
    %c0_165 = arith.constant 0 : index
    %323 = vector.load %arg13[%c1_163, %c0_164, %c0_165] : memref<2x1x32xf32, #tpu.memory_space<vmem>>, vector<1x1x32xf32>
    %324 = vector.shape_cast %323 : vector<1x1x32xf32> to vector<1x32xf32>
    %c1_166 = arith.constant 1 : index
    %c0_167 = arith.constant 0 : index
    %c0_168 = arith.constant 0 : index
    %325 = vector.load %arg14[%c1_166, %c0_167, %c0_168] : memref<2x1x32xf32, #tpu.memory_space<vmem>>, vector<1x1x32xf32>
    %326 = vector.shape_cast %325 : vector<1x1x32xf32> to vector<1x32xf32>
    %cst_169 = arith.constant dense<0.000000e+00> : vector<8xf32>
    %327 = vector.multi_reduction <add>, %322, %cst_169 [1] : vector<8x32xf32> to vector<8xf32>
    %328 = vector.shape_cast %327 : vector<8xf32> to vector<8x1xf32>
    %cst_170 = arith.constant 3.200000e+01 : f32
    %329 = vector.broadcast %cst_170 : f32 to vector<8x1xf32>
    %330 = arith.divf %328, %329 : vector<8x1xf32>
    %331 = vector.broadcast %330 : vector<8x1xf32> to vector<8x32xf32>
    %332 = arith.subf %322, %331 : vector<8x32xf32>
    %333 = arith.mulf %332, %332 : vector<8x32xf32>
    %cst_171 = arith.constant dense<0.000000e+00> : vector<8xf32>
    %334 = vector.multi_reduction <add>, %333, %cst_171 [1] : vector<8x32xf32> to vector<8xf32>
    %335 = vector.shape_cast %334 : vector<8xf32> to vector<8x1xf32>
    %cst_172 = arith.constant 3.200000e+01 : f32
    %336 = vector.broadcast %cst_172 : f32 to vector<8x1xf32>
    %337 = arith.divf %335, %336 : vector<8x1xf32>
    %cst_173 = arith.constant 1.000000e-07 : f32
    %338 = vector.broadcast %cst_173 : f32 to vector<8x1xf32>
    %339 = arith.addf %337, %338 : vector<8x1xf32>
    %340 = math.rsqrt %339 : vector<8x1xf32>
    %341 = vector.broadcast %340 : vector<8x1xf32> to vector<8x32xf32>
    %342 = arith.mulf %332, %341 : vector<8x32xf32>
    %343 = vector.broadcast %324 : vector<1x32xf32> to vector<8x32xf32>
    %344 = arith.mulf %342, %343 : vector<8x32xf32>
    %345 = vector.broadcast %326 : vector<1x32xf32> to vector<8x32xf32>
    %346 = arith.addf %344, %345 : vector<8x32xf32>
    %c1_174 = arith.constant 1 : index
    %c0_175 = arith.constant 0 : index
    %c0_176 = arith.constant 0 : index
    %c0_177 = arith.constant 0 : index
    %347 = vector.load %arg15[%c1_174, %c0_175, %c0_176, %c0_177] : memref<2x1x8x32xf32, #tpu.memory_space<vmem>>, vector<1x1x8x32xf32>
    %348 = vector.shape_cast %347 : vector<1x1x8x32xf32> to vector<8x32xf32>
    %349 = vector.shape_cast %346 : vector<8x32xf32> to vector<1x1x8x32xf32>
    tpu.vector_store %arg15[%c1_174, %c0_175, %c0_176, %c0_177], %349 {strides = array<i32>} : memref<2x1x8x32xf32, #tpu.memory_space<vmem>>, vector<1x1x8x32xf32>,
    return
  }
  func.func @transform_0(%arg0: i32) -> (i32, i32, i32) {
    %c0_i32 = arith.constant 0 : i32
    %c0_i32_0 = arith.constant 0 : i32
    %c0_i32_1 = arith.constant 0 : i32
    return %arg0, %c0_i32, %c0_i32_0 : i32, i32, i32
  }
  func.func @transform_1(%arg0: i32) -> (i32, i32, i32) {
    %c0_i32 = arith.constant 0 : i32
    %c0_i32_0 = arith.constant 0 : i32
    %c0_i32_1 = arith.constant 0 : i32
    return %arg0, %c0_i32, %c0_i32_0 : i32, i32, i32
  }
  func.func @transform_2(%arg0: i32) -> (i32, i32, i32) {
    %c0_i32 = arith.constant 0 : i32
    %c0_i32_0 = arith.constant 0 : i32
    %c0_i32_1 = arith.constant 0 : i32
    %c0_i32_2 = arith.constant 0 : i32
    return %c0_i32, %c0_i32_0, %c0_i32_1 : i32, i32, i32
  }
  func.func @transform_3(%arg0: i32) -> (i32, i32, i32) {
    %c0_i32 = arith.constant 0 : i32
    %c0_i32_0 = arith.constant 0 : i32
    %c0_i32_1 = arith.constant 0 : i32
    %c0_i32_2 = arith.constant 0 : i32
    return %c0_i32, %c0_i32_0, %c0_i32_1 : i32, i32, i32
  }
  func.func @transform_4(%arg0: i32) -> (i32, i32, i32) {
    %c0_i32 = arith.constant 0 : i32
    %c0_i32_0 = arith.constant 0 : i32
    %c0_i32_1 = arith.constant 0 : i32
    %c0_i32_2 = arith.constant 0 : i32
    return %c0_i32, %c0_i32_0, %c0_i32_1 : i32, i32, i32
  }
  func.func @transform_5(%arg0: i32) -> (i32, i32, i32) {
    %c0_i32 = arith.constant 0 : i32
    %c0_i32_0 = arith.constant 0 : i32
    %c0_i32_1 = arith.constant 0 : i32
    %c0_i32_2 = arith.constant 0 : i32
    return %c0_i32, %c0_i32_0, %c0_i32_1 : i32, i32, i32
  }
  func.func @transform_6(%arg0: i32) -> (i32, i32, i32) {
    %c0_i32 = arith.constant 0 : i32
    %c0_i32_0 = arith.constant 0 : i32
    %c0_i32_1 = arith.constant 0 : i32
    %c0_i32_2 = arith.constant 0 : i32
    return %c0_i32, %c0_i32_0, %c0_i32_1 : i32, i32, i32
  }
  func.func @transform_7(%arg0: i32) -> (i32, i32, i32) {
    %c0_i32 = arith.constant 0 : i32
    %c0_i32_0 = arith.constant 0 : i32
    %c0_i32_1 = arith.constant 0 : i32
    %c0_i32_2 = arith.constant 0 : i32
    return %c0_i32, %c0_i32_0, %c0_i32_1 : i32, i32, i32
  }
  func.func @transform_8(%arg0: i32) -> (i32, i32, i32) {
    %c0_i32 = arith.constant 0 : i32
    %c0_i32_0 = arith.constant 0 : i32
    %c0_i32_1 = arith.constant 0 : i32
    %c0_i32_2 = arith.constant 0 : i32
    return %c0_i32, %c0_i32_0, %c0_i32_1 : i32, i32, i32
  }
  func.func @transform_9(%arg0: i32) -> (i32, i32, i32) {
    %c0_i32 = arith.constant 0 : i32
    %c0_i32_0 = arith.constant 0 : i32
    %c0_i32_1 = arith.constant 0 : i32
    %c0_i32_2 = arith.constant 0 : i32
    return %c0_i32, %c0_i32_0, %c0_i32_1 : i32, i32, i32
  }
  func.func @transform_10(%arg0: i32) -> (i32, i32, i32) {
    %c0_i32 = arith.constant 0 : i32
    %c0_i32_0 = arith.constant 0 : i32
    %c0_i32_1 = arith.constant 0 : i32
    %c0_i32_2 = arith.constant 0 : i32
    return %c0_i32, %c0_i32_0, %c0_i32_1 : i32, i32, i32
  }
  func.func @transform_11(%arg0: i32) -> (i32, i32, i32) {
    %c0_i32 = arith.constant 0 : i32
    %c0_i32_0 = arith.constant 0 : i32
    %c0_i32_1 = arith.constant 0 : i32
    %c0_i32_2 = arith.constant 0 : i32
    return %c0_i32, %c0_i32_0, %c0_i32_1 : i32, i32, i32
  }
  func.func @transform_12(%arg0: i32) -> (i32, i32, i32) {
    %c0_i32 = arith.constant 0 : i32
    %c0_i32_0 = arith.constant 0 : i32
    %c0_i32_1 = arith.constant 0 : i32
    %c0_i32_2 = arith.constant 0 : i32
    return %c0_i32, %c0_i32_0, %c0_i32_1 : i32, i32, i32
  }
  func.func @transform_13(%arg0: i32) -> (i32, i32, i32) {
    %c0_i32 = arith.constant 0 : i32
    %c0_i32_0 = arith.constant 0 : i32
    %c0_i32_1 = arith.constant 0 : i32
    %c0_i32_2 = arith.constant 0 : i32
    return %c0_i32, %c0_i32_0, %c0_i32_1 : i32, i32, i32
  }
  func.func @transform_14(%arg0: i32) -> (i32, i32, i32, i32) {
    %c0_i32 = arith.constant 0 : i32
    %c0_i32_0 = arith.constant 0 : i32
    %c0_i32_1 = arith.constant 0 : i32
    %c0_i32_2 = arith.constant 0 : i32
    return %c0_i32, %arg0, %c0_i32_0, %c0_i32_1 : i32, i32, i32, i32
  }
}

</mosaic_0001>

<llo_original>
// kernel: tpu_custom_call.1
$region0: #{tpu_custom_call.1}
  #allocation0 [shape = 'u32[]', space=smem, size = 0x4, offset = 0x4, fixed_abs, tag = 'smem constant byte address 0x4 - core index']
  #allocation1 [shape = 'u32[144,128]{1,0:T(1,128)}', space=vmem, size = 0x12000, scoped, tag = 'internal scratch']
  %s0 = inlined_call_operand.hbm [shape: f32[2,8,32], index: 0, kind: input, shape index: {}]
  %s1 = inlined_call_operand.hbm [shape: f32[2,8,8], index: 1, kind: input, shape index: {}]
  %s2 = inlined_call_operand.vmem [shape: f32[2,32,96], index: 2, kind: input, shape index: {}]
  %s3 = inlined_call_operand.vmem [shape: f32[2,1,96], index: 3, kind: input, shape index: {}]
  %s4 = inlined_call_operand.vmem [shape: f32[2,32,32], index: 4, kind: input, shape index: {}]
  %s5 = inlined_call_operand.vmem [shape: f32[2,1,32], index: 5, kind: input, shape index: {}]
  %s6 = inlined_call_operand.vmem [shape: f32[2,1,32], index: 6, kind: input, shape index: {}]
  %s7 = inlined_call_operand.vmem [shape: f32[2,1,32], index: 7, kind: input, shape index: {}]
  %s8 = inlined_call_operand.vmem [shape: f32[2,32,64], index: 8, kind: input, shape index: {}]
  %s9 = inlined_call_operand.vmem [shape: f32[2,1,64], index: 9, kind: input, shape index: {}]
  %s10 = inlined_call_operand.vmem [shape: f32[2,64,32], index: 10, kind: input, shape index: {}]
  %s11 = inlined_call_operand.vmem [shape: f32[2,1,32], index: 11, kind: input, shape index: {}]
  %s12 = inlined_call_operand.vmem [shape: f32[2,1,32], index: 12, kind: input, shape index: {}]
  %s13 = inlined_call_operand.vmem [shape: f32[2,1,32], index: 13, kind: input, shape index: {}]
  %s14 = inlined_call_operand.hbm [shape: f32[2,2,8,32], index: 14, kind: output, shape index: {}]
  %s15 = sld [smem:[#allocation0]]
  $region97: #{tpu_custom_call.1} parent=0
    _
  %s17 = ssub.s32 1, %s15
  %s18 = scalar_select 0, %s17, %s15
  $region1: #{tpu_custom_call.1} parent=0
    #allocation2 [shape = 'u8[8192]{0}', space=vmem, size = 0x2000, scoped, tag = 'input window, operand 0']
    #allocation3 [shape = 's32[2]{0}', space=sflag, size = 0x8, scoped, tag = 'scoped memory for tpu_custom_call.1']
    #allocation4 [shape = 's32[2]{0}', space=sflag, size = 0x8, scoped, tag = 'scoped memory for tpu_custom_call.1']
    #allocation5 [shape = 'u8[8192]{0}', space=vmem, size = 0x2000, scoped, tag = 'input window, operand 1']
    #allocation6 [shape = 's32[2]{0}', space=sflag, size = 0x8, scoped, tag = 'scoped memory for tpu_custom_call.1']
    #allocation7 [shape = 'u8[16384]{0}', space=vmem, size = 0x4000, scoped, tag = 'output window, operand 0']
    %19 = vsyncpa [#allocation3], 0
    %s20 = scalar_lea.sflag [#allocation3], 1
    %21 = vsyncpa %s20, 0
    %22 = vsyncpa [#allocation6], 0
    %s23 = scalar_lea.sflag [#allocation6], 1
    %24 = vsyncpa %s23, 0
    %25 = vsyncpa [#allocation4], 0
    %s26 = scalar_lea.sflag [#allocation4], 1
    %27 = vsyncpa %s26, 0
    loop: start=0, step=1, limit=4
    $region2: #{tpu_custom_call.1} parent=1 // loop_pre_header
      _
    $region3: #{tpu_custom_call.1} parent=1 // loop_header
      %s29 = sphi 0, %s33
      %p30 = scmp.ge.s32.totalorder %s29, 4
      %s39 = sphi 0, %s41
      %s42 = sphi 0, %s39
      %s43 = sphi 0, %s42
      %s59 = sphi 0, %s43
      %s65 = sphi 0, %s67
      %s68 = sphi 0, %s65
      %s69 = sphi 0, %s68
      %s85 = sphi 0, %s69
      %s89 = sphi 0, %s89
      %s91 = sphi 0, %s89
      %s92 = sphi 0, %s91
      %s106 = sphi 0, %s92
      %s110 = sphi 0, %s110
      %s112 = sphi 0, %s110
      %s113 = sphi 0, %s112
      %s127 = sphi 0, %s113
      %s131 = sphi 0, %s131
      %s133 = sphi 0, %s131
      %s134 = sphi 0, %s133
      %s148 = sphi 0, %s134
      %s152 = sphi 0, %s152
      %s154 = sphi 0, %s152
      %s155 = sphi 0, %s154
      %s169 = sphi 0, %s155
      %s173 = sphi 0, %s173
      %s175 = sphi 0, %s173
      %s176 = sphi 0, %s175
      %s190 = sphi 0, %s176
      %s194 = sphi 0, %s194
      %s196 = sphi 0, %s194
      %s197 = sphi 0, %s196
      %s211 = sphi 0, %s197
      %s215 = sphi 0, %s215
      %s217 = sphi 0, %s215
      %s218 = sphi 0, %s217
      %s232 = sphi 0, %s218
      %s236 = sphi 0, %s236
      %s238 = sphi 0, %s236
      %s239 = sphi 0, %s238
      %s253 = sphi 0, %s239
      %s257 = sphi 0, %s257
      %s259 = sphi 0, %s257
      %s260 = sphi 0, %s259
      %s274 = sphi 0, %s260
      %s278 = sphi 0, %s278
      %s280 = sphi 0, %s278
      %s281 = sphi 0, %s280
      %s295 = sphi 0, %s281
      %s299 = sphi 0, %s299
      %s301 = sphi 0, %s299
      %s302 = sphi 0, %s301
      %s316 = sphi 0, %s302
      %s320 = sphi 0, %s320
      %s322 = sphi 0, %s320
      %s323 = sphi 0, %s322
      %s337 = sphi 0, %s323
      %s343 = sphi 0, %s345
      %s346 = sphi 0, %s343
      %s347 = sphi 0, %s346
      %s363 = sphi 0, %s347
    $region4: #{tpu_custom_call.1} parent=1 // loop_header_branch
      %32 = sbr.rel (%p30) target = $region8
    $region5: #{tpu_custom_call.1} parent=1 // loop_body
      %s34 = ssub.s32 %s29, 1
      %s35 = ssub.s32 %s29, 2
      %s36 = sadd.s32 %s29, 1
      %s37 = ssub.s32 %s29, %s36
      %p38 = scmp.eq.s32.totalorder %s37, 0
      %s40 = sadd.s32 %s39, 1
      %s41 = scalar_select %p38, %s39, %s40
      %p44 = pneg %p38
      %p45 = scmp.eq.s32.totalorder %s29, 1
      %p46 = por %p44, %p45
      %p47 = scmp.ne.s32.totalorder %s39, %s42
      %p48 = scmp.eq.s32.totalorder %s29, 0
      %p49 = por %p47, %p48
      %p50 = scmp.ne.s32.totalorder %s39, %s42
      %p51 = scmp.eq.s32.totalorder %s34, 1
      %p52 = por %p50, %p51
      %p53 = scmp.ne.s32.totalorder %s42, %s43
      %p54 = scmp.eq.s32.totalorder %s34, 0
      %p55 = por %p53, %p54
      %p56 = scmp.ne.s32.totalorder %s42, %s43
      %p57 = scmp.eq.s32.totalorder %s35, 1
      %p58 = por %p56, %p57
      %p60 = scmp.ne.s32.totalorder %s43, %s59
      %p61 = scmp.eq.s32.totalorder %s35, 0
      %p62 = por %p60, %p61
      %s63 = ssub.s32 %s29, %s36
      %p64 = scmp.eq.s32.totalorder %s63, 0
      %s66 = sadd.s32 %s65, 1
      %s67 = scalar_select %p64, %s65, %s66
      %p70 = pneg %p64
      %p71 = scmp.eq.s32.totalorder %s29, 1
      %p72 = por %p70, %p71
      %p73 = scmp.ne.s32.totalorder %s65, %s68
      %p74 = scmp.eq.s32.totalorder %s29, 0
      %p75 = por %p73, %p74
      %p76 = scmp.ne.s32.totalorder %s65, %s68
      %p77 = scmp.eq.s32.totalorder %s34, 1
      %p78 = por %p76, %p77
      %p79 = scmp.ne.s32.totalorder %s68, %s69
      %p80 = scmp.eq.s32.totalorder %s34, 0
      %p81 = por %p79, %p80
      %p82 = scmp.ne.s32.totalorder %s68, %s69
      %p83 = scmp.eq.s32.totalorder %s35, 1
      %p84 = por %p82, %p83
      %p86 = scmp.ne.s32.totalorder %s69, %s85
      %p87 = scmp.eq.s32.totalorder %s35, 0
      %p88 = por %p86, %p87
      %s90 = sadd.s32 %s89, 1
      %p93 = scmp.eq.s32.totalorder %s29, 1
      %p94 = scmp.ne.s32.totalorder %s89, %s91
      %p95 = scmp.eq.s32.totalorder %s29, 0
      %p96 = por %p94, %p95
      %p97 = scmp.ne.s32.totalorder %s89, %s91
      %p98 = scmp.eq.s32.totalorder %s34, 1
      %p99 = por %p97, %p98
      %p100 = scmp.ne.s32.totalorder %s91, %s92
      %p101 = scmp.eq.s32.totalorder %s34, 0
      %p102 = por %p100, %p101
      %p103 = scmp.ne.s32.totalorder %s91, %s92
      %p104 = scmp.eq.s32.totalorder %s35, 1
      %p105 = por %p103, %p104
      %p107 = scmp.ne.s32.totalorder %s92, %s106
      %p108 = scmp.eq.s32.totalorder %s35, 0
      %p109 = por %p107, %p108
      %s111 = sadd.s32 %s110, 1
      %p114 = scmp.eq.s32.totalorder %s29, 1
      %p115 = scmp.ne.s32.totalorder %s110, %s112
      %p116 = scmp.eq.s32.totalorder %s29, 0
      %p117 = por %p115, %p116
      %p118 = scmp.ne.s32.totalorder %s110, %s112
      %p119 = scmp.eq.s32.totalorder %s34, 1
      %p120 = por %p118, %p119
      %p121 = scmp.ne.s32.totalorder %s112, %s113
      %p122 = scmp.eq.s32.totalorder %s34, 0
      %p123 = por %p121, %p122
      %p124 = scmp.ne.s32.totalorder %s112, %s113
      %p125 = scmp.eq.s32.totalorder %s35, 1
      %p126 = por %p124, %p125
      %p128 = scmp.ne.s32.totalorder %s113, %s127
      %p129 = scmp.eq.s32.totalorder %s35, 0
      %p130 = por %p128, %p129
      %s132 = sadd.s32 %s131, 1
      %p135 = scmp.eq.s32.totalorder %s29, 1
      %p136 = scmp.ne.s32.totalorder %s131, %s133
      %p137 = scmp.eq.s32.totalorder %s29, 0
      %p138 = por %p136, %p137
      %p139 = scmp.ne.s32.totalorder %s131, %s133
      %p140 = scmp.eq.s32.totalorder %s34, 1
      %p141 = por %p139, %p140
      %p142 = scmp.ne.s32.totalorder %s133, %s134
      %p143 = scmp.eq.s32.totalorder %s34, 0
      %p144 = por %p142, %p143
      %p145 = scmp.ne.s32.totalorder %s133, %s134
      %p146 = scmp.eq.s32.totalorder %s35, 1
      %p147 = por %p145, %p146
      %p149 = scmp.ne.s32.totalorder %s134, %s148
      %p150 = scmp.eq.s32.totalorder %s35, 0
      %p151 = por %p149, %p150
      %s153 = sadd.s32 %s152, 1
      %p156 = scmp.eq.s32.totalorder %s29, 1
      %p157 = scmp.ne.s32.totalorder %s152, %s154
      %p158 = scmp.eq.s32.totalorder %s29, 0
      %p159 = por %p157, %p158
      %p160 = scmp.ne.s32.totalorder %s152, %s154
      %p161 = scmp.eq.s32.totalorder %s34, 1
      %p162 = por %p160, %p161
      %p163 = scmp.ne.s32.totalorder %s154, %s155
      %p164 = scmp.eq.s32.totalorder %s34, 0
      %p165 = por %p163, %p164
      %p166 = scmp.ne.s32.totalorder %s154, %s155
      %p167 = scmp.eq.s32.totalorder %s35, 1
      %p168 = por %p166, %p167
      %p170 = scmp.ne.s32.totalorder %s155, %s169
      %p171 = scmp.eq.s32.totalorder %s35, 0
      %p172 = por %p170, %p171
      %s174 = sadd.s32 %s173, 1
      %p177 = scmp.eq.s32.totalorder %s29, 1
      %p178 = scmp.ne.s32.totalorder %s173, %s175
      %p179 = scmp.eq.s32.totalorder %s29, 0
      %p180 = por %p178, %p179
      %p181 = scmp.ne.s32.totalorder %s173, %s175
      %p182 = scmp.eq.s32.totalorder %s34, 1
      %p183 = por %p181, %p182
      %p184 = scmp.ne.s32.totalorder %s175, %s176
      %p185 = scmp.eq.s32.totalorder %s34, 0
      %p186 = por %p184, %p185
      %p187 = scmp.ne.s32.totalorder %s175, %s176
      %p188 = scmp.eq.s32.totalorder %s35, 1
      %p189 = por %p187, %p188
      %p191 = scmp.ne.s32.totalorder %s176, %s190
      %p192 = scmp.eq.s32.totalorder %s35, 0
      %p193 = por %p191, %p192
      %s195 = sadd.s32 %s194, 1
      %p198 = scmp.eq.s32.totalorder %s29, 1
      %p199 = scmp.ne.s32.totalorder %s194, %s196
      %p200 = scmp.eq.s32.totalorder %s29, 0
      %p201 = por %p199, %p200
      %p202 = scmp.ne.s32.totalorder %s194, %s196
      %p203 = scmp.eq.s32.totalorder %s34, 1
      %p204 = por %p202, %p203
      %p205 = scmp.ne.s32.totalorder %s196, %s197
      %p206 = scmp.eq.s32.totalorder %s34, 0
      %p207 = por %p205, %p206
      %p208 = scmp.ne.s32.totalorder %s196, %s197
      %p209 = scmp.eq.s32.totalorder %s35, 1
      %p210 = por %p208, %p209
      %p212 = scmp.ne.s32.totalorder %s197, %s211
      %p213 = scmp.eq.s32.totalorder %s35, 0
      %p214 = por %p212, %p213
      %s216 = sadd.s32 %s215, 1
      %p219 = scmp.eq.s32.totalorder %s29, 1
      %p220 = scmp.ne.s32.totalorder %s215, %s217
      %p221 = scmp.eq.s32.totalorder %s29, 0
      %p222 = por %p220, %p221
      %p223 = scmp.ne.s32.totalorder %s215, %s217
      %p224 = scmp.eq.s32.totalorder %s34, 1
      %p225 = por %p223, %p224
      %p226 = scmp.ne.s32.totalorder %s217, %s218
      %p227 = scmp.eq.s32.totalorder %s34, 0
      %p228 = por %p226, %p227
      %p229 = scmp.ne.s32.totalorder %s217, %s218
      %p230 = scmp.eq.s32.totalorder %s35, 1
      %p231 = por %p229, %p230
      %p233 = scmp.ne.s32.totalorder %s218, %s232
      %p234 = scmp.eq.s32.totalorder %s35, 0
      %p235 = por %p233, %p234
      %s237 = sadd.s32 %s236, 1
      %p240 = scmp.eq.s32.totalorder %s29, 1
      %p241 = scmp.ne.s32.totalorder %s236, %s238
      %p242 = scmp.eq.s32.totalorder %s29, 0
      %p243 = por %p241, %p242
      %p244 = scmp.ne.s32.totalorder %s236, %s238
      %p245 = scmp.eq.s32.totalorder %s34, 1
      %p246 = por %p244, %p245
      %p247 = scmp.ne.s32.totalorder %s238, %s239
      %p248 = scmp.eq.s32.totalorder %s34, 0
      %p249 = por %p247, %p248
      %p250 = scmp.ne.s32.totalorder %s238, %s239
      %p251 = scmp.eq.s32.totalorder %s35, 1
      %p252 = por %p250, %p251
      %p254 = scmp.ne.s32.totalorder %s239, %s253
      %p255 = scmp.eq.s32.totalorder %s35, 0
      %p256 = por %p254, %p255
      %s258 = sadd.s32 %s257, 1
      %p261 = scmp.eq.s32.totalorder %s29, 1
      %p262 = scmp.ne.s32.totalorder %s257, %s259
      %p263 = scmp.eq.s32.totalorder %s29, 0
      %p264 = por %p262, %p263
      %p265 = scmp.ne.s32.totalorder %s257, %s259
      %p266 = scmp.eq.s32.totalorder %s34, 1
      %p267 = por %p265, %p266
      %p268 = scmp.ne.s32.totalorder %s259, %s260
      %p269 = scmp.eq.s32.totalorder %s34, 0
      %p270 = por %p268, %p269
      %p271 = scmp.ne.s32.totalorder %s259, %s260
      %p272 = scmp.eq.s32.totalorder %s35, 1
      %p273 = por %p271, %p272
      %p275 = scmp.ne.s32.totalorder %s260, %s274
      %p276 = scmp.eq.s32.totalorder %s35, 0
      %p277 = por %p275, %p276
      %s279 = sadd.s32 %s278, 1
      %p282 = scmp.eq.s32.totalorder %s29, 1
      %p283 = scmp.ne.s32.totalorder %s278, %s280
      %p284 = scmp.eq.s32.totalorder %s29, 0
      %p285 = por %p283, %p284
      %p286 = scmp.ne.s32.totalorder %s278, %s280
      %p287 = scmp.eq.s32.totalorder %s34, 1
      %p288 = por %p286, %p287
      %p289 = scmp.ne.s32.totalorder %s280, %s281
      %p290 = scmp.eq.s32.totalorder %s34, 0
      %p291 = por %p289, %p290
      %p292 = scmp.ne.s32.totalorder %s280, %s281
      %p293 = scmp.eq.s32.totalorder %s35, 1
      %p294 = por %p292, %p293
      %p296 = scmp.ne.s32.totalorder %s281, %s295
      %p297 = scmp.eq.s32.totalorder %s35, 0
      %p298 = por %p296, %p297
      %s300 = sadd.s32 %s299, 1
      %p303 = scmp.eq.s32.totalorder %s29, 1
      %p304 = scmp.ne.s32.totalorder %s299, %s301
      %p305 = scmp.eq.s32.totalorder %s29, 0
      %p306 = por %p304, %p305
      %p307 = scmp.ne.s32.totalorder %s299, %s301
      %p308 = scmp.eq.s32.totalorder %s34, 1
      %p309 = por %p307, %p308
      %p310 = scmp.ne.s32.totalorder %s301, %s302
      %p311 = scmp.eq.s32.totalorder %s34, 0
      %p312 = por %p310, %p311
      %p313 = scmp.ne.s32.totalorder %s301, %s302
      %p314 = scmp.eq.s32.totalorder %s35, 1
      %p315 = por %p313, %p314
      %p317 = scmp.ne.s32.totalorder %s302, %s316
      %p318 = scmp.eq.s32.totalorder %s35, 0
      %p319 = por %p317, %p318
      %s321 = sadd.s32 %s320, 1
      %p324 = scmp.eq.s32.totalorder %s29, 1
      %p325 = scmp.ne.s32.totalorder %s320, %s322
      %p326 = scmp.eq.s32.totalorder %s29, 0
      %p327 = por %p325, %p326
      %p328 = scmp.ne.s32.totalorder %s320, %s322
      %p329 = scmp.eq.s32.totalorder %s34, 1
      %p330 = por %p328, %p329
      %p331 = scmp.ne.s32.totalorder %s322, %s323
      %p332 = scmp.eq.s32.totalorder %s34, 0
      %p333 = por %p331, %p332
      %p334 = scmp.ne.s32.totalorder %s322, %s323
      %p335 = scmp.eq.s32.totalorder %s35, 1
      %p336 = por %p334, %p335
      %p338 = scmp.ne.s32.totalorder %s323, %s337
      %p339 = scmp.eq.s32.totalorder %s35, 0
      %p340 = por %p338, %p339
      %s341 = ssub.s32 %s29, %s36
      %p342 = scmp.eq.s32.totalorder %s341, 0
      %s344 = sadd.s32 %s343, 1
      %s345 = scalar_select %p342, %s343, %s344
      %p348 = pneg %p342
      %p349 = scmp.eq.s32.totalorder %s29, 1
      %p350 = por %p348, %p349
      %p351 = scmp.ne.s32.totalorder %s343, %s346
      %p352 = scmp.eq.s32.totalorder %s29, 0
      %p353 = por %p351, %p352
      %p354 = scmp.ne.s32.totalorder %s343, %s346
      %p355 = scmp.eq.s32.totalorder %s34, 1
      %p356 = por %p354, %p355
      %p357 = scmp.ne.s32.totalorder %s346, %s347
      %p358 = scmp.eq.s32.totalorder %s34, 0
      %p359 = por %p357, %p358
      %p360 = scmp.ne.s32.totalorder %s346, %s347
      %p361 = scmp.eq.s32.totalorder %s35, 1
      %p362 = por %p360, %p361
      %p364 = scmp.ne.s32.totalorder %s347, %s363
      %p365 = scmp.eq.s32.totalorder %s35, 0
      %p366 = por %p364, %p365
      %p367 = scmp.le.s32.totalorder 1, %s29
      %p368 = scmp.lt.s32.totalorder %s29, 3
      %p369 = pnand %p367, %p368
      %p370 = pneg %p369
      // Predicated region
      $region9: #{tpu_custom_call.1} parent=5 // pred_check
        _
      $region10: #{tpu_custom_call.1} parent=5 // pred_check_branch
        %372 = sbr.rel (%p369) target = $region12
      $region11: #{tpu_custom_call.1} parent=5 // pred_region
        %s373 = ssub.s32 %s29, 1
        // Predicated region
        $region13: #{tpu_custom_call.1} parent=11 // pred_check
          %p374 = pneg %p102
        $region14: #{tpu_custom_call.1} parent=11 // pred_check_branch
          %376 = sbr.rel (%p374) target = $region16
        $region15: #{tpu_custom_call.1} parent=11 // pred_region
          _
        $region16: #{tpu_custom_call.1} parent=11 // pred_fallthru
          _
        // Predicated region
        $region17: #{tpu_custom_call.1} parent=11 // pred_check
          %p377 = pneg %p123
        $region18: #{tpu_custom_call.1} parent=11 // pred_check_branch
          %379 = sbr.rel (%p377) target = $region20
        $region19: #{tpu_custom_call.1} parent=11 // pred_region
          _
        $region20: #{tpu_custom_call.1} parent=11 // pred_fallthru
          _
        // Predicated region
        $region21: #{tpu_custom_call.1} parent=11 // pred_check
          %p380 = pneg %p144
        $region22: #{tpu_custom_call.1} parent=11 // pred_check_branch
          %382 = sbr.rel (%p380) target = $region24
        $region23: #{tpu_custom_call.1} parent=11 // pred_region
          _
        $region24: #{tpu_custom_call.1} parent=11 // pred_fallthru
          _
        // Predicated region
        $region25: #{tpu_custom_call.1} parent=11 // pred_check
          %p383 = pneg %p165
        $region26: #{tpu_custom_call.1} parent=11 // pred_check_branch
          %385 = sbr.rel (%p383) target = $region28
        $region27: #{tpu_custom_call.1} parent=11 // pred_region
          _
        $region28: #{tpu_custom_call.1} parent=11 // pred_fallthru
          _
        // Predicated region
        $region29: #{tpu_custom_call.1} parent=11 // pred_check
          %p386 = pneg %p186
        $region30: #{tpu_custom_call.1} parent=11 // pred_check_branch
          %388 = sbr.rel (%p386) target = $region32
        $region31: #{tpu_custom_call.1} parent=11 // pred_region
          _
        $region32: #{tpu_custom_call.1} parent=11 // pred_fallthru
          _
        // Predicated region
        $region33: #{tpu_custom_call.1} parent=11 // pred_check
          %p389 = pneg %p207
        $region34: #{tpu_custom_call.1} parent=11 // pred_check_branch
          %391 = sbr.rel (%p389) target = $region36
        $region35: #{tpu_custom_call.1} parent=11 // pred_region
          _
        $region36: #{tpu_custom_call.1} parent=11 // pred_fallthru
          _
        // Predicated region
        $region37: #{tpu_custom_call.1} parent=11 // pred_check
          %p392 = pneg %p228
        $region38: #{tpu_custom_call.1} parent=11 // pred_check_branch
          %394 = sbr.rel (%p392) target = $region40
        $region39: #{tpu_custom_call.1} parent=11 // pred_region
          _
        $region40: #{tpu_custom_call.1} parent=11 // pred_fallthru
          _
        // Predicated region
        $region41: #{tpu_custom_call.1} parent=11 // pred_check
          %p395 = pneg %p249
        $region42: #{tpu_custom_call.1} parent=11 // pred_check_branch
          %397 = sbr.rel (%p395) target = $region44
        $region43: #{tpu_custom_call.1} parent=11 // pred_region
          _
        $region44: #{tpu_custom_call.1} parent=11 // pred_fallthru
          _
        // Predicated region
        $region45: #{tpu_custom_call.1} parent=11 // pred_check
          %p398 = pneg %p270
        $region46: #{tpu_custom_call.1} parent=11 // pred_check_branch
          %400 = sbr.rel (%p398) target = $region48
        $region47: #{tpu_custom_call.1} parent=11 // pred_region
          _
        $region48: #{tpu_custom_call.1} parent=11 // pred_fallthru
          _
        // Predicated region
        $region49: #{tpu_custom_call.1} parent=11 // pred_check
          %p401 = pneg %p291
        $region50: #{tpu_custom_call.1} parent=11 // pred_check_branch
          %403 = sbr.rel (%p401) target = $region52
        $region51: #{tpu_custom_call.1} parent=11 // pred_region
          _
        $region52: #{tpu_custom_call.1} parent=11 // pred_fallthru
          _
        // Predicated region
        $region53: #{tpu_custom_call.1} parent=11 // pred_check
          %p404 = pneg %p312
        $region54: #{tpu_custom_call.1} parent=11 // pred_check_branch
          %406 = sbr.rel (%p404) target = $region56
        $region55: #{tpu_custom_call.1} parent=11 // pred_region
          _
        $region56: #{tpu_custom_call.1} parent=11 // pred_fallthru
          _
        // Predicated region
        $region57: #{tpu_custom_call.1} parent=11 // pred_check
          %p407 = pneg %p333
        $region58: #{tpu_custom_call.1} parent=11 // pred_check_branch
          %409 = sbr.rel (%p407) target = $region60
        $region59: #{tpu_custom_call.1} parent=11 // pred_region
          _
        $region60: #{tpu_custom_call.1} parent=11 // pred_fallthru
          _
      $region12: #{tpu_custom_call.1} parent=5 // pred_fallthru
        _
      %p410 = scmp.lt.s32.totalorder %s29, 2
      // Predicated region
      $region61: #{tpu_custom_call.1} parent=5 // pred_check
        %p411 = pneg %p410
      $region62: #{tpu_custom_call.1} parent=5 // pred_check_branch
        %413 = sbr.rel (%p411) target = $region64
      $region63: #{tpu_custom_call.1} parent=5 // pred_region
        // Predicated region
        $region65: #{tpu_custom_call.1} parent=63 // pred_check
          %p414 = pneg %p49
        $region66: #{tpu_custom_call.1} parent=63 // pred_check_branch
          %416 = sbr.rel (%p414) target = $region68
        $region67: #{tpu_custom_call.1} parent=63 // pred_region
          %s417 = sand.u32 %s39, 1
          %s418 = scalar_lea.sflag [#allocation3], %s417
          %s419 = sand.u32 %s39, 1
          %s420 = smul.addr %s419, 8
          %s421 = scalar_lea.vmem [#allocation2], %s420
          %s423 = ssub.s32 128, 128
          %424 = vsyncadd %s418, %s423
          %s425 = smul.addr %s29, 128
          %s426 = scalar_lea.hbm %s0, %s425
          %s428 = sshll.u32 %s421, 4
          %s429 = int_to_ptr.vmem [resolvable:$true] %s428
          %431 = dma.hbm_to_vmem [thread:$0]  %s426, 128, %s429, %s418
        $region68: #{tpu_custom_call.1} parent=63 // pred_fallthru
          _
        // Predicated region
        $region69: #{tpu_custom_call.1} parent=63 // pred_check
          %p432 = pneg %p75
        $region70: #{tpu_custom_call.1} parent=63 // pred_check_branch
          %434 = sbr.rel (%p432) target = $region72
        $region71: #{tpu_custom_call.1} parent=63 // pred_region
          %s435 = sand.u32 %s65, 1
          %s436 = scalar_lea.sflag [#allocation6], %s435
          %s437 = sand.u32 %s65, 1
          %s438 = smul.addr %s437, 8
          %s439 = scalar_lea.vmem [#allocation5], %s438
          %s441 = ssub.s32 128, 128
          %442 = vsyncadd %s436, %s441
          %s443 = smul.addr %s29, 128
          %s444 = scalar_lea.hbm %s1, %s443
          %s446 = sshll.u32 %s439, 4
          %s447 = int_to_ptr.vmem [resolvable:$true] %s446
          %449 = dma.hbm_to_vmem [thread:$0]  %s444, 128, %s447, %s436
        $region72: #{tpu_custom_call.1} parent=63 // pred_fallthru
          _
      $region64: #{tpu_custom_call.1} parent=5 // pred_fallthru
        _
      %p450 = scmp.le.s32.totalorder 1, %s29
      %p451 = scmp.lt.s32.totalorder %s29, 3
      %p452 = pnand %p450, %p451
      %p453 = pneg %p452
      // Predicated region
      $region73: #{tpu_custom_call.1} parent=5 // pred_check
        _
      $region74: #{tpu_custom_call.1} parent=5 // pred_check_branch
        %455 = sbr.rel (%p452) target = $region76
      $region75: #{tpu_custom_call.1} parent=5 // pred_region
        %s456 = ssub.s32 %s29, 1
        %s457 = sand.u32 %s42, 1
        %s458 = scalar_lea.sflag [#allocation3], %s457
        %s459 = sand.u32 %s42, 1
        %s460 = smul.addr %s459, 8
        %s461 = scalar_lea.vmem [#allocation2], %s460
        // Predicated region
        $region77: #{tpu_custom_call.1} parent=75 // pred_check
          %p462 = pneg %p55
        $region78: #{tpu_custom_call.1} parent=75 // pred_check_branch
          %464 = sbr.rel (%p462) target = $region80
        $region79: #{tpu_custom_call.1} parent=75 // pred_region
          %465 = dma.done %s458, 128
        $region80: #{tpu_custom_call.1} parent=75 // pred_fallthru
          _
        %s466 = sand.u32 %s68, 1
        %s467 = scalar_lea.sflag [#allocation6], %s466
        %s468 = sand.u32 %s68, 1
        %s469 = smul.addr %s468, 8
        %s470 = scalar_lea.vmem [#allocation5], %s469
        // Predicated region
        $region81: #{tpu_custom_call.1} parent=75 // pred_check
          %p471 = pneg %p81
        $region82: #{tpu_custom_call.1} parent=75 // pred_check_branch
          %473 = sbr.rel (%p471) target = $region84
        $region83: #{tpu_custom_call.1} parent=75 // pred_region
          %474 = dma.done %s467, 128
        $region84: #{tpu_custom_call.1} parent=75 // pred_fallthru
          _
        %s475 = sand.u32 %s42, 1
        %s476 = scalar_lea.sflag [#allocation3], %s475
        %s477 = sand.u32 %s42, 1
        %s478 = smul.addr %s477, 8
        %s479 = scalar_lea.vmem [#allocation2], %s478
        %p480 = pneg %p55
        %p481 = pneg %p52
        %s482 = sand.u32 %s68, 1
        %s483 = scalar_lea.sflag [#allocation6], %s482
        %s484 = sand.u32 %s68, 1
        %s485 = smul.addr %s484, 8
        %s486 = scalar_lea.vmem [#allocation5], %s485
        %p487 = pneg %p81
        %p488 = pneg %p78
        %p489 = pneg %p102
        %p490 = pneg %p99
        %p491 = pneg %p123
        %p492 = pneg %p120
        %p493 = pneg %p144
        %p494 = pneg %p141
        %p495 = pneg %p165
        %p496 = pneg %p162
        %p497 = pneg %p186
        %p498 = pneg %p183
        %p499 = pneg %p207
        %p500 = pneg %p204
        %p501 = pneg %p228
        %p502 = pneg %p225
        %p503 = pneg %p249
        %p504 = pneg %p246
        %p505 = pneg %p270
        %p506 = pneg %p267
        %p507 = pneg %p291
        %p508 = pneg %p288
        %p509 = pneg %p312
        %p510 = pneg %p309
        %p511 = pneg %p333
        %p512 = pneg %p330
        %p513 = pneg %p359
        %p514 = pneg %p356
        %s515 = sand.u32 %s346, 1
        %s516 = scalar_lea.sflag [#allocation4], %s515
        %s517 = sand.u32 %s346, 1
        %s518 = smul.addr %s517, 16
        %s519 = scalar_lea.vmem [#allocation7], %s518
        %v520 = vld [vmem:[%s461] sm:$0xff]
        %v521 = vld [vmem:[%s470] sm:$0xff]
        %vm522 = vcmp.gt.f32.partialorder %v521, 0.0
        %v523 = vld [vmem:[%s2] sm:$0xff]
        %v524 = vld [vmem:[%s2 + $0x8] sm:$0xff]
        %v525 = vld [vmem:[%s2 + $0x10] sm:$0xff]
        %v526 = vld [vmem:[%s2 + $0x18] sm:$0xff]
        %v527 = vld [vmem:[%s3] sm:$0x1]
        %v529 = vlaneseq
        %v530 = vshrl.u32 %v529, 7
        %v531 = vsub.s32 0, %v530
        %v532 = vrot.slane %v527, %v531
        %vm534 = vcmask 261120
        %v536 = vsel %vm534, %v520, 0
        %538 = vmatprep.subr.mxu0 0.0
        %539 = vmatpush1.msra.mxu0 %v523
        %540 = vmatprep.subr.mxu0 0.0
        %541 = vmatpush1.msra.mxu0 %v524
        %542 = vmatprep.subr.mxu0 0.0
        %543 = vmatpush1.msra.mxu0 %v525
        %544 = vmatprep.subr.mxu0 0.0
        %545 = vmatpush1.msra.mxu0 %v526
        %546 = vmatprep.subr.mxu0 0.0
        %547 = vmatpush1.msra.mxu0 0.0
        %548 = vmatprep.subr.mxu0 0.0
        %549 = vmatpush1.msra.mxu0 0.0
        %550 = vmatprep.subr.mxu0 0.0
        %551 = vmatpush1.msra.mxu0 0.0
        %552 = vmatprep.subr.mxu0 0.0
        %553 = vmatpush1.msra.mxu0 0.0
        %554 = vmatprep.subr.mxu0 0.0
        %555 = vmatpush1.msra.mxu0 0.0
        %556 = vmatprep.subr.mxu0 0.0
        %557 = vmatpush1.msra.mxu0 0.0
        %558 = vmatprep.subr.mxu0 0.0
        %559 = vmatpush1.msra.mxu0 0.0
        %560 = vmatprep.subr.mxu0 0.0
        %561 = vmatpush1.msra.mxu0 0.0
        %562 = vmatprep.subr.mxu0 0.0
        %563 = vmatpush1.msra.mxu0 0.0
        %564 = vmatprep.subr.mxu0 0.0
        %565 = vmatpush1.msra.mxu0 0.0
        %566 = vmatprep.subr.mxu0 0.0
        %567 = vmatpush1.msra.mxu0 0.0
        %568 = vmatprep.subr.mxu0 0.0
        %569 = vmatpush1.msra.mxu0 0.0
        %570 = vmatprep.subr.mxu0 0.0
        %571 = vmatpush1.msra.mxu0 0.0
        %572 = vmatprep.subr.mxu0 0.0
        %573 = vmatpush1.msra.mxu0 0.0
        %574 = vmatprep.subr.mxu0 0.0
        %575 = vmatpush1.msra.mxu0 0.0
        %576 = vmatprep.subr.mxu0 0.0
        %577 = vmatpush1.msra.mxu0 0.0
        %578 = vmatprep.subr.mxu0 0.0
        %579 = vmatpush1.msra.mxu0 0.0
        %580 = vmatprep.subr.mxu0 0.0
        %581 = vmatpush1.msra.mxu0 0.0
        %582 = vmatprep.subr.mxu0 0.0
        %583 = vmatpush1.msra.mxu0 0.0
        %584 = vmatprep.subr.mxu0 0.0
        %585 = vmatpush1.msra.mxu0 0.0
        %586 = vmatprep.subr.mxu0 0.0
        %587 = vmatpush1.msra.mxu0 0.0
        %588 = vmatprep.subr.mxu0 0.0
        %589 = vmatpush1.msra.mxu0 0.0
        %590 = vmatprep.subr.mxu0 0.0
        %591 = vmatpush1.msra.mxu0 0.0
        %592 = vmatprep.subr.mxu0 0.0
        %593 = vmatpush1.msra.mxu0 0.0
        %594 = vmatprep.subr.mxu0 0.0
        %595 = vmatpush1.msra.mxu0 0.0
        %596 = vmatprep.subr.mxu0 0.0
        %597 = vmatpush1.msra.mxu0 0.0
        %598 = vmatprep.subr.mxu0 0.0
        %599 = vmatpush1.msra.mxu0 0.0
        %600 = vmatprep.subr.mxu0 0.0
        %601 = vmatpush1.msra.mxu0 0.0
        %602 = vmatprep.mubr.f32.mxu0 0.0
        %603 = vmatmul.mubr.f32.gmra.mrb[0].mxu0 %v536
        %v604 = vpop.f32.mrb[0].mxu0
        %v605 = vadd.f32 %v532, %v604
        %v606 = vpop.f32.mrb[0].mxu0
        %607 = vdwg.mxu0
        %v608 = vld [vmem:[%s4] sm:$0xff]
        %v609 = vld [vmem:[%s4 + $0x8] sm:$0xff]
        %v610 = vld [vmem:[%s4 + $0x10] sm:$0xff]
        %v611 = vld [vmem:[%s4 + $0x18] sm:$0xff]
        %v612 = vld [vmem:[%s5] sm:$0x1]
        %614 = vrot.lane.b32.xlu0 %v605, 96
        %v615 = vpop.permute.xlu0 %614
        %vm616 = vcmask 130048
        %v617 = vsel %vm616, %v605, 0
        %v619 = vsel %vm616, %v615, 0
        %621 = vmatprep.subr.mxu0 0.0
        %622 = vmatpush1.xpose.msra.mxu0 %v619
        %623 = vmatprep.subr.mxu0 0.0
        %624 = vmatpush1.xpose.msra.mxu0 0.0
        %625 = vmatprep.subr.mxu0 0.0
        %626 = vmatpush1.xpose.msra.mxu0 0.0
        %627 = vmatprep.subr.mxu0 0.0
        %628 = vmatpush1.xpose.msra.mxu0 0.0
        %629 = vmatprep.subr.mxu0 0.0
        %630 = vmatpush1.xpose.msra.mxu0 0.0
        %631 = vmatprep.subr.mxu0 0.0
        %632 = vmatpush1.xpose.msra.mxu0 0.0
        %633 = vmatprep.subr.mxu0 0.0
        %634 = vmatpush1.xpose.msra.mxu0 0.0
        %635 = vmatprep.subr.mxu0 0.0
        %636 = vmatpush1.xpose.msra.mxu0 0.0
        %637 = vmatprep.subr.mxu0 0.0
        %638 = vmatpush1.xpose.msra.mxu0 0.0
        %639 = vmatprep.subr.mxu0 0.0
        %640 = vmatpush1.xpose.msra.mxu0 0.0
        %641 = vmatprep.subr.mxu0 0.0
        %642 = vmatpush1.xpose.msra.mxu0 0.0
        %643 = vmatprep.subr.mxu0 0.0
        %644 = vmatpush1.xpose.msra.mxu0 0.0
        %645 = vmatprep.subr.mxu0 0.0
        %646 = vmatpush1.xpose.msra.mxu0 0.0
        %647 = vmatprep.subr.mxu0 0.0
        %648 = vmatpush1.xpose.msra.mxu0 0.0
        %649 = vmatprep.subr.mxu0 0.0
        %650 = vmatpush1.xpose.msra.mxu0 0.0
        %651 = vmatprep.subr.mxu0 0.0
        %652 = vmatpush1.xpose.msra.mxu0 0.0
        %653 = vmatprep.subr.mxu0 0.0
        %654 = vmatpush1.xpose.msra.mxu0 0.0
        %655 = vmatprep.subr.mxu0 0.0
        %656 = vmatpush1.xpose.msra.mxu0 0.0
        %657 = vmatprep.subr.mxu0 0.0
        %658 = vmatpush1.xpose.msra.mxu0 0.0
        %659 = vmatprep.subr.mxu0 0.0
        %660 = vmatpush1.xpose.msra.mxu0 0.0
        %661 = vmatprep.subr.mxu0 0.0
        %662 = vmatpush1.xpose.msra.mxu0 0.0
        %663 = vmatprep.subr.mxu0 0.0
        %664 = vmatpush1.xpose.msra.mxu0 0.0
        %665 = vmatprep.subr.mxu0 0.0
        %666 = vmatpush1.xpose.msra.mxu0 0.0
        %667 = vmatprep.subr.mxu0 0.0
        %668 = vmatpush1.xpose.msra.mxu0 0.0
        %669 = vmatprep.subr.mxu0 0.0
        %670 = vmatpush1.xpose.msra.mxu0 0.0
        %671 = vmatprep.subr.mxu0 0.0
        %672 = vmatpush1.xpose.msra.mxu0 0.0
        %673 = vmatprep.subr.mxu0 0.0
        %674 = vmatpush1.xpose.msra.mxu0 0.0
        %675 = vmatprep.subr.mxu0 0.0
        %676 = vmatpush1.xpose.msra.mxu0 0.0
        %677 = vmatprep.subr.mxu0 0.0
        %678 = vmatpush1.xpose.msra.mxu0 0.0
        %679 = vmatprep.subr.mxu0 0.0
        %680 = vmatpush1.xpose.msra.mxu0 0.0
        %681 = vmatprep.subr.mxu0 0.0
        %682 = vmatpush1.xpose.msra.mxu0 0.0
        %683 = vmatprep.subr.mxu0 0.0
        %684 = vmatpush1.xpose.msra.mxu0 0.0
        %685 = vmatprep.mubr.f32.mxu0 0.0
        %686 = vmatmul.mubr.f32.gmra.mrb[0].mxu0 %v617
        %v687 = vpop.f32.mrb[0].mxu0
        %v688 = vadd.f32 0.0, %v687
        %v689 = vpop.f32.mrb[0].mxu0
        %690 = vdwg.mxu0
        %v691 = vmul.f32 %v688, 0.25
        %v692 = vsel %vm522, %v691, -1e+30
        %vm693 = vcmask 64512
        %v694 = vsel %vm693, %v692, -inf
        %695 = vmax.xlane.f32.xlu0 %v694
        %v696 = vpop.xlane.xlu0 %695
        %v697 = vsub.f32 %v692, %v696
        %v698 = vmul.f32 %v697, 1.442695
        %v699 = vpow.pop %v698
        %v700 = vsel %vm693, %v699, 0.0
        %701 = vadd.xlane.f32.xlu0 %v700
        %v702 = vpop.xlane.xlu0 %701
        %v703 = vrcp.pop %v702
        %v704 = vmul.f32 %v699, %v703
        %v705 = vsel %vm522, %v704, 0.0
        %706 = vrot.lane.b32.xlu0 %v605, 64
        %v707 = vpop.permute.xlu0 %706
        %v710 = vsel %vm693, %v705, 0
        %712 = vmatprep.subr.mxu0 0.0
        %713 = vmatpush1.msra.mxu0 %v707
        %714 = vmatprep.subr.mxu0 0.0
        %715 = vmatpush1.msra.mxu0 0.0
        %716 = vmatprep.subr.mxu0 0.0
        %717 = vmatpush1.msra.mxu0 0.0
        %718 = vmatprep.subr.mxu0 0.0
        %719 = vmatpush1.msra.mxu0 0.0
        %720 = vmatprep.subr.mxu0 0.0
        %721 = vmatpush1.msra.mxu0 0.0
        %722 = vmatprep.subr.mxu0 0.0
        %723 = vmatpush1.msra.mxu0 0.0
        %724 = vmatprep.subr.mxu0 0.0
        %725 = vmatpush1.msra.mxu0 0.0
        %726 = vmatprep.subr.mxu0 0.0
        %727 = vmatpush1.msra.mxu0 0.0
        %728 = vmatprep.subr.mxu0 0.0
        %729 = vmatpush1.msra.mxu0 0.0
        %730 = vmatprep.subr.mxu0 0.0
        %731 = vmatpush1.msra.mxu0 0.0
        %732 = vmatprep.subr.mxu0 0.0
        %733 = vmatpush1.msra.mxu0 0.0
        %734 = vmatprep.subr.mxu0 0.0
        %735 = vmatpush1.msra.mxu0 0.0
        %736 = vmatprep.subr.mxu0 0.0
        %737 = vmatpush1.msra.mxu0 0.0
        %738 = vmatprep.subr.mxu0 0.0
        %739 = vmatpush1.msra.mxu0 0.0
        %740 = vmatprep.subr.mxu0 0.0
        %741 = vmatpush1.msra.mxu0 0.0
        %742 = vmatprep.subr.mxu0 0.0
        %743 = vmatpush1.msra.mxu0 0.0
        %744 = vmatprep.subr.mxu0 0.0
        %745 = vmatpush1.msra.mxu0 0.0
        %746 = vmatprep.subr.mxu0 0.0
        %747 = vmatpush1.msra.mxu0 0.0
        %748 = vmatprep.subr.mxu0 0.0
        %749 = vmatpush1.msra.mxu0 0.0
        %750 = vmatprep.subr.mxu0 0.0
        %751 = vmatpush1.msra.mxu0 0.0
        %752 = vmatprep.subr.mxu0 0.0
        %753 = vmatpush1.msra.mxu0 0.0
        %754 = vmatprep.subr.mxu0 0.0
        %755 = vmatpush1.msra.mxu0 0.0
        %756 = vmatprep.subr.mxu0 0.0
        %757 = vmatpush1.msra.mxu0 0.0
        %758 = vmatprep.subr.mxu0 0.0
        %759 = vmatpush1.msra.mxu0 0.0
        %760 = vmatprep.subr.mxu0 0.0
        %761 = vmatpush1.msra.mxu0 0.0
        %762 = vmatprep.subr.mxu0 0.0
        %763 = vmatpush1.msra.mxu0 0.0
        %764 = vmatprep.subr.mxu0 0.0
        %765 = vmatpush1.msra.mxu0 0.0
        %766 = vmatprep.subr.mxu0 0.0
        %767 = vmatpush1.msra.mxu0 0.0
        %768 = vmatprep.subr.mxu0 0.0
        %769 = vmatpush1.msra.mxu0 0.0
        %770 = vmatprep.subr.mxu0 0.0
        %771 = vmatpush1.msra.mxu0 0.0
        %772 = vmatprep.subr.mxu0 0.0
        %773 = vmatpush1.msra.mxu0 0.0
        %774 = vmatprep.subr.mxu0 0.0
        %775 = vmatpush1.msra.mxu0 0.0
        %776 = vmatprep.mubr.f32.mxu0 0.0
        %777 = vmatmul.mubr.f32.gmra.mrb[0].mxu0 %v710
        %v778 = vpop.f32.mrb[0].mxu0
        %v779 = vadd.f32 0.0, %v778
        %v780 = vpop.f32.mrb[0].mxu0
        %781 = vdwg.mxu0
        %v783 = vsel %vm616, %v779, 0
        %785 = vmatprep.subr.mxu0 0.0
        %786 = vmatpush1.msra.mxu0 %v608
        %787 = vmatprep.subr.mxu0 0.0
        %788 = vmatpush1.msra.mxu0 %v609
        %789 = vmatprep.subr.mxu0 0.0
        %790 = vmatpush1.msra.mxu0 0.0
        %791 = vmatprep.subr.mxu0 0.0
        %792 = vmatpush1.msra.mxu0 0.0
        %793 = vmatprep.subr.mxu0 0.0
        %794 = vmatpush1.msra.mxu0 0.0
        %795 = vmatprep.subr.mxu0 0.0
        %796 = vmatpush1.msra.mxu0 0.0
        %797 = vmatprep.subr.mxu0 0.0
        %798 = vmatpush1.msra.mxu0 0.0
        %799 = vmatprep.subr.mxu0 0.0
        %800 = vmatpush1.msra.mxu0 0.0
        %801 = vmatprep.subr.mxu0 0.0
        %802 = vmatpush1.msra.mxu0 0.0
        %803 = vmatprep.subr.mxu0 0.0
        %804 = vmatpush1.msra.mxu0 0.0
        %805 = vmatprep.subr.mxu0 0.0
        %806 = vmatpush1.msra.mxu0 0.0
        %807 = vmatprep.subr.mxu0 0.0
        %808 = vmatpush1.msra.mxu0 0.0
        %809 = vmatprep.subr.mxu0 0.0
        %810 = vmatpush1.msra.mxu0 0.0
        %811 = vmatprep.subr.mxu0 0.0
        %812 = vmatpush1.msra.mxu0 0.0
        %813 = vmatprep.subr.mxu0 0.0
        %814 = vmatpush1.msra.mxu0 0.0
        %815 = vmatprep.subr.mxu0 0.0
        %816 = vmatpush1.msra.mxu0 0.0
        %817 = vmatprep.subr.mxu0 0.0
        %818 = vmatpush1.msra.mxu0 0.0
        %819 = vmatprep.subr.mxu0 0.0
        %820 = vmatpush1.msra.mxu0 0.0
        %821 = vmatprep.subr.mxu0 0.0
        %822 = vmatpush1.msra.mxu0 0.0
        %823 = vmatprep.subr.mxu0 0.0
        %824 = vmatpush1.msra.mxu0 0.0
        %825 = vmatprep.subr.mxu0 0.0
        %826 = vmatpush1.msra.mxu0 0.0
        %827 = vmatprep.subr.mxu0 0.0
        %828 = vmatpush1.msra.mxu0 0.0
        %829 = vmatprep.subr.mxu0 0.0
        %830 = vmatpush1.msra.mxu0 0.0
        %831 = vmatprep.subr.mxu0 0.0
        %832 = vmatpush1.msra.mxu0 0.0
        %833 = vmatprep.subr.mxu0 0.0
        %834 = vmatpush1.msra.mxu0 0.0
        %835 = vmatprep.subr.mxu0 0.0
        %836 = vmatpush1.msra.mxu0 0.0
        %837 = vmatprep.subr.mxu0 0.0
        %838 = vmatpush1.msra.mxu0 0.0
        %839 = vmatprep.subr.mxu0 0.0
        %840 = vmatpush1.msra.mxu0 0.0
        %841 = vmatprep.subr.mxu0 0.0
        %842 = vmatpush1.msra.mxu0 0.0
        %843 = vmatprep.subr.mxu0 0.0
        %844 = vmatpush1.msra.mxu0 0.0
        %845 = vmatprep.subr.mxu0 0.0
        %846 = vmatpush1.msra.mxu0 0.0
        %847 = vmatprep.subr.mxu0 0.0
        %848 = vmatpush1.msra.mxu0 0.0
        %849 = vmatprep.mubr.f32.mxu0 0.0
        %850 = vmatmul.mubr.f32.gmra.mrb[0].mxu0 %v783
        %v851 = vpop.f32.mrb[0].mxu0
        %v852 = vadd.f32 0.0, %v851
        %v853 = vpop.f32.mrb[0].mxu0
        %854 = vdwg.mxu0
        %v856 = vlaneseq
        %v857 = vshrl.u32 %v856, 7
        %v858 = vsub.s32 0, %v857
        %v859 = vrot.slane %v612, %v858
        %v861 = vadd.f32 %v859, %v852
        %862 = vrot.lane.b32.xlu0 %v605, 112
        %v863 = vpop.permute.xlu0 %862
        %864 = vrot.lane.b32.xlu0 %v605, 80
        %v865 = vpop.permute.xlu0 %864
        %v866 = vsel %vm616, %v863, 0
        %v868 = vsel %vm616, %v865, 0
        %870 = vmatprep.subr.mxu0 0.0
        %871 = vmatpush1.xpose.msra.mxu0 %v868
        %872 = vmatprep.subr.mxu0 0.0
        %873 = vmatpush1.xpose.msra.mxu0 0.0
        %874 = vmatprep.subr.mxu0 0.0
        %875 = vmatpush1.xpose.msra.mxu0 0.0
        %876 = vmatprep.subr.mxu0 0.0
        %877 = vmatpush1.xpose.msra.mxu0 0.0
        %878 = vmatprep.subr.mxu0 0.0
        %879 = vmatpush1.xpose.msra.mxu0 0.0
        %880 = vmatprep.subr.mxu0 0.0
        %881 = vmatpush1.xpose.msra.mxu0 0.0
        %882 = vmatprep.subr.mxu0 0.0
        %883 = vmatpush1.xpose.msra.mxu0 0.0
        %884 = vmatprep.subr.mxu0 0.0
        %885 = vmatpush1.xpose.msra.mxu0 0.0
        %886 = vmatprep.subr.mxu0 0.0
        %887 = vmatpush1.xpose.msra.mxu0 0.0
        %888 = vmatprep.subr.mxu0 0.0
        %889 = vmatpush1.xpose.msra.mxu0 0.0
        %890 = vmatprep.subr.mxu0 0.0
        %891 = vmatpush1.xpose.msra.mxu0 0.0
        %892 = vmatprep.subr.mxu0 0.0
        %893 = vmatpush1.xpose.msra.mxu0 0.0
        %894 = vmatprep.subr.mxu0 0.0
        %895 = vmatpush1.xpose.msra.mxu0 0.0
        %896 = vmatprep.subr.mxu0 0.0
        %897 = vmatpush1.xpose.msra.mxu0 0.0
        %898 = vmatprep.subr.mxu0 0.0
        %899 = vmatpush1.xpose.msra.mxu0 0.0
        %900 = vmatprep.subr.mxu0 0.0
        %901 = vmatpush1.xpose.msra.mxu0 0.0
        %902 = vmatprep.subr.mxu0 0.0
        %903 = vmatpush1.xpose.msra.mxu0 0.0
        %904 = vmatprep.subr.mxu0 0.0
        %905 = vmatpush1.xpose.msra.mxu0 0.0
        %906 = vmatprep.subr.mxu0 0.0
        %907 = vmatpush1.xpose.msra.mxu0 0.0
        %908 = vmatprep.subr.mxu0 0.0
        %909 = vmatpush1.xpose.msra.mxu0 0.0
        %910 = vmatprep.subr.mxu0 0.0
        %911 = vmatpush1.xpose.msra.mxu0 0.0
        %912 = vmatprep.subr.mxu0 0.0
        %913 = vmatpush1.xpose.msra.mxu0 0.0
        %914 = vmatprep.subr.mxu0 0.0
        %915 = vmatpush1.xpose.msra.mxu0 0.0
        %916 = vmatprep.subr.mxu0 0.0
        %917 = vmatpush1.xpose.msra.mxu0 0.0
        %918 = vmatprep.subr.mxu0 0.0
        %919 = vmatpush1.xpose.msra.mxu0 0.0
        %920 = vmatprep.subr.mxu0 0.0
        %921 = vmatpush1.xpose.msra.mxu0 0.0
        %922 = vmatprep.subr.mxu0 0.0
        %923 = vmatpush1.xpose.msra.mxu0 0.0
        %924 = vmatprep.subr.mxu0 0.0
        %925 = vmatpush1.xpose.msra.mxu0 0.0
        %926 = vmatprep.subr.mxu0 0.0
        %927 = vmatpush1.xpose.msra.mxu0 0.0
        %928 = vmatprep.subr.mxu0 0.0
        %929 = vmatpush1.xpose.msra.mxu0 0.0
        %930 = vmatprep.subr.mxu0 0.0
        %931 = vmatpush1.xpose.msra.mxu0 0.0
        %932 = vmatprep.subr.mxu0 0.0
        %933 = vmatpush1.xpose.msra.mxu0 0.0
        %934 = vmatprep.mubr.f32.mxu0 0.0
        %935 = vmatmul.mubr.f32.gmra.mrb[0].mxu0 %v866
        %v936 = vpop.f32.mrb[0].mxu0
        %v937 = vadd.f32 0.0, %v936
        %v938 = vpop.f32.mrb[0].mxu0
        %939 = vdwg.mxu0
        %v940 = vmul.f32 %v937, 0.25
        %v941 = vsel %vm522, %v940, -1e+30
        %v942 = vsel %vm693, %v941, -inf
        %943 = vmax.xlane.f32.xlu0 %v942
        %v944 = vpop.xlane.xlu0 %943
        %v945 = vsub.f32 %v941, %v944
        %v946 = vmul.f32 %v945, 1.442695
        %v947 = vpow.pop %v946
        %v948 = vsel %vm693, %v947, 0.0
        %949 = vadd.xlane.f32.xlu0 %v948
        %v950 = vpop.xlane.xlu0 %949
        %v951 = vrcp.pop %v950
        %v952 = vmul.f32 %v947, %v951
        %v953 = vsel %vm522, %v952, 0.0
        %954 = vrot.lane.b32.xlu0 %v605, 48
        %v955 = vpop.permute.xlu0 %954
        %v958 = vsel %vm693, %v953, 0
        %960 = vmatprep.subr.mxu0 0.0
        %961 = vmatpush1.msra.mxu0 %v955
        %962 = vmatprep.subr.mxu0 0.0
        %963 = vmatpush1.msra.mxu0 0.0
        %964 = vmatprep.subr.mxu0 0.0
        %965 = vmatpush1.msra.mxu0 0.0
        %966 = vmatprep.subr.mxu0 0.0
        %967 = vmatpush1.msra.mxu0 0.0
        %968 = vmatprep.subr.mxu0 0.0
        %969 = vmatpush1.msra.mxu0 0.0
        %970 = vmatprep.subr.mxu0 0.0
        %971 = vmatpush1.msra.mxu0 0.0
        %972 = vmatprep.subr.mxu0 0.0
        %973 = vmatpush1.msra.mxu0 0.0
        %974 = vmatprep.subr.mxu0 0.0
        %975 = vmatpush1.msra.mxu0 0.0
        %976 = vmatprep.subr.mxu0 0.0
        %977 = vmatpush1.msra.mxu0 0.0
        %978 = vmatprep.subr.mxu0 0.0
        %979 = vmatpush1.msra.mxu0 0.0
        %980 = vmatprep.subr.mxu0 0.0
        %981 = vmatpush1.msra.mxu0 0.0
        %982 = vmatprep.subr.mxu0 0.0
        %983 = vmatpush1.msra.mxu0 0.0
        %984 = vmatprep.subr.mxu0 0.0
        %985 = vmatpush1.msra.mxu0 0.0
        %986 = vmatprep.subr.mxu0 0.0
        %987 = vmatpush1.msra.mxu0 0.0
        %988 = vmatprep.subr.mxu0 0.0
        %989 = vmatpush1.msra.mxu0 0.0
        %990 = vmatprep.subr.mxu0 0.0
        %991 = vmatpush1.msra.mxu0 0.0
        %992 = vmatprep.subr.mxu0 0.0
        %993 = vmatpush1.msra.mxu0 0.0
        %994 = vmatprep.subr.mxu0 0.0
        %995 = vmatpush1.msra.mxu0 0.0
        %996 = vmatprep.subr.mxu0 0.0
        %997 = vmatpush1.msra.mxu0 0.0
        %998 = vmatprep.subr.mxu0 0.0
        %999 = vmatpush1.msra.mxu0 0.0
        %1000 = vmatprep.subr.mxu0 0.0
        %1001 = vmatpush1.msra.mxu0 0.0
        %1002 = vmatprep.subr.mxu0 0.0
        %1003 = vmatpush1.msra.mxu0 0.0
        %1004 = vmatprep.subr.mxu0 0.0
        %1005 = vmatpush1.msra.mxu0 0.0
        %1006 = vmatprep.subr.mxu0 0.0
        %1007 = vmatpush1.msra.mxu0 0.0
        %1008 = vmatprep.subr.mxu0 0.0
        %1009 = vmatpush1.msra.mxu0 0.0
        %1010 = vmatprep.subr.mxu0 0.0
        %1011 = vmatpush1.msra.mxu0 0.0
        %1012 = vmatprep.subr.mxu0 0.0
        %1013 = vmatpush1.msra.mxu0 0.0
        %1014 = vmatprep.subr.mxu0 0.0
        %1015 = vmatpush1.msra.mxu0 0.0
        %1016 = vmatprep.subr.mxu0 0.0
        %1017 = vmatpush1.msra.mxu0 0.0
        %1018 = vmatprep.subr.mxu0 0.0
        %1019 = vmatpush1.msra.mxu0 0.0
        %1020 = vmatprep.subr.mxu0 0.0
        %1021 = vmatpush1.msra.mxu0 0.0
        %1022 = vmatprep.subr.mxu0 0.0
        %1023 = vmatpush1.msra.mxu0 0.0
        %1024 = vmatprep.mubr.f32.mxu0 0.0
        %1025 = vmatmul.mubr.f32.gmra.mrb[0].mxu0 %v958
        %v1026 = vpop.f32.mrb[0].mxu0
        %v1027 = vadd.f32 0.0, %v1026
        %v1028 = vpop.f32.mrb[0].mxu0
        %1029 = vdwg.mxu0
        %v1031 = vsel %vm616, %v1027, 0
        %1033 = vmatprep.subr.mxu0 0.0
        %1034 = vmatpush1.msra.mxu0 %v610
        %1035 = vmatprep.subr.mxu0 0.0
        %1036 = vmatpush1.msra.mxu0 %v611
        %1037 = vmatprep.subr.mxu0 0.0
        %1038 = vmatpush1.msra.mxu0 0.0
        %1039 = vmatprep.subr.mxu0 0.0
        %1040 = vmatpush1.msra.mxu0 0.0
        %1041 = vmatprep.subr.mxu0 0.0
        %1042 = vmatpush1.msra.mxu0 0.0
        %1043 = vmatprep.subr.mxu0 0.0
        %1044 = vmatpush1.msra.mxu0 0.0
        %1045 = vmatprep.subr.mxu0 0.0
        %1046 = vmatpush1.msra.mxu0 0.0
        %1047 = vmatprep.subr.mxu0 0.0
        %1048 = vmatpush1.msra.mxu0 0.0
        %1049 = vmatprep.subr.mxu0 0.0
        %1050 = vmatpush1.msra.mxu0 0.0
        %1051 = vmatprep.subr.mxu0 0.0
        %1052 = vmatpush1.msra.mxu0 0.0
        %1053 = vmatprep.subr.mxu0 0.0
        %1054 = vmatpush1.msra.mxu0 0.0
        %1055 = vmatprep.subr.mxu0 0.0
        %1056 = vmatpush1.msra.mxu0 0.0
        %1057 = vmatprep.subr.mxu0 0.0
        %1058 = vmatpush1.msra.mxu0 0.0
        %1059 = vmatprep.subr.mxu0 0.0
        %1060 = vmatpush1.msra.mxu0 0.0
        %1061 = vmatprep.subr.mxu0 0.0
        %1062 = vmatpush1.msra.mxu0 0.0
        %1063 = vmatprep.subr.mxu0 0.0
        %1064 = vmatpush1.msra.mxu0 0.0
        %1065 = vmatprep.subr.mxu0 0.0
        %1066 = vmatpush1.msra.mxu0 0.0
        %1067 = vmatprep.subr.mxu0 0.0
        %1068 = vmatpush1.msra.mxu0 0.0
        %1069 = vmatprep.subr.mxu0 0.0
        %1070 = vmatpush1.msra.mxu0 0.0
        %1071 = vmatprep.subr.mxu0 0.0
        %1072 = vmatpush1.msra.mxu0 0.0
        %1073 = vmatprep.subr.mxu0 0.0
        %1074 = vmatpush1.msra.mxu0 0.0
        %1075 = vmatprep.subr.mxu0 0.0
        %1076 = vmatpush1.msra.mxu0 0.0
        %1077 = vmatprep.subr.mxu0 0.0
        %1078 = vmatpush1.msra.mxu0 0.0
        %1079 = vmatprep.subr.mxu0 0.0
        %1080 = vmatpush1.msra.mxu0 0.0
        %1081 = vmatprep.subr.mxu0 0.0
        %1082 = vmatpush1.msra.mxu0 0.0
        %1083 = vmatprep.subr.mxu0 0.0
        %1084 = vmatpush1.msra.mxu0 0.0
        %1085 = vmatprep.subr.mxu0 0.0
        %1086 = vmatpush1.msra.mxu0 0.0
        %1087 = vmatprep.subr.mxu0 0.0
        %1088 = vmatpush1.msra.mxu0 0.0
        %1089 = vmatprep.subr.mxu0 0.0
        %1090 = vmatpush1.msra.mxu0 0.0
        %1091 = vmatprep.subr.mxu0 0.0
        %1092 = vmatpush1.msra.mxu0 0.0
        %1093 = vmatprep.subr.mxu0 0.0
        %1094 = vmatpush1.msra.mxu0 0.0
        %1095 = vmatprep.subr.mxu0 0.0
        %1096 = vmatpush1.msra.mxu0 0.0
        %1097 = vmatprep.mubr.f32.mxu0 0.0
        %1098 = vmatmul.mubr.f32.gmra.mrb[0].mxu0 %v1031
        %v1099 = vpop.f32.mrb[0].mxu0
        %v1100 = vadd.f32 0.0, %v1099
        %v1101 = vpop.f32.mrb[0].mxu0
        %1102 = vdwg.mxu0
        %v1103 = vadd.f32 %v861, %v1100
        %v1104 = vadd.f32 %v1103, %v520
        %v1105 = vld [vmem:[%s6] sm:$0x1]
        %v1106 = vld [vmem:[%s7] sm:$0x1]
        %v1107 = vsel %vm534, %v1104, 0.0
        %1108 = vadd.xlane.f32.xlu0 %v1107
        %v1109 = vpop.xlane.xlu0 %1108
        %v1110 = vrcp.pop 32.0
        %v1111 = vmul.f32 %v1109, %v1110
        %v1112 = vsub.f32 %v1104, %v1111
        %v1113 = vmul.f32 %v1112, %v1112
        %v1114 = vsel %vm534, %v1113, 0.0
        %1115 = vadd.xlane.f32.xlu0 %v1114
        %v1116 = vpop.xlane.xlu0 %1115
        %v1117 = vmul.f32 %v1116, %v1110
        %v1118 = vadd.f32 %v1117, 1e-07
        %v1119 = vrsqrt.pop %v1118
        %v1120 = vmul.f32 %v1112, %v1119
        %v1122 = vlaneseq
        %v1123 = vshrl.u32 %v1122, 7
        %v1124 = vsub.s32 0, %v1123
        %v1125 = vrot.slane %v1105, %v1124
        %v1127 = vmul.f32 %v1120, %v1125
        %v1129 = vlaneseq
        %v1130 = vshrl.u32 %v1129, 7
        %v1131 = vsub.s32 0, %v1130
        %v1132 = vrot.slane %v1106, %v1131
        %v1134 = vadd.f32 %v1127, %v1132
        %v1135 = vld [vmem:[%s8] sm:$0xff]
        %v1136 = vld [vmem:[%s8 + $0x8] sm:$0xff]
        %v1137 = vld [vmem:[%s8 + $0x10] sm:$0xff]
        %v1138 = vld [vmem:[%s8 + $0x18] sm:$0xff]
        %v1139 = vld [vmem:[%s9] sm:$0x1]
        %v1141 = vlaneseq
        %v1142 = vshrl.u32 %v1141, 7
        %v1143 = vsub.s32 0, %v1142
        %v1144 = vrot.slane %v1139, %v1143
        %v1147 = vsel %vm534, %v1134, 0
        %1149 = vmatprep.subr.mxu0 0.0
        %1150 = vmatpush1.msra.mxu0 %v1135
        %1151 = vmatprep.subr.mxu0 0.0
        %1152 = vmatpush1.msra.mxu0 %v1136
        %1153 = vmatprep.subr.mxu0 0.0
        %1154 = vmatpush1.msra.mxu0 %v1137
        %1155 = vmatprep.subr.mxu0 0.0
        %1156 = vmatpush1.msra.mxu0 %v1138
        %1157 = vmatprep.subr.mxu0 0.0
        %1158 = vmatpush1.msra.mxu0 0.0
        %1159 = vmatprep.subr.mxu0 0.0
        %1160 = vmatpush1.msra.mxu0 0.0
        %1161 = vmatprep.subr.mxu0 0.0
        %1162 = vmatpush1.msra.mxu0 0.0
        %1163 = vmatprep.subr.mxu0 0.0
        %1164 = vmatpush1.msra.mxu0 0.0
        %1165 = vmatprep.subr.mxu0 0.0
        %1166 = vmatpush1.msra.mxu0 0.0
        %1167 = vmatprep.subr.mxu0 0.0
        %1168 = vmatpush1.msra.mxu0 0.0
        %1169 = vmatprep.subr.mxu0 0.0
        %1170 = vmatpush1.msra.mxu0 0.0
        %1171 = vmatprep.subr.mxu0 0.0
        %1172 = vmatpush1.msra.mxu0 0.0
        %1173 = vmatprep.subr.mxu0 0.0
        %1174 = vmatpush1.msra.mxu0 0.0
        %1175 = vmatprep.subr.mxu0 0.0
        %1176 = vmatpush1.msra.mxu0 0.0
        %1177 = vmatprep.subr.mxu0 0.0
        %1178 = vmatpush1.msra.mxu0 0.0
        %1179 = vmatprep.subr.mxu0 0.0
        %1180 = vmatpush1.msra.mxu0 0.0
        %1181 = vmatprep.subr.mxu0 0.0
        %1182 = vmatpush1.msra.mxu0 0.0
        %1183 = vmatprep.subr.mxu0 0.0
        %1184 = vmatpush1.msra.mxu0 0.0
        %1185 = vmatprep.subr.mxu0 0.0
        %1186 = vmatpush1.msra.mxu0 0.0
        %1187 = vmatprep.subr.mxu0 0.0
        %1188 = vmatpush1.msra.mxu0 0.0
        %1189 = vmatprep.subr.mxu0 0.0
        %1190 = vmatpush1.msra.mxu0 0.0
        %1191 = vmatprep.subr.mxu0 0.0
        %1192 = vmatpush1.msra.mxu0 0.0
        %1193 = vmatprep.subr.mxu0 0.0
        %1194 = vmatpush1.msra.mxu0 0.0
        %1195 = vmatprep.subr.mxu0 0.0
        %1196 = vmatpush1.msra.mxu0 0.0
        %1197 = vmatprep.subr.mxu0 0.0
        %1198 = vmatpush1.msra.mxu0 0.0
        %1199 = vmatprep.subr.mxu0 0.0
        %1200 = vmatpush1.msra.mxu0 0.0
        %1201 = vmatprep.subr.mxu0 0.0
        %1202 = vmatpush1.msra.mxu0 0.0
        %1203 = vmatprep.subr.mxu0 0.0
        %1204 = vmatpush1.msra.mxu0 0.0
        %1205 = vmatprep.subr.mxu0 0.0
        %1206 = vmatpush1.msra.mxu0 0.0
        %1207 = vmatprep.subr.mxu0 0.0
        %1208 = vmatpush1.msra.mxu0 0.0
        %1209 = vmatprep.subr.mxu0 0.0
        %1210 = vmatpush1.msra.mxu0 0.0
        %1211 = vmatprep.subr.mxu0 0.0
        %1212 = vmatpush1.msra.mxu0 0.0
        %1213 = vmatprep.mubr.f32.mxu0 0.0
        %1214 = vmatmul.mubr.f32.gmra.mrb[0].mxu0 %v1147
        %v1215 = vpop.f32.mrb[0].mxu0
        %v1216 = vadd.f32 %v1144, %v1215
        %v1217 = vpop.f32.mrb[0].mxu0
        %1218 = vdwg.mxu0
        %v1219 = vmul.f32 %v1216, 0.5
        %v1220 = vmul.f32 %v1216, 0.70710677
        %vm1221 = vcmp.lt.f32.partialorder %v1220, 0.0
        %v1222 = vsel %vm1221, -1.0, 1.0
        %v1223 = vsub.f32 0.0, %v1220
        %v1224 = vsel %vm1221, %v1223, %v1220
        %v1225 = vmul.f32 %v1224, 0.3275911
        %v1226 = vadd.f32 %v1225, 1.0
        %v1227 = vrcp.pop %v1226
        %v1228 = vmul.f32 1.0, %v1227
        %v1229 = vmul.f32 %v1228, 1.0614054
        %v1230 = vadd.f32 %v1229, -1.4531521
        %v1231 = vmul.f32 %v1230, %v1228
        %v1232 = vadd.f32 %v1231, 1.4214138
        %v1233 = vmul.f32 %v1232, %v1228
        %v1234 = vadd.f32 %v1233, -0.28449672
        %v1235 = vmul.f32 %v1234, %v1228
        %v1236 = vadd.f32 %v1235, 0.2548296
        %v1237 = vmul.f32 %v1236, %v1228
        %v1238 = vsub.f32 0.0, %v1224
        %v1239 = vmul.f32 %v1238, %v1224
        %v1240 = vmul.f32 %v1239, 1.442695
        %v1241 = vpow.pop %v1240
        %v1242 = vmul.f32 %v1237, %v1241
        %v1243 = vsub.f32 1.0, %v1242
        %v1244 = vmul.f32 %v1222, %v1243
        %v1245 = vadd.f32 %v1244, 1.0
        %v1246 = vmul.f32 %v1219, %v1245
        %v1247 = vld [vmem:[%s10] sm:$0xff]
        %v1248 = vld [vmem:[%s10 + $0x8] sm:$0xff]
        %v1249 = vld [vmem:[%s10 + $0x10] sm:$0xff]
        %v1250 = vld [vmem:[%s10 + $0x18] sm:$0xff]
        %v1251 = vld [vmem:[%s10 + $0x20] sm:$0xff]
        %v1252 = vld [vmem:[%s10 + $0x28] sm:$0xff]
        %v1253 = vld [vmem:[%s10 + $0x30] sm:$0xff]
        %v1254 = vld [vmem:[%s10 + $0x38] sm:$0xff]
        %v1255 = vld [vmem:[%s11] sm:$0x1]
        %v1257 = vlaneseq
        %v1258 = vshrl.u32 %v1257, 7
        %v1259 = vsub.s32 0, %v1258
        %v1260 = vrot.slane %v1255, %v1259
        %vm1262 = vcmask 523264
        %v1264 = vsel %vm1262, %v1246, 0
        %1266 = vmatprep.subr.mxu0 0.0
        %1267 = vmatpush1.msra.mxu0 %v1247
        %1268 = vmatprep.subr.mxu0 0.0
        %1269 = vmatpush1.msra.mxu0 %v1248
        %1270 = vmatprep.subr.mxu0 0.0
        %1271 = vmatpush1.msra.mxu0 %v1249
        %1272 = vmatprep.subr.mxu0 0.0
        %1273 = vmatpush1.msra.mxu0 %v1250
        %1274 = vmatprep.subr.mxu0 0.0
        %1275 = vmatpush1.msra.mxu0 %v1251
        %1276 = vmatprep.subr.mxu0 0.0
        %1277 = vmatpush1.msra.mxu0 %v1252
        %1278 = vmatprep.subr.mxu0 0.0
        %1279 = vmatpush1.msra.mxu0 %v1253
        %1280 = vmatprep.subr.mxu0 0.0
        %1281 = vmatpush1.msra.mxu0 %v1254
        %1282 = vmatprep.subr.mxu0 0.0
        %1283 = vmatpush1.msra.mxu0 0.0
        %1284 = vmatprep.subr.mxu0 0.0
        %1285 = vmatpush1.msra.mxu0 0.0
        %1286 = vmatprep.subr.mxu0 0.0
        %1287 = vmatpush1.msra.mxu0 0.0
        %1288 = vmatprep.subr.mxu0 0.0
        %1289 = vmatpush1.msra.mxu0 0.0
        %1290 = vmatprep.subr.mxu0 0.0
        %1291 = vmatpush1.msra.mxu0 0.0
        %1292 = vmatprep.subr.mxu0 0.0
        %1293 = vmatpush1.msra.mxu0 0.0
        %1294 = vmatprep.subr.mxu0 0.0
        %1295 = vmatpush1.msra.mxu0 0.0
        %1296 = vmatprep.subr.mxu0 0.0
        %1297 = vmatpush1.msra.mxu0 0.0
        %1298 = vmatprep.subr.mxu0 0.0
        %1299 = vmatpush1.msra.mxu0 0.0
        %1300 = vmatprep.subr.mxu0 0.0
        %1301 = vmatpush1.msra.mxu0 0.0
        %1302 = vmatprep.subr.mxu0 0.0
        %1303 = vmatpush1.msra.mxu0 0.0
        %1304 = vmatprep.subr.mxu0 0.0
        %1305 = vmatpush1.msra.mxu0 0.0
        %1306 = vmatprep.subr.mxu0 0.0
        %1307 = vmatpush1.msra.mxu0 0.0
        %1308 = vmatprep.subr.mxu0 0.0
        %1309 = vmatpush1.msra.mxu0 0.0
        %1310 = vmatprep.subr.mxu0 0.0
        %1311 = vmatpush1.msra.mxu0 0.0
        %1312 = vmatprep.subr.mxu0 0.0
        %1313 = vmatpush1.msra.mxu0 0.0
        %1314 = vmatprep.subr.mxu0 0.0
        %1315 = vmatpush1.msra.mxu0 0.0
        %1316 = vmatprep.subr.mxu0 0.0
        %1317 = vmatpush1.msra.mxu0 0.0
        %1318 = vmatprep.subr.mxu0 0.0
        %1319 = vmatpush1.msra.mxu0 0.0
        %1320 = vmatprep.subr.mxu0 0.0
        %1321 = vmatpush1.msra.mxu0 0.0
        %1322 = vmatprep.subr.mxu0 0.0
        %1323 = vmatpush1.msra.mxu0 0.0
        %1324 = vmatprep.subr.mxu0 0.0
        %1325 = vmatpush1.msra.mxu0 0.0
        %1326 = vmatprep.subr.mxu0 0.0
        %1327 = vmatpush1.msra.mxu0 0.0
        %1328 = vmatprep.subr.mxu0 0.0
        %1329 = vmatpush1.msra.mxu0 0.0
        %1330 = vmatprep.mubr.f32.mxu0 0.0
        %1331 = vmatmul.mubr.f32.gmra.mrb[0].mxu0 %v1264
        %v1332 = vpop.f32.mrb[0].mxu0
        %v1333 = vadd.f32 %v1260, %v1332
        %v1334 = vpop.f32.mrb[0].mxu0
        %1335 = vdwg.mxu0
        %v1336 = vadd.f32 %v1333, %v1134
        %v1337 = vld [vmem:[%s12] sm:$0x1]
        %v1338 = vld [vmem:[%s13] sm:$0x1]
        %v1339 = vsel %vm534, %v1336, 0.0
        %1340 = vadd.xlane.f32.xlu0 %v1339
        %v1341 = vpop.xlane.xlu0 %1340
        %v1342 = vmul.f32 %v1341, %v1110
        %v1343 = vsub.f32 %v1336, %v1342
        %v1344 = vmul.f32 %v1343, %v1343
        %v1345 = vsel %vm534, %v1344, 0.0
        %1346 = vadd.xlane.f32.xlu0 %v1345
        %v1347 = vpop.xlane.xlu0 %1346
        %v1348 = vmul.f32 %v1347, %v1110
        %v1349 = vadd.f32 %v1348, 1e-07
        %v1350 = vrsqrt.pop %v1349
        %v1351 = vmul.f32 %v1343, %v1350
        %v1353 = vlaneseq
        %v1354 = vshrl.u32 %v1353, 7
        %v1355 = vsub.s32 0, %v1354
        %v1356 = vrot.slane %v1337, %v1355
        %v1358 = vmul.f32 %v1351, %v1356
        %v1360 = vlaneseq
        %v1361 = vshrl.u32 %v1360, 7
        %v1362 = vsub.s32 0, %v1361
        %v1363 = vrot.slane %v1338, %v1362
        %v1365 = vadd.f32 %v1358, %v1363
        %1366 = vst.msk [vmem:[%s519] sm:$0xff] %vm534, %v1365
        %s1367 = scalar_lea.vmem %s2, 32
        %v1368 = vld [vmem:[%s1367] sm:$0xff]
        %v1369 = vld [vmem:[%s1367 + $0x8] sm:$0xff]
        %v1370 = vld [vmem:[%s1367 + $0x10] sm:$0xff]
        %v1371 = vld [vmem:[%s1367 + $0x18] sm:$0xff]
        %s1372 = scalar_lea.vmem %s3, 1
        %v1373 = vld [vmem:[%s1372] sm:$0x1]
        %v1375 = vlaneseq
        %v1376 = vshrl.u32 %v1375, 7
        %v1377 = vsub.s32 0, %v1376
        %v1378 = vrot.slane %v1373, %v1377
        %v1381 = vsel %vm534, %v1365, 0
        %1383 = vmatprep.subr.mxu0 0.0
        %1384 = vmatpush1.msra.mxu0 %v1368
        %1385 = vmatprep.subr.mxu0 0.0
        %1386 = vmatpush1.msra.mxu0 %v1369
        %1387 = vmatprep.subr.mxu0 0.0
        %1388 = vmatpush1.msra.mxu0 %v1370
        %1389 = vmatprep.subr.mxu0 0.0
        %1390 = vmatpush1.msra.mxu0 %v1371
        %1391 = vmatprep.subr.mxu0 0.0
        %1392 = vmatpush1.msra.mxu0 0.0
        %1393 = vmatprep.subr.mxu0 0.0
        %1394 = vmatpush1.msra.mxu0 0.0
        %1395 = vmatprep.subr.mxu0 0.0
        %1396 = vmatpush1.msra.mxu0 0.0
        %1397 = vmatprep.subr.mxu0 0.0
        %1398 = vmatpush1.msra.mxu0 0.0
        %1399 = vmatprep.subr.mxu0 0.0
        %1400 = vmatpush1.msra.mxu0 0.0
        %1401 = vmatprep.subr.mxu0 0.0
        %1402 = vmatpush1.msra.mxu0 0.0
        %1403 = vmatprep.subr.mxu0 0.0
        %1404 = vmatpush1.msra.mxu0 0.0
        %1405 = vmatprep.subr.mxu0 0.0
        %1406 = vmatpush1.msra.mxu0 0.0
        %1407 = vmatprep.subr.mxu0 0.0
        %1408 = vmatpush1.msra.mxu0 0.0
        %1409 = vmatprep.subr.mxu0 0.0
        %1410 = vmatpush1.msra.mxu0 0.0
        %1411 = vmatprep.subr.mxu0 0.0
        %1412 = vmatpush1.msra.mxu0 0.0
        %1413 = vmatprep.subr.mxu0 0.0
        %1414 = vmatpush1.msra.mxu0 0.0
        %1415 = vmatprep.subr.mxu0 0.0
        %1416 = vmatpush1.msra.mxu0 0.0
        %1417 = vmatprep.subr.mxu0 0.0
        %1418 = vmatpush1.msra.mxu0 0.0
        %1419 = vmatprep.subr.mxu0 0.0
        %1420 = vmatpush1.msra.mxu0 0.0
        %1421 = vmatprep.subr.mxu0 0.0
        %1422 = vmatpush1.msra.mxu0 0.0
        %1423 = vmatprep.subr.mxu0 0.0
        %1424 = vmatpush1.msra.mxu0 0.0
        %1425 = vmatprep.subr.mxu0 0.0
        %1426 = vmatpush1.msra.mxu0 0.0
        %1427 = vmatprep.subr.mxu0 0.0
        %1428 = vmatpush1.msra.mxu0 0.0
        %1429 = vmatprep.subr.mxu0 0.0
        %1430 = vmatpush1.msra.mxu0 0.0
        %1431 = vmatprep.subr.mxu0 0.0
        %1432 = vmatpush1.msra.mxu0 0.0
        %1433 = vmatprep.subr.mxu0 0.0
        %1434 = vmatpush1.msra.mxu0 0.0
        %1435 = vmatprep.subr.mxu0 0.0
        %1436 = vmatpush1.msra.mxu0 0.0
        %1437 = vmatprep.subr.mxu0 0.0
        %1438 = vmatpush1.msra.mxu0 0.0
        %1439 = vmatprep.subr.mxu0 0.0
        %1440 = vmatpush1.msra.mxu0 0.0
        %1441 = vmatprep.subr.mxu0 0.0
        %1442 = vmatpush1.msra.mxu0 0.0
        %1443 = vmatprep.subr.mxu0 0.0
        %1444 = vmatpush1.msra.mxu0 0.0
        %1445 = vmatprep.subr.mxu0 0.0
        %1446 = vmatpush1.msra.mxu0 0.0
        %1447 = vmatprep.mubr.f32.mxu0 0.0
        %1448 = vmatmul.mubr.f32.gmra.mrb[0].mxu0 %v1381
        %v1449 = vpop.f32.mrb[0].mxu0
        %v1450 = vadd.f32 %v1378, %v1449
        %v1451 = vpop.f32.mrb[0].mxu0
        %1452 = vdwg.mxu0
        %s1453 = scalar_lea.vmem %s4, 32
        %v1454 = vld [vmem:[%s1453] sm:$0xff]
        %v1455 = vld [vmem:[%s1453 + $0x8] sm:$0xff]
        %v1456 = vld [vmem:[%s1453 + $0x10] sm:$0xff]
        %v1457 = vld [vmem:[%s1453 + $0x18] sm:$0xff]
        %s1458 = scalar_lea.vmem %s5, 1
        %v1459 = vld [vmem:[%s1458] sm:$0x1]
        %1461 = vrot.lane.b32.xlu0 %v1450, 96
        %v1462 = vpop.permute.xlu0 %1461
        %v1463 = vsel %vm616, %v1450, 0
        %v1465 = vsel %vm616, %v1462, 0
        %1467 = vmatprep.subr.mxu0 0.0
        %1468 = vmatpush1.xpose.msra.mxu0 %v1465
        %1469 = vmatprep.subr.mxu0 0.0
        %1470 = vmatpush1.xpose.msra.mxu0 0.0
        %1471 = vmatprep.subr.mxu0 0.0
        %1472 = vmatpush1.xpose.msra.mxu0 0.0
        %1473 = vmatprep.subr.mxu0 0.0
        %1474 = vmatpush1.xpose.msra.mxu0 0.0
        %1475 = vmatprep.subr.mxu0 0.0
        %1476 = vmatpush1.xpose.msra.mxu0 0.0
        %1477 = vmatprep.subr.mxu0 0.0
        %1478 = vmatpush1.xpose.msra.mxu0 0.0
        %1479 = vmatprep.subr.mxu0 0.0
        %1480 = vmatpush1.xpose.msra.mxu0 0.0
        %1481 = vmatprep.subr.mxu0 0.0
        %1482 = vmatpush1.xpose.msra.mxu0 0.0
        %1483 = vmatprep.subr.mxu0 0.0
        %1484 = vmatpush1.xpose.msra.mxu0 0.0
        %1485 = vmatprep.subr.mxu0 0.0
        %1486 = vmatpush1.xpose.msra.mxu0 0.0
        %1487 = vmatprep.subr.mxu0 0.0
        %1488 = vmatpush1.xpose.msra.mxu0 0.0
        %1489 = vmatprep.subr.mxu0 0.0
        %1490 = vmatpush1.xpose.msra.mxu0 0.0
        %1491 = vmatprep.subr.mxu0 0.0
        %1492 = vmatpush1.xpose.msra.mxu0 0.0
        %1493 = vmatprep.subr.mxu0 0.0
        %1494 = vmatpush1.xpose.msra.mxu0 0.0
        %1495 = vmatprep.subr.mxu0 0.0
        %1496 = vmatpush1.xpose.msra.mxu0 0.0
        %1497 = vmatprep.subr.mxu0 0.0
        %1498 = vmatpush1.xpose.msra.mxu0 0.0
        %1499 = vmatprep.subr.mxu0 0.0
        %1500 = vmatpush1.xpose.msra.mxu0 0.0
        %1501 = vmatprep.subr.mxu0 0.0
        %1502 = vmatpush1.xpose.msra.mxu0 0.0
        %1503 = vmatprep.subr.mxu0 0.0
        %1504 = vmatpush1.xpose.msra.mxu0 0.0
        %1505 = vmatprep.subr.mxu0 0.0
        %1506 = vmatpush1.xpose.msra.mxu0 0.0
        %1507 = vmatprep.subr.mxu0 0.0
        %1508 = vmatpush1.xpose.msra.mxu0 0.0
        %1509 = vmatprep.subr.mxu0 0.0
        %1510 = vmatpush1.xpose.msra.mxu0 0.0
        %1511 = vmatprep.subr.mxu0 0.0
        %1512 = vmatpush1.xpose.msra.mxu0 0.0
        %1513 = vmatprep.subr.mxu0 0.0
        %1514 = vmatpush1.xpose.msra.mxu0 0.0
        %1515 = vmatprep.subr.mxu0 0.0
        %1516 = vmatpush1.xpose.msra.mxu0 0.0
        %1517 = vmatprep.subr.mxu0 0.0
        %1518 = vmatpush1.xpose.msra.mxu0 0.0
        %1519 = vmatprep.subr.mxu0 0.0
        %1520 = vmatpush1.xpose.msra.mxu0 0.0
        %1521 = vmatprep.subr.mxu0 0.0
        %1522 = vmatpush1.xpose.msra.mxu0 0.0
        %1523 = vmatprep.subr.mxu0 0.0
        %1524 = vmatpush1.xpose.msra.mxu0 0.0
        %1525 = vmatprep.subr.mxu0 0.0
        %1526 = vmatpush1.xpose.msra.mxu0 0.0
        %1527 = vmatprep.subr.mxu0 0.0
        %1528 = vmatpush1.xpose.msra.mxu0 0.0
        %1529 = vmatprep.subr.mxu0 0.0
        %1530 = vmatpush1.xpose.msra.mxu0 0.0
        %1531 = vmatprep.mubr.f32.mxu0 0.0
        %1532 = vmatmul.mubr.f32.gmra.mrb[0].mxu0 %v1463
        %v1533 = vpop.f32.mrb[0].mxu0
        %v1534 = vadd.f32 0.0, %v1533
        %v1535 = vpop.f32.mrb[0].mxu0
        %1536 = vdwg.mxu0
        %v1537 = vmul.f32 %v1534, 0.25
        %v1538 = vsel %vm522, %v1537, -1e+30
        %v1539 = vsel %vm693, %v1538, -inf
        %1540 = vmax.xlane.f32.xlu0 %v1539
        %v1541 = vpop.xlane.xlu0 %1540
        %v1542 = vsub.f32 %v1538, %v1541
        %v1543 = vmul.f32 %v1542, 1.442695
        %v1544 = vpow.pop %v1543
        %v1545 = vsel %vm693, %v1544, 0.0
        %1546 = vadd.xlane.f32.xlu0 %v1545
        %v1547 = vpop.xlane.xlu0 %1546
        %v1548 = vrcp.pop %v1547
        %v1549 = vmul.f32 %v1544, %v1548
        %v1550 = vsel %vm522, %v1549, 0.0
        %1551 = vrot.lane.b32.xlu0 %v1450, 64
        %v1552 = vpop.permute.xlu0 %1551
        %v1555 = vsel %vm693, %v1550, 0
        %1557 = vmatprep.subr.mxu0 0.0
        %1558 = vmatpush1.msra.mxu0 %v1552
        %1559 = vmatprep.subr.mxu0 0.0
        %1560 = vmatpush1.msra.mxu0 0.0
        %1561 = vmatprep.subr.mxu0 0.0
        %1562 = vmatpush1.msra.mxu0 0.0
        %1563 = vmatprep.subr.mxu0 0.0
        %1564 = vmatpush1.msra.mxu0 0.0
        %1565 = vmatprep.subr.mxu0 0.0
        %1566 = vmatpush1.msra.mxu0 0.0
        %1567 = vmatprep.subr.mxu0 0.0
        %1568 = vmatpush1.msra.mxu0 0.0
        %1569 = vmatprep.subr.mxu0 0.0
        %1570 = vmatpush1.msra.mxu0 0.0
        %1571 = vmatprep.subr.mxu0 0.0
        %1572 = vmatpush1.msra.mxu0 0.0
        %1573 = vmatprep.subr.mxu0 0.0
        %1574 = vmatpush1.msra.mxu0 0.0
        %1575 = vmatprep.subr.mxu0 0.0
        %1576 = vmatpush1.msra.mxu0 0.0
        %1577 = vmatprep.subr.mxu0 0.0
        %1578 = vmatpush1.msra.mxu0 0.0
        %1579 = vmatprep.subr.mxu0 0.0
        %1580 = vmatpush1.msra.mxu0 0.0
        %1581 = vmatprep.subr.mxu0 0.0
        %1582 = vmatpush1.msra.mxu0 0.0
        %1583 = vmatprep.subr.mxu0 0.0
        %1584 = vmatpush1.msra.mxu0 0.0
        %1585 = vmatprep.subr.mxu0 0.0
        %1586 = vmatpush1.msra.mxu0 0.0
        %1587 = vmatprep.subr.mxu0 0.0
        %1588 = vmatpush1.msra.mxu0 0.0
        %1589 = vmatprep.subr.mxu0 0.0
        %1590 = vmatpush1.msra.mxu0 0.0
        %1591 = vmatprep.subr.mxu0 0.0
        %1592 = vmatpush1.msra.mxu0 0.0
        %1593 = vmatprep.subr.mxu0 0.0
        %1594 = vmatpush1.msra.mxu0 0.0
        %1595 = vmatprep.subr.mxu0 0.0
        %1596 = vmatpush1.msra.mxu0 0.0
        %1597 = vmatprep.subr.mxu0 0.0
        %1598 = vmatpush1.msra.mxu0 0.0
        %1599 = vmatprep.subr.mxu0 0.0
        %1600 = vmatpush1.msra.mxu0 0.0
        %1601 = vmatprep.subr.mxu0 0.0
        %1602 = vmatpush1.msra.mxu0 0.0
        %1603 = vmatprep.subr.mxu0 0.0
        %1604 = vmatpush1.msra.mxu0 0.0
        %1605 = vmatprep.subr.mxu0 0.0
        %1606 = vmatpush1.msra.mxu0 0.0
        %1607 = vmatprep.subr.mxu0 0.0
        %1608 = vmatpush1.msra.mxu0 0.0
        %1609 = vmatprep.subr.mxu0 0.0
        %1610 = vmatpush1.msra.mxu0 0.0
        %1611 = vmatprep.subr.mxu0 0.0
        %1612 = vmatpush1.msra.mxu0 0.0
        %1613 = vmatprep.subr.mxu0 0.0
        %1614 = vmatpush1.msra.mxu0 0.0
        %1615 = vmatprep.subr.mxu0 0.0
        %1616 = vmatpush1.msra.mxu0 0.0
        %1617 = vmatprep.subr.mxu0 0.0
        %1618 = vmatpush1.msra.mxu0 0.0
        %1619 = vmatprep.subr.mxu0 0.0
        %1620 = vmatpush1.msra.mxu0 0.0
        %1621 = vmatprep.mubr.f32.mxu0 0.0
        %1622 = vmatmul.mubr.f32.gmra.mrb[0].mxu0 %v1555
        %v1623 = vpop.f32.mrb[0].mxu0
        %v1624 = vadd.f32 0.0, %v1623
        %v1625 = vpop.f32.mrb[0].mxu0
        %1626 = vdwg.mxu0
        %v1628 = vsel %vm616, %v1624, 0
        %1630 = vmatprep.subr.mxu0 0.0
        %1631 = vmatpush1.msra.mxu0 %v1454
        %1632 = vmatprep.subr.mxu0 0.0
        %1633 = vmatpush1.msra.mxu0 %v1455
        %1634 = vmatprep.subr.mxu0 0.0
        %1635 = vmatpush1.msra.mxu0 0.0
        %1636 = vmatprep.subr.mxu0 0.0
        %1637 = vmatpush1.msra.mxu0 0.0
        %1638 = vmatprep.subr.mxu0 0.0
        %1639 = vmatpush1.msra.mxu0 0.0
        %1640 = vmatprep.subr.mxu0 0.0
        %1641 = vmatpush1.msra.mxu0 0.0
        %1642 = vmatprep.subr.mxu0 0.0
        %1643 = vmatpush1.msra.mxu0 0.0
        %1644 = vmatprep.subr.mxu0 0.0
        %1645 = vmatpush1.msra.mxu0 0.0
        %1646 = vmatprep.subr.mxu0 0.0
        %1647 = vmatpush1.msra.mxu0 0.0
        %1648 = vmatprep.subr.mxu0 0.0
        %1649 = vmatpush1.msra.mxu0 0.0
        %1650 = vmatprep.subr.mxu0 0.0
        %1651 = vmatpush1.msra.mxu0 0.0
        %1652 = vmatprep.subr.mxu0 0.0
        %1653 = vmatpush1.msra.mxu0 0.0
        %1654 = vmatprep.subr.mxu0 0.0
        %1655 = vmatpush1.msra.mxu0 0.0
        %1656 = vmatprep.subr.mxu0 0.0
        %1657 = vmatpush1.msra.mxu0 0.0
        %1658 = vmatprep.subr.mxu0 0.0
        %1659 = vmatpush1.msra.mxu0 0.0
        %1660 = vmatprep.subr.mxu0 0.0
        %1661 = vmatpush1.msra.mxu0 0.0
        %1662 = vmatprep.subr.mxu0 0.0
        %1663 = vmatpush1.msra.mxu0 0.0
        %1664 = vmatprep.subr.mxu0 0.0
        %1665 = vmatpush1.msra.mxu0 0.0
        %1666 = vmatprep.subr.mxu0 0.0
        %1667 = vmatpush1.msra.mxu0 0.0
        %1668 = vmatprep.subr.mxu0 0.0
        %1669 = vmatpush1.msra.mxu0 0.0
        %1670 = vmatprep.subr.mxu0 0.0
        %1671 = vmatpush1.msra.mxu0 0.0
        %1672 = vmatprep.subr.mxu0 0.0
        %1673 = vmatpush1.msra.mxu0 0.0
        %1674 = vmatprep.subr.mxu0 0.0
        %1675 = vmatpush1.msra.mxu0 0.0
        %1676 = vmatprep.subr.mxu0 0.0
        %1677 = vmatpush1.msra.mxu0 0.0
        %1678 = vmatprep.subr.mxu0 0.0
        %1679 = vmatpush1.msra.mxu0 0.0
        %1680 = vmatprep.subr.mxu0 0.0
        %1681 = vmatpush1.msra.mxu0 0.0
        %1682 = vmatprep.subr.mxu0 0.0
        %1683 = vmatpush1.msra.mxu0 0.0
        %1684 = vmatprep.subr.mxu0 0.0
        %1685 = vmatpush1.msra.mxu0 0.0
        %1686 = vmatprep.subr.mxu0 0.0
        %1687 = vmatpush1.msra.mxu0 0.0
        %1688 = vmatprep.subr.mxu0 0.0
        %1689 = vmatpush1.msra.mxu0 0.0
        %1690 = vmatprep.subr.mxu0 0.0
        %1691 = vmatpush1.msra.mxu0 0.0
        %1692 = vmatprep.subr.mxu0 0.0
        %1693 = vmatpush1.msra.mxu0 0.0
        %1694 = vmatprep.mubr.f32.mxu0 0.0
        %1695 = vmatmul.mubr.f32.gmra.mrb[0].mxu0 %v1628
        %v1696 = vpop.f32.mrb[0].mxu0
        %v1697 = vadd.f32 0.0, %v1696
        %v1698 = vpop.f32.mrb[0].mxu0
        %1699 = vdwg.mxu0
        %v1701 = vlaneseq
        %v1702 = vshrl.u32 %v1701, 7
        %v1703 = vsub.s32 0, %v1702
        %v1704 = vrot.slane %v1459, %v1703
        %v1706 = vadd.f32 %v1704, %v1697
        %1707 = vrot.lane.b32.xlu0 %v1450, 112
        %v1708 = vpop.permute.xlu0 %1707
        %1709 = vrot.lane.b32.xlu0 %v1450, 80
        %v1710 = vpop.permute.xlu0 %1709
        %v1711 = vsel %vm616, %v1708, 0
        %v1713 = vsel %vm616, %v1710, 0
        %1715 = vmatprep.subr.mxu0 0.0
        %1716 = vmatpush1.xpose.msra.mxu0 %v1713
        %1717 = vmatprep.subr.mxu0 0.0
        %1718 = vmatpush1.xpose.msra.mxu0 0.0
        %1719 = vmatprep.subr.mxu0 0.0
        %1720 = vmatpush1.xpose.msra.mxu0 0.0
        %1721 = vmatprep.subr.mxu0 0.0
        %1722 = vmatpush1.xpose.msra.mxu0 0.0
        %1723 = vmatprep.subr.mxu0 0.0
        %1724 = vmatpush1.xpose.msra.mxu0 0.0
        %1725 = vmatprep.subr.mxu0 0.0
        %1726 = vmatpush1.xpose.msra.mxu0 0.0
        %1727 = vmatprep.subr.mxu0 0.0
        %1728 = vmatpush1.xpose.msra.mxu0 0.0
        %1729 = vmatprep.subr.mxu0 0.0
        %1730 = vmatpush1.xpose.msra.mxu0 0.0
        %1731 = vmatprep.subr.mxu0 0.0
        %1732 = vmatpush1.xpose.msra.mxu0 0.0
        %1733 = vmatprep.subr.mxu0 0.0
        %1734 = vmatpush1.xpose.msra.mxu0 0.0
        %1735 = vmatprep.subr.mxu0 0.0
        %1736 = vmatpush1.xpose.msra.mxu0 0.0
        %1737 = vmatprep.subr.mxu0 0.0
        %1738 = vmatpush1.xpose.msra.mxu0 0.0
        %1739 = vmatprep.subr.mxu0 0.0
        %1740 = vmatpush1.xpose.msra.mxu0 0.0
        %1741 = vmatprep.subr.mxu0 0.0
        %1742 = vmatpush1.xpose.msra.mxu0 0.0
        %1743 = vmatprep.subr.mxu0 0.0
        %1744 = vmatpush1.xpose.msra.mxu0 0.0
        %1745 = vmatprep.subr.mxu0 0.0
        %1746 = vmatpush1.xpose.msra.mxu0 0.0
        %1747 = vmatprep.subr.mxu0 0.0
        %1748 = vmatpush1.xpose.msra.mxu0 0.0
        %1749 = vmatprep.subr.mxu0 0.0
        %1750 = vmatpush1.xpose.msra.mxu0 0.0
        %1751 = vmatprep.subr.mxu0 0.0
        %1752 = vmatpush1.xpose.msra.mxu0 0.0
        %1753 = vmatprep.subr.mxu0 0.0
        %1754 = vmatpush1.xpose.msra.mxu0 0.0
        %1755 = vmatprep.subr.mxu0 0.0
        %1756 = vmatpush1.xpose.msra.mxu0 0.0
        %1757 = vmatprep.subr.mxu0 0.0
        %1758 = vmatpush1.xpose.msra.mxu0 0.0
        %1759 = vmatprep.subr.mxu0 0.0
        %1760 = vmatpush1.xpose.msra.mxu0 0.0
        %1761 = vmatprep.subr.mxu0 0.0
        %1762 = vmatpush1.xpose.msra.mxu0 0.0
        %1763 = vmatprep.subr.mxu0 0.0
        %1764 = vmatpush1.xpose.msra.mxu0 0.0
        %1765 = vmatprep.subr.mxu0 0.0
        %1766 = vmatpush1.xpose.msra.mxu0 0.0
        %1767 = vmatprep.subr.mxu0 0.0
        %1768 = vmatpush1.xpose.msra.mxu0 0.0
        %1769 = vmatprep.subr.mxu0 0.0
        %1770 = vmatpush1.xpose.msra.mxu0 0.0
        %1771 = vmatprep.subr.mxu0 0.0
        %1772 = vmatpush1.xpose.msra.mxu0 0.0
        %1773 = vmatprep.subr.mxu0 0.0
        %1774 = vmatpush1.xpose.msra.mxu0 0.0
        %1775 = vmatprep.subr.mxu0 0.0
        %1776 = vmatpush1.xpose.msra.mxu0 0.0
        %1777 = vmatprep.subr.mxu0 0.0
        %1778 = vmatpush1.xpose.msra.mxu0 0.0
        %1779 = vmatprep.mubr.f32.mxu0 0.0
        %1780 = vmatmul.mubr.f32.gmra.mrb[0].mxu0 %v1711
        %v1781 = vpop.f32.mrb[0].mxu0
        %v1782 = vadd.f32 0.0, %v1781
        %v1783 = vpop.f32.mrb[0].mxu0
        %1784 = vdwg.mxu0
        %v1785 = vmul.f32 %v1782, 0.25
        %v1786 = vsel %vm522, %v1785, -1e+30
        %v1787 = vsel %vm693, %v1786, -inf
        %1788 = vmax.xlane.f32.xlu0 %v1787
        %v1789 = vpop.xlane.xlu0 %1788
        %v1790 = vsub.f32 %v1786, %v1789
        %v1791 = vmul.f32 %v1790, 1.442695
        %v1792 = vpow.pop %v1791
        %v1793 = vsel %vm693, %v1792, 0.0
        %1794 = vadd.xlane.f32.xlu0 %v1793
        %v1795 = vpop.xlane.xlu0 %1794
        %v1796 = vrcp.pop %v1795
        %v1797 = vmul.f32 %v1792, %v1796
        %v1798 = vsel %vm522, %v1797, 0.0
        %1799 = vrot.lane.b32.xlu0 %v1450, 48
        %v1800 = vpop.permute.xlu0 %1799
        %v1803 = vsel %vm693, %v1798, 0
        %1805 = vmatprep.subr.mxu0 0.0
        %1806 = vmatpush1.msra.mxu0 %v1800
        %1807 = vmatprep.subr.mxu0 0.0
        %1808 = vmatpush1.msra.mxu0 0.0
        %1809 = vmatprep.subr.mxu0 0.0
        %1810 = vmatpush1.msra.mxu0 0.0
        %1811 = vmatprep.subr.mxu0 0.0
        %1812 = vmatpush1.msra.mxu0 0.0
        %1813 = vmatprep.subr.mxu0 0.0
        %1814 = vmatpush1.msra.mxu0 0.0
        %1815 = vmatprep.subr.mxu0 0.0
        %1816 = vmatpush1.msra.mxu0 0.0
        %1817 = vmatprep.subr.mxu0 0.0
        %1818 = vmatpush1.msra.mxu0 0.0
        %1819 = vmatprep.subr.mxu0 0.0
        %1820 = vmatpush1.msra.mxu0 0.0
        %1821 = vmatprep.subr.mxu0 0.0
        %1822 = vmatpush1.msra.mxu0 0.0
        %1823 = vmatprep.subr.mxu0 0.0
        %1824 = vmatpush1.msra.mxu0 0.0
        %1825 = vmatprep.subr.mxu0 0.0
        %1826 = vmatpush1.msra.mxu0 0.0
        %1827 = vmatprep.subr.mxu0 0.0
        %1828 = vmatpush1.msra.mxu0 0.0
        %1829 = vmatprep.subr.mxu0 0.0
        %1830 = vmatpush1.msra.mxu0 0.0
        %1831 = vmatprep.subr.mxu0 0.0
        %1832 = vmatpush1.msra.mxu0 0.0
        %1833 = vmatprep.subr.mxu0 0.0
        %1834 = vmatpush1.msra.mxu0 0.0
        %1835 = vmatprep.subr.mxu0 0.0
        %1836 = vmatpush1.msra.mxu0 0.0
        %1837 = vmatprep.subr.mxu0 0.0
        %1838 = vmatpush1.msra.mxu0 0.0
        %1839 = vmatprep.subr.mxu0 0.0
        %1840 = vmatpush1.msra.mxu0 0.0
        %1841 = vmatprep.subr.mxu0 0.0
        %1842 = vmatpush1.msra.mxu0 0.0
        %1843 = vmatprep.subr.mxu0 0.0
        %1844 = vmatpush1.msra.mxu0 0.0
        %1845 = vmatprep.subr.mxu0 0.0
        %1846 = vmatpush1.msra.mxu0 0.0
        %1847 = vmatprep.subr.mxu0 0.0
        %1848 = vmatpush1.msra.mxu0 0.0
        %1849 = vmatprep.subr.mxu0 0.0
        %1850 = vmatpush1.msra.mxu0 0.0
        %1851 = vmatprep.subr.mxu0 0.0
        %1852 = vmatpush1.msra.mxu0 0.0
        %1853 = vmatprep.subr.mxu0 0.0
        %1854 = vmatpush1.msra.mxu0 0.0
        %1855 = vmatprep.subr.mxu0 0.0
        %1856 = vmatpush1.msra.mxu0 0.0
        %1857 = vmatprep.subr.mxu0 0.0
        %1858 = vmatpush1.msra.mxu0 0.0
        %1859 = vmatprep.subr.mxu0 0.0
        %1860 = vmatpush1.msra.mxu0 0.0
        %1861 = vmatprep.subr.mxu0 0.0
        %1862 = vmatpush1.msra.mxu0 0.0
        %1863 = vmatprep.subr.mxu0 0.0
        %1864 = vmatpush1.msra.mxu0 0.0
        %1865 = vmatprep.subr.mxu0 0.0
        %1866 = vmatpush1.msra.mxu0 0.0
        %1867 = vmatprep.subr.mxu0 0.0
        %1868 = vmatpush1.msra.mxu0 0.0
        %1869 = vmatprep.mubr.f32.mxu0 0.0
        %1870 = vmatmul.mubr.f32.gmra.mrb[0].mxu0 %v1803
        %v1871 = vpop.f32.mrb[0].mxu0
        %v1872 = vadd.f32 0.0, %v1871
        %v1873 = vpop.f32.mrb[0].mxu0
        %1874 = vdwg.mxu0
        %v1876 = vsel %vm616, %v1872, 0
        %1878 = vmatprep.subr.mxu0 0.0
        %1879 = vmatpush1.msra.mxu0 %v1456
        %1880 = vmatprep.subr.mxu0 0.0
        %1881 = vmatpush1.msra.mxu0 %v1457
        %1882 = vmatprep.subr.mxu0 0.0
        %1883 = vmatpush1.msra.mxu0 0.0
        %1884 = vmatprep.subr.mxu0 0.0
        %1885 = vmatpush1.msra.mxu0 0.0
        %1886 = vmatprep.subr.mxu0 0.0
        %1887 = vmatpush1.msra.mxu0 0.0
        %1888 = vmatprep.subr.mxu0 0.0
        %1889 = vmatpush1.msra.mxu0 0.0
        %1890 = vmatprep.subr.mxu0 0.0
        %1891 = vmatpush1.msra.mxu0 0.0
        %1892 = vmatprep.subr.mxu0 0.0
        %1893 = vmatpush1.msra.mxu0 0.0
        %1894 = vmatprep.subr.mxu0 0.0
        %1895 = vmatpush1.msra.mxu0 0.0
        %1896 = vmatprep.subr.mxu0 0.0
        %1897 = vmatpush1.msra.mxu0 0.0
        %1898 = vmatprep.subr.mxu0 0.0
        %1899 = vmatpush1.msra.mxu0 0.0
        %1900 = vmatprep.subr.mxu0 0.0
        %1901 = vmatpush1.msra.mxu0 0.0
        %1902 = vmatprep.subr.mxu0 0.0
        %1903 = vmatpush1.msra.mxu0 0.0
        %1904 = vmatprep.subr.mxu0 0.0
        %1905 = vmatpush1.msra.mxu0 0.0
        %1906 = vmatprep.subr.mxu0 0.0
        %1907 = vmatpush1.msra.mxu0 0.0
        %1908 = vmatprep.subr.mxu0 0.0
        %1909 = vmatpush1.msra.mxu0 0.0
        %1910 = vmatprep.subr.mxu0 0.0
        %1911 = vmatpush1.msra.mxu0 0.0
        %1912 = vmatprep.subr.mxu0 0.0
        %1913 = vmatpush1.msra.mxu0 0.0
        %1914 = vmatprep.subr.mxu0 0.0
        %1915 = vmatpush1.msra.mxu0 0.0
        %1916 = vmatprep.subr.mxu0 0.0
        %1917 = vmatpush1.msra.mxu0 0.0
        %1918 = vmatprep.subr.mxu0 0.0
        %1919 = vmatpush1.msra.mxu0 0.0
        %1920 = vmatprep.subr.mxu0 0.0
        %1921 = vmatpush1.msra.mxu0 0.0
        %1922 = vmatprep.subr.mxu0 0.0
        %1923 = vmatpush1.msra.mxu0 0.0
        %1924 = vmatprep.subr.mxu0 0.0
        %1925 = vmatpush1.msra.mxu0 0.0
        %1926 = vmatprep.subr.mxu0 0.0
        %1927 = vmatpush1.msra.mxu0 0.0
        %1928 = vmatprep.subr.mxu0 0.0
        %1929 = vmatpush1.msra.mxu0 0.0
        %1930 = vmatprep.subr.mxu0 0.0
        %1931 = vmatpush1.msra.mxu0 0.0
        %1932 = vmatprep.subr.mxu0 0.0
        %1933 = vmatpush1.msra.mxu0 0.0
        %1934 = vmatprep.subr.mxu0 0.0
        %1935 = vmatpush1.msra.mxu0 0.0
        %1936 = vmatprep.subr.mxu0 0.0
        %1937 = vmatpush1.msra.mxu0 0.0
        %1938 = vmatprep.subr.mxu0 0.0
        %1939 = vmatpush1.msra.mxu0 0.0
        %1940 = vmatprep.subr.mxu0 0.0
        %1941 = vmatpush1.msra.mxu0 0.0
        %1942 = vmatprep.mubr.f32.mxu0 0.0
        %1943 = vmatmul.mubr.f32.gmra.mrb[0].mxu0 %v1876
        %v1944 = vpop.f32.mrb[0].mxu0
        %v1945 = vadd.f32 0.0, %v1944
        %v1946 = vpop.f32.mrb[0].mxu0
        %1947 = vdwg.mxu0
        %v1948 = vadd.f32 %v1706, %v1945
        %v1949 = vadd.f32 %v1948, %v1365
        %s1950 = scalar_lea.vmem %s6, 1
        %v1951 = vld [vmem:[%s1950] sm:$0x1]
        %s1952 = scalar_lea.vmem %s7, 1
        %v1953 = vld [vmem:[%s1952] sm:$0x1]
        %v1954 = vsel %vm534, %v1949, 0.0
        %1955 = vadd.xlane.f32.xlu0 %v1954
        %v1956 = vpop.xlane.xlu0 %1955
        %v1957 = vmul.f32 %v1956, %v1110
        %v1958 = vsub.f32 %v1949, %v1957
        %v1959 = vmul.f32 %v1958, %v1958
        %v1960 = vsel %vm534, %v1959, 0.0
        %1961 = vadd.xlane.f32.xlu0 %v1960
        %v1962 = vpop.xlane.xlu0 %1961
        %v1963 = vmul.f32 %v1962, %v1110
        %v1964 = vadd.f32 %v1963, 1e-07
        %v1965 = vrsqrt.pop %v1964
        %v1966 = vmul.f32 %v1958, %v1965
        %v1968 = vlaneseq
        %v1969 = vshrl.u32 %v1968, 7
        %v1970 = vsub.s32 0, %v1969
        %v1971 = vrot.slane %v1951, %v1970
        %v1973 = vmul.f32 %v1966, %v1971
        %v1975 = vlaneseq
        %v1976 = vshrl.u32 %v1975, 7
        %v1977 = vsub.s32 0, %v1976
        %v1978 = vrot.slane %v1953, %v1977
        %v1980 = vadd.f32 %v1973, %v1978
        %s1981 = scalar_lea.vmem %s8, 32
        %v1982 = vld [vmem:[%s1981] sm:$0xff]
        %v1983 = vld [vmem:[%s1981 + $0x8] sm:$0xff]
        %v1984 = vld [vmem:[%s1981 + $0x10] sm:$0xff]
        %v1985 = vld [vmem:[%s1981 + $0x18] sm:$0xff]
        %s1986 = scalar_lea.vmem %s9, 1
        %v1987 = vld [vmem:[%s1986] sm:$0x1]
        %v1989 = vlaneseq
        %v1990 = vshrl.u32 %v1989, 7
        %v1991 = vsub.s32 0, %v1990
        %v1992 = vrot.slane %v1987, %v1991
        %v1995 = vsel %vm534, %v1980, 0
        %1997 = vmatprep.subr.mxu0 0.0
        %1998 = vmatpush1.msra.mxu0 %v1982
        %1999 = vmatprep.subr.mxu0 0.0
        %2000 = vmatpush1.msra.mxu0 %v1983
        %2001 = vmatprep.subr.mxu0 0.0
        %2002 = vmatpush1.msra.mxu0 %v1984
        %2003 = vmatprep.subr.mxu0 0.0
        %2004 = vmatpush1.msra.mxu0 %v1985
        %2005 = vmatprep.subr.mxu0 0.0
        %2006 = vmatpush1.msra.mxu0 0.0
        %2007 = vmatprep.subr.mxu0 0.0
        %2008 = vmatpush1.msra.mxu0 0.0
        %2009 = vmatprep.subr.mxu0 0.0
        %2010 = vmatpush1.msra.mxu0 0.0
        %2011 = vmatprep.subr.mxu0 0.0
        %2012 = vmatpush1.msra.mxu0 0.0
        %2013 = vmatprep.subr.mxu0 0.0
        %2014 = vmatpush1.msra.mxu0 0.0
        %2015 = vmatprep.subr.mxu0 0.0
        %2016 = vmatpush1.msra.mxu0 0.0
        %2017 = vmatprep.subr.mxu0 0.0
        %2018 = vmatpush1.msra.mxu0 0.0
        %2019 = vmatprep.subr.mxu0 0.0
        %2020 = vmatpush1.msra.mxu0 0.0
        %2021 = vmatprep.subr.mxu0 0.0
        %2022 = vmatpush1.msra.mxu0 0.0
        %2023 = vmatprep.subr.mxu0 0.0
        %2024 = vmatpush1.msra.mxu0 0.0
        %2025 = vmatprep.subr.mxu0 0.0
        %2026 = vmatpush1.msra.mxu0 0.0
        %2027 = vmatprep.subr.mxu0 0.0
        %2028 = vmatpush1.msra.mxu0 0.0
        %2029 = vmatprep.subr.mxu0 0.0
        %2030 = vmatpush1.msra.mxu0 0.0
        %2031 = vmatprep.subr.mxu0 0.0
        %2032 = vmatpush1.msra.mxu0 0.0
        %2033 = vmatprep.subr.mxu0 0.0
        %2034 = vmatpush1.msra.mxu0 0.0
        %2035 = vmatprep.subr.mxu0 0.0
        %2036 = vmatpush1.msra.mxu0 0.0
        %2037 = vmatprep.subr.mxu0 0.0
        %2038 = vmatpush1.msra.mxu0 0.0
        %2039 = vmatprep.subr.mxu0 0.0
        %2040 = vmatpush1.msra.mxu0 0.0
        %2041 = vmatprep.subr.mxu0 0.0
        %2042 = vmatpush1.msra.mxu0 0.0
        %2043 = vmatprep.subr.mxu0 0.0
        %2044 = vmatpush1.msra.mxu0 0.0
        %2045 = vmatprep.subr.mxu0 0.0
        %2046 = vmatpush1.msra.mxu0 0.0
        %2047 = vmatprep.subr.mxu0 0.0
        %2048 = vmatpush1.msra.mxu0 0.0
        %2049 = vmatprep.subr.mxu0 0.0
        %2050 = vmatpush1.msra.mxu0 0.0
        %2051 = vmatprep.subr.mxu0 0.0
        %2052 = vmatpush1.msra.mxu0 0.0
        %2053 = vmatprep.subr.mxu0 0.0
        %2054 = vmatpush1.msra.mxu0 0.0
        %2055 = vmatprep.subr.mxu0 0.0
        %2056 = vmatpush1.msra.mxu0 0.0
        %2057 = vmatprep.subr.mxu0 0.0
        %2058 = vmatpush1.msra.mxu0 0.0
        %2059 = vmatprep.subr.mxu0 0.0
        %2060 = vmatpush1.msra.mxu0 0.0
        %2061 = vmatprep.mubr.f32.mxu0 0.0
        %2062 = vmatmul.mubr.f32.gmra.mrb[0].mxu0 %v1995
        %v2063 = vpop.f32.mrb[0].mxu0
        %v2064 = vadd.f32 %v1992, %v2063
        %v2065 = vpop.f32.mrb[0].mxu0
        %2066 = vdwg.mxu0
        %v2067 = vmul.f32 %v2064, 0.5
        %v2068 = vmul.f32 %v2064, 0.70710677
        %vm2069 = vcmp.lt.f32.partialorder %v2068, 0.0
        %v2070 = vsel %vm2069, -1.0, 1.0
        %v2071 = vsub.f32 0.0, %v2068
        %v2072 = vsel %vm2069, %v2071, %v2068
        %v2073 = vmul.f32 %v2072, 0.3275911
        %v2074 = vadd.f32 %v2073, 1.0
        %v2075 = vrcp.pop %v2074
        %v2076 = vmul.f32 1.0, %v2075
        %v2077 = vmul.f32 %v2076, 1.0614054
        %v2078 = vadd.f32 %v2077, -1.4531521
        %v2079 = vmul.f32 %v2078, %v2076
        %v2080 = vadd.f32 %v2079, 1.4214138
        %v2081 = vmul.f32 %v2080, %v2076
        %v2082 = vadd.f32 %v2081, -0.28449672
        %v2083 = vmul.f32 %v2082, %v2076
        %v2084 = vadd.f32 %v2083, 0.2548296
        %v2085 = vmul.f32 %v2084, %v2076
        %v2086 = vsub.f32 0.0, %v2072
        %v2087 = vmul.f32 %v2086, %v2072
        %v2088 = vmul.f32 %v2087, 1.442695
        %v2089 = vpow.pop %v2088
        %v2090 = vmul.f32 %v2085, %v2089
        %v2091 = vsub.f32 1.0, %v2090
        %v2092 = vmul.f32 %v2070, %v2091
        %v2093 = vadd.f32 %v2092, 1.0
        %v2094 = vmul.f32 %v2067, %v2093
        %s2095 = scalar_lea.vmem %s10, 64
        %v2096 = vld [vmem:[%s2095] sm:$0xff]
        %v2097 = vld [vmem:[%s2095 + $0x8] sm:$0xff]
        %v2098 = vld [vmem:[%s2095 + $0x10] sm:$0xff]
        %v2099 = vld [vmem:[%s2095 + $0x18] sm:$0xff]
        %v2100 = vld [vmem:[%s2095 + $0x20] sm:$0xff]
        %v2101 = vld [vmem:[%s2095 + $0x28] sm:$0xff]
        %v2102 = vld [vmem:[%s2095 + $0x30] sm:$0xff]
        %v2103 = vld [vmem:[%s2095 + $0x38] sm:$0xff]
        %s2104 = scalar_lea.vmem %s11, 1
        %v2105 = vld [vmem:[%s2104] sm:$0x1]
        %v2107 = vlaneseq
        %v2108 = vshrl.u32 %v2107, 7
        %v2109 = vsub.s32 0, %v2108
        %v2110 = vrot.slane %v2105, %v2109
        %v2113 = vsel %vm1262, %v2094, 0
        %2115 = vmatprep.subr.mxu0 0.0
        %2116 = vmatpush1.msra.mxu0 %v2096
        %2117 = vmatprep.subr.mxu0 0.0
        %2118 = vmatpush1.msra.mxu0 %v2097
        %2119 = vmatprep.subr.mxu0 0.0
        %2120 = vmatpush1.msra.mxu0 %v2098
        %2121 = vmatprep.subr.mxu0 0.0
        %2122 = vmatpush1.msra.mxu0 %v2099
        %2123 = vmatprep.subr.mxu0 0.0
        %2124 = vmatpush1.msra.mxu0 %v2100
        %2125 = vmatprep.subr.mxu0 0.0
        %2126 = vmatpush1.msra.mxu0 %v2101
        %2127 = vmatprep.subr.mxu0 0.0
        %2128 = vmatpush1.msra.mxu0 %v2102
        %2129 = vmatprep.subr.mxu0 0.0
        %2130 = vmatpush1.msra.mxu0 %v2103
        %2131 = vmatprep.subr.mxu0 0.0
        %2132 = vmatpush1.msra.mxu0 0.0
        %2133 = vmatprep.subr.mxu0 0.0
        %2134 = vmatpush1.msra.mxu0 0.0
        %2135 = vmatprep.subr.mxu0 0.0
        %2136 = vmatpush1.msra.mxu0 0.0
        %2137 = vmatprep.subr.mxu0 0.0
        %2138 = vmatpush1.msra.mxu0 0.0
        %2139 = vmatprep.subr.mxu0 0.0
        %2140 = vmatpush1.msra.mxu0 0.0
        %2141 = vmatprep.subr.mxu0 0.0
        %2142 = vmatpush1.msra.mxu0 0.0
        %2143 = vmatprep.subr.mxu0 0.0
        %2144 = vmatpush1.msra.mxu0 0.0
        %2145 = vmatprep.subr.mxu0 0.0
        %2146 = vmatpush1.msra.mxu0 0.0
        %2147 = vmatprep.subr.mxu0 0.0
        %2148 = vmatpush1.msra.mxu0 0.0
        %2149 = vmatprep.subr.mxu0 0.0
        %2150 = vmatpush1.msra.mxu0 0.0
        %2151 = vmatprep.subr.mxu0 0.0
        %2152 = vmatpush1.msra.mxu0 0.0
        %2153 = vmatprep.subr.mxu0 0.0
        %2154 = vmatpush1.msra.mxu0 0.0
        %2155 = vmatprep.subr.mxu0 0.0
        %2156 = vmatpush1.msra.mxu0 0.0
        %2157 = vmatprep.subr.mxu0 0.0
        %2158 = vmatpush1.msra.mxu0 0.0
        %2159 = vmatprep.subr.mxu0 0.0
        %2160 = vmatpush1.msra.mxu0 0.0
        %2161 = vmatprep.subr.mxu0 0.0
        %2162 = vmatpush1.msra.mxu0 0.0
        %2163 = vmatprep.subr.mxu0 0.0
        %2164 = vmatpush1.msra.mxu0 0.0
        %2165 = vmatprep.subr.mxu0 0.0
        %2166 = vmatpush1.msra.mxu0 0.0
        %2167 = vmatprep.subr.mxu0 0.0
        %2168 = vmatpush1.msra.mxu0 0.0
        %2169 = vmatprep.subr.mxu0 0.0
        %2170 = vmatpush1.msra.mxu0 0.0
        %2171 = vmatprep.subr.mxu0 0.0
        %2172 = vmatpush1.msra.mxu0 0.0
        %2173 = vmatprep.subr.mxu0 0.0
        %2174 = vmatpush1.msra.mxu0 0.0
        %2175 = vmatprep.subr.mxu0 0.0
        %2176 = vmatpush1.msra.mxu0 0.0
        %2177 = vmatprep.subr.mxu0 0.0
        %2178 = vmatpush1.msra.mxu0 0.0
        %2179 = vmatprep.mubr.f32.mxu0 0.0
        %2180 = vmatmul.mubr.f32.gmra.mrb[0].mxu0 %v2113
        %v2181 = vpop.f32.mrb[0].mxu0
        %v2182 = vadd.f32 %v2110, %v2181
        %v2183 = vpop.f32.mrb[0].mxu0
        %2184 = vdwg.mxu0
        %v2185 = vadd.f32 %v2182, %v1980
        %s2186 = scalar_lea.vmem %s12, 1
        %v2187 = vld [vmem:[%s2186] sm:$0x1]
        %s2188 = scalar_lea.vmem %s13, 1
        %v2189 = vld [vmem:[%s2188] sm:$0x1]
        %v2190 = vsel %vm534, %v2185, 0.0
        %2191 = vadd.xlane.f32.xlu0 %v2190
        %v2192 = vpop.xlane.xlu0 %2191
        %v2193 = vmul.f32 %v2192, %v1110
        %v2194 = vsub.f32 %v2185, %v2193
        %v2195 = vmul.f32 %v2194, %v2194
        %v2196 = vsel %vm534, %v2195, 0.0
        %2197 = vadd.xlane.f32.xlu0 %v2196
        %v2198 = vpop.xlane.xlu0 %2197
        %v2199 = vmul.f32 %v2198, %v1110
        %v2200 = vadd.f32 %v2199, 1e-07
        %v2201 = vrsqrt.pop %v2200
        %v2202 = vmul.f32 %v2194, %v2201
        %v2204 = vlaneseq
        %v2205 = vshrl.u32 %v2204, 7
        %v2206 = vsub.s32 0, %v2205
        %v2207 = vrot.slane %v2187, %v2206
        %v2209 = vmul.f32 %v2202, %v2207
        %v2211 = vlaneseq
        %v2212 = vshrl.u32 %v2211, 7
        %v2213 = vsub.s32 0, %v2212
        %v2214 = vrot.slane %v2189, %v2213
        %v2216 = vadd.f32 %v2209, %v2214
        %s2217 = scalar_lea.vmem %s519, 8 [#allocation7]
        %2218 = vst.msk [vmem:[%s2217] sm:$0xff] %vm534, %v2216
        %s2219 = sand.u32 %s346, 1
        %s2220 = scalar_lea.sflag [#allocation4], %s2219
        %s2221 = sand.u32 %s346, 1
        %s2222 = smul.addr %s2221, 16
        %s2223 = scalar_lea.vmem [#allocation7], %s2222
        // Predicated region
        $region85: #{tpu_custom_call.1} parent=75 // pred_check
          %p2224 = pneg %p356
        $region86: #{tpu_custom_call.1} parent=75 // pred_check_branch
          %2226 = sbr.rel (%p2224) target = $region88
        $region87: #{tpu_custom_call.1} parent=75 // pred_region
          %s2228 = ssub.s32 256, 256
          %2229 = vsyncadd %s2220, %s2228
          %s2230 = smul.addr %s34, 128
          %s2231 = scalar_lea.hbm %s14, %s2230
          %s2232 = sshll.u32 %s2223, 4
          %s2233 = int_to_ptr.vmem [resolvable:$true] %s2232
          %2238 = dma.vmem_to_hbm [thread:$0]  %s2233, 256, %s2231, %s2220, 128, 256, 8
        $region88: #{tpu_custom_call.1} parent=75 // pred_fallthru
          _
      $region76: #{tpu_custom_call.1} parent=5 // pred_fallthru
        _
      %p2239 = scmp.le.s32.totalorder 2, %s29
      // Predicated region
      $region89: #{tpu_custom_call.1} parent=5 // pred_check
        %p2240 = pneg %p2239
      $region90: #{tpu_custom_call.1} parent=5 // pred_check_branch
        %2242 = sbr.rel (%p2240) target = $region92
      $region91: #{tpu_custom_call.1} parent=5 // pred_region
        %s2243 = ssub.s32 %s29, 2
        // Predicated region
        $region93: #{tpu_custom_call.1} parent=91 // pred_check
          %p2244 = pneg %p362
        $region94: #{tpu_custom_call.1} parent=91 // pred_check_branch
          %2246 = sbr.rel (%p2244) target = $region96
        $region95: #{tpu_custom_call.1} parent=91 // pred_region
          %s2247 = sand.u32 %s347, 1
          %s2248 = scalar_lea.sflag [#allocation4], %s2247
          %s2249 = sand.u32 %s347, 1
          %s2250 = smul.addr %s2249, 16
          %s2251 = scalar_lea.vmem [#allocation7], %s2250
          %2252 = dma.done %s2248, 256
        $region96: #{tpu_custom_call.1} parent=91 // pred_fallthru
          _
      $region92: #{tpu_custom_call.1} parent=5 // pred_fallthru
        _
    $region6: #{tpu_custom_call.1} parent=1 // loop_footer
      %s33 = sadd.s32 1, %s29
    $region7: #{tpu_custom_call.1} parent=1 // loop_footer_branch
      %28 = sbr.rel target = $region3
    $region8: #{tpu_custom_call.1} parent=1 // loop_exit
      _
    %2253 = vsyncpa [#allocation3], 1
    %s2254 = scalar_lea.sflag [#allocation3], 1
    %2255 = vsyncpa %s2254, 1
    %2256 = vsyncpa [#allocation6], 1
    %s2257 = scalar_lea.sflag [#allocation6], 1
    %2258 = vsyncpa %s2257, 1
    %2259 = vsyncpa [#allocation4], 1
    %s2260 = scalar_lea.sflag [#allocation4], 1
    %2261 = vsyncpa %s2260, 1

</llo_original>
